<compile_context>
chip_gen: v6e
topology: v6e:2x2x1
jax: 0.10.0
libtpu: 0.0.40
codegen_flags: <defaults>
</compile_context>

<pallas_src>
import jax
import jax.numpy as jnp
from jax import lax
from jax.experimental import pallas as pl
from jax.experimental.pallas import tpu as pltpu


def _make_kernel(H, W, H1, W1, C_in, C_hid, C_out, stride, do_res):
    """Fused kernel: conv3x3(stride) -> conv3x3(1) -> BN affine -> ReLU (+res)."""

    def kernel(xp_ref, w1_ref, b1_ref, w2_ref, b2_ref, sc_ref, sh_ref,
               out_ref, hid_pad):
        xp = xp_ref[0]  # (H+2, W+2, C_in) float32, already zero padded by 1

        # ---- conv1: im2col (9 taps stacked on the lane axis) -> one matmul ----
        cols = []
        for ky in range(3):
            for kx in range(3):
                if stride == 1:
                    patch = xp[ky:ky + H1, kx:kx + W1, :]
                else:
                    patch = xp[ky:ky + (H1 - 1) * stride + 1:stride,
                               kx:kx + (W1 - 1) * stride + 1:stride, :]
                cols.append(patch)                      # (H1, W1, C_in)
        slab1 = jnp.concatenate(cols, axis=-1)          # (H1, W1, 9*C_in)
        hid = jnp.einsum('hwc,cd->hwd', slab1, w1_ref[...],
                         preferred_element_type=jnp.float32) + b1_ref[0]

        # ---- zero-pad hidden activation in VMEM scratch ----
        # Only the border is zeroed (interior is fully overwritten every step).
        # Re-zeroing the border each step keeps this correct when the batch
        # grid axis is split across TensorCores ("parallel").
        zrow = jnp.zeros((1, W1 + 2, C_hid), jnp.float32)
        zcol = jnp.zeros((H1 + 2, 1, C_hid), jnp.float32)
        hid_pad[0:1, :, :] = zrow
        hid_pad[H1 + 1:H1 + 2, :, :] = zrow
        hid_pad[:, 0:1, :] = zcol
        hid_pad[:, W1 + 1:W1 + 2, :] = zcol
        # Write conv1 output directly into the padded interior.
        hid_pad[1:H1 + 1, 1:W1 + 1, :] = hid

        # ---- conv2: im2col over padded hidden -> one matmul ----
        cols2 = []
        for ky in range(3):
            for kx in range(3):
                cols2.append(hid_pad[ky:ky + H1, kx:kx + W1, :])  # (H1, W1, C_hid)
        slab2 = jnp.concatenate(cols2, axis=-1)         # (H1, W1, 9*C_hid)
        y = jnp.einsum('hwc,cd->hwd', slab2, w2_ref[...],
                       preferred_element_type=jnp.float32) + b2_ref[0]

        # ---- BatchNorm2d (eval-mode, folded per-channel affine) + ReLU ----
        y = y * sc_ref[0] + sh_ref[0]
        y = jnp.maximum(y, 0.0)

        # ---- optional residual connection (stride==1, C_out==C_in) ----
        if do_res:
            y = y + xp[1:H1 + 1, 1:W1 + 1, :]

        out_ref[0] = y.astype(out_ref.dtype)

    return kernel


def condensed_conv_forward(x_nchw, w1, b1, w2, b2,
                           bn_gamma, bn_beta, bn_mean, bn_var,
                           *, stride, res_connect, eps=1e-5):
    """Forward pass of Condensed_Conv. x_nchw: (N, C_in, H, W) float32."""
    N, C_in, H, W = x_nchw.shape
    C_hid = w1.shape[0]
    C_out = w2.shape[0]
    H1 = (H - 1) // stride + 1   # conv(kernel=3, pad=1, stride=s) output size
    W1 = (W - 1) // stride + 1

    # NCHW -> NHWC, pad H and W by 1 (conv padding applied in glue).
    x = jnp.transpose(x_nchw, (0, 2, 3, 1)).astype(jnp.float32)
    xp = jnp.pad(x, ((0, 0), (1, 1), (1, 1), (0, 0)))

    # PyTorch conv weights (C_out, C_in, 3, 3) -> im2col matrices.
    # Row order (ky*3 + kx)*C + c matches the in-kernel concat order.
    w1_t = jnp.transpose(w1, (2, 3, 1, 0)).reshape(9 * C_in, C_hid)
    w2_t = jnp.transpose(w2, (2, 3, 1, 0)).reshape(9 * C_hid, C_out)

    # Fold eval-mode BatchNorm into per-channel scale / shift.
    scale = bn_gamma / jnp.sqrt(bn_var + eps)
    shift = bn_beta - bn_mean * scale

    do_res = bool(res_connect and (C_out == C_in) and (stride == 1))

    kernel = _make_kernel(H, W, H1, W1, C_in, C_hid, C_out, stride, do_res)

    # NOTE: for production-sized images, add H-row tiling (halo of 1) on the
    # input BlockSpec and an explicit vmem_limit_bytes so the per-step block
    # fits v7x's 64 MiB VMEM; unnecessary at these toy shapes.
    out_nhwc = pl.pallas_call(
        kernel,
        out_shape=jax.ShapeDtypeStruct((N, H1, W1, C_out), jnp.float32),
        grid_spec=pltpu.PrefetchScalarGridSpec(
            num_scalar_prefetch=0,
            grid=(N,),
            in_specs=[
                pl.BlockSpec((1, H + 2, W + 2, C_in), lambda n: (n, 0, 0, 0)),
                # Grid-invariant operands (constant index_maps).
                pl.BlockSpec((9 * C_in, C_hid), lambda n: (0, 0)),
                pl.BlockSpec((1, C_hid), lambda n: (0, 0)),
                pl.BlockSpec((9 * C_hid, C_out), lambda n: (0, 0)),
                pl.BlockSpec((1, C_out), lambda n: (0, 0)),
                pl.BlockSpec((1, C_out), lambda n: (0, 0)),
                pl.BlockSpec((1, C_out), lambda n: (0, 0)),
            ],
            out_specs=pl.BlockSpec((1, H1, W1, C_out), lambda n: (n, 0, 0, 0)),
            scratch_shapes=[
                pltpu.VMEM((H1 + 2, W1 + 2, C_hid), jnp.float32),
            ],
        ),
        compiler_params=pltpu.CompilerParams(
            dimension_semantics=("parallel",)),   # batch steps are independent
    )(xp, w1_t, b1.reshape(1, C_hid), w2_t, b2.reshape(1, C_out),
      scale.reshape(1, C_out), shift.reshape(1, C_out))

    # NHWC -> NCHW (match PyTorch output layout).
    return jnp.transpose(out_nhwc, (0, 3, 1, 2))


def reference_forward(x_nchw, w1, b1, w2, b2,
                      bn_gamma, bn_beta, bn_mean, bn_var,
                      *, stride, res_connect, eps=1e-5):
    """Pure-JAX reference (lax conv) mirroring the PyTorch module."""
    x = jnp.transpose(x_nchw, (0, 2, 3, 1)).astype(jnp.float32)  # NHWC
    dn = ('NHWC', 'HWIO', 'NHWC')
    w1_hwio = jnp.transpose(w1, (2, 3, 1, 0))
    w2_hwio = jnp.transpose(w2, (2, 3, 1, 0))
    y = lax.conv_general_dilated(x, w1_hwio, (stride, stride),
                                 [(1, 1), (1, 1)], dimension_numbers=dn) + b1
    y = lax.conv_general_dilated(y, w2_hwio, (1, 1),
                                 [(1, 1), (1, 1)], dimension_numbers=dn) + b2
    scale = bn_gamma / jnp.sqrt(bn_var + eps)
    shift = bn_beta - bn_mean * scale
    y = y * scale + shift
    y = jnp.maximum(y, 0.0)
    if res_connect and x.shape[-1] == y.shape[-1] and stride == 1:
        y = y + x
    return jnp.transpose(y, (0, 3, 1, 2))


if __name__ == "__main__":
    # Condensed_Conv(stride=1, input_channels=4, output_channels=4,
    #                hidden_channels=8, normalization=BatchNorm2d(4) [eval],
    #                activation=ReLU(), res_connect=True)
    N, C_in, H, W = 2, 4, 16, 16
    C_hid, C_out = 8, 4
    stride = 1
    res_connect = True

    key = jax.random.PRNGKey(0)
    ks = jax.random.split(key, 8)
    x = jax.random.normal(ks[0], (N, C_in, H, W), jnp.float32)
    w1 = jax.random.normal(ks[1], (C_hid, C_in, 3, 3), jnp.float32) * 0.1
    b1 = jax.random.normal(ks[2], (C_hid,), jnp.float32) * 0.1
    w2 = jax.random.normal(ks[3], (C_out, C_hid, 3, 3), jnp.float32) * 0.1
    b2 = jax.random.normal(ks[4], (C_out,), jnp.float32) * 0.1
    bn_gamma = 1.0 + 0.1 * jax.random.normal(ks[5], (C_out,), jnp.float32)
    bn_beta = 0.1 * jax.random.normal(ks[6], (C_out,), jnp.float32)
    bn_mean = 0.1 * jax.random.normal(ks[7], (C_out,), jnp.float32)
    bn_var = jnp.ones((C_out,), jnp.float32)

    out = condensed_conv_forward(
        x, w1, b1, w2, b2, bn_gamma, bn_beta, bn_mean, bn_var,
        stride=stride, res_connect=res_connect)
    out = jax.block_until_ready(out)

    ref = reference_forward(
        x, w1, b1, w2, b2, bn_gamma, bn_beta, bn_mean, bn_var,
        stride=stride, res_connect=res_connect)
    ref = jax.block_until_ready(ref)

    assert out.shape == (N, C_out, H, W), out.shape
    assert jnp.allclose(out, ref, atol=1e-4, rtol=1e-4), \
        float(jnp.max(jnp.abs(out - ref)))

    print("KERNEL_OK")
</pallas_src>

<mosaic_0001>
module attributes {stable_mosaic.version = 11 : i64} {
  func.func @kernel(%arg0: i32, %arg1: memref<1x18x18x4xf32, #tpu.memory_space<vmem>>, %arg2: memref<36x8xf32, #tpu.memory_space<vmem>>, %arg3: memref<1x8xf32, #tpu.memory_space<vmem>>, %arg4: memref<72x4xf32, #tpu.memory_space<vmem>>, %arg5: memref<1x4xf32, #tpu.memory_space<vmem>>, %arg6: memref<1x4xf32, #tpu.memory_space<vmem>>, %arg7: memref<1x4xf32, #tpu.memory_space<vmem>>, %arg8: memref<1x16x16x4xf32, #tpu.memory_space<vmem>>, %arg9: memref<18x18x8xf32, #tpu.memory_space<vmem>>) attributes {dimension_semantics = [#tpu.dimension_semantics<parallel>], iteration_bounds = array<i64: 2>, scalar_prefetch = 0 : i64, scratch_operands = 1 : i64, tpu.core_type = #tpu.core_type<tc>, window_params = [{transform_indices = @transform_0, window_bounds = array<i64: 1, 18, 18, 4>}, {pipeline_mode = #tpu.pipeline_mode<synchronous>, transform_indices = @transform_1, window_bounds = array<i64: 36, 8>}, {pipeline_mode = #tpu.pipeline_mode<synchronous>, transform_indices = @transform_2, window_bounds = array<i64: 1, 8>}, {pipeline_mode = #tpu.pipeline_mode<synchronous>, transform_indices = @transform_3, window_bounds = array<i64: 72, 4>}, {pipeline_mode = #tpu.pipeline_mode<synchronous>, transform_indices = @transform_4, window_bounds = array<i64: 1, 4>}, {pipeline_mode = #tpu.pipeline_mode<synchronous>, transform_indices = @transform_5, window_bounds = array<i64: 1, 4>}, {pipeline_mode = #tpu.pipeline_mode<synchronous>, transform_indices = @transform_6, window_bounds = array<i64: 1, 4>}, {transform_indices = @transform_7, window_bounds = array<i64: 1, 16, 16, 4>}]} {
    %c0 = arith.constant 0 : index
    %c0_0 = arith.constant 0 : index
    %c0_1 = arith.constant 0 : index
    %c0_2 = arith.constant 0 : index
    %0 = vector.load %arg1[%c0, %c0_0, %c0_1, %c0_2] : memref<1x18x18x4xf32, #tpu.memory_space<vmem>>, vector<1x18x18x4xf32>
    %1 = vector.shape_cast %0 : vector<1x18x18x4xf32> to vector<18x18x4xf32>
    %2 = vector.extract_strided_slice %1 {offsets = [0, 0, 0], sizes = [16, 16, 4], strides = [1, 1, 1]} : vector<18x18x4xf32> to vector<16x16x4xf32>
    %3 = vector.extract_strided_slice %1 {offsets = [0, 1, 0], sizes = [16, 16, 4], strides = [1, 1, 1]} : vector<18x18x4xf32> to vector<16x16x4xf32>
    %4 = vector.extract_strided_slice %1 {offsets = [0, 2, 0], sizes = [16, 16, 4], strides = [1, 1, 1]} : vector<18x18x4xf32> to vector<16x16x4xf32>
    %5 = vector.extract_strided_slice %1 {offsets = [1, 0, 0], sizes = [16, 16, 4], strides = [1, 1, 1]} : vector<18x18x4xf32> to vector<16x16x4xf32>
    %6 = vector.extract_strided_slice %1 {offsets = [1, 1, 0], sizes = [16, 16, 4], strides = [1, 1, 1]} : vector<18x18x4xf32> to vector<16x16x4xf32>
    %7 = vector.extract_strided_slice %1 {offsets = [1, 2, 0], sizes = [16, 16, 4], strides = [1, 1, 1]} : vector<18x18x4xf32> to vector<16x16x4xf32>
    %8 = vector.extract_strided_slice %1 {offsets = [2, 0, 0], sizes = [16, 16, 4], strides = [1, 1, 1]} : vector<18x18x4xf32> to vector<16x16x4xf32>
    %9 = vector.extract_strided_slice %1 {offsets = [2, 1, 0], sizes = [16, 16, 4], strides = [1, 1, 1]} : vector<18x18x4xf32> to vector<16x16x4xf32>
    %10 = vector.extract_strided_slice %1 {offsets = [2, 2, 0], sizes = [16, 16, 4], strides = [1, 1, 1]} : vector<18x18x4xf32> to vector<16x16x4xf32>
    %11 = tpu.concatenate %2, %3, %4, %5, %6, %7, %8, %9, %10 in 2 : vector<16x16x4xf32>, vector<16x16x4xf32>, vector<16x16x4xf32>, vector<16x16x4xf32>, vector<16x16x4xf32>, vector<16x16x4xf32>, vector<16x16x4xf32>, vector<16x16x4xf32>, vector<16x16x4xf32> -> vector<16x16x36xf32>
    %c0_3 = arith.constant 0 : index
    %c0_4 = arith.constant 0 : index
    %12 = vector.load %arg2[%c0_3, %c0_4] : memref<36x8xf32, #tpu.memory_space<vmem>>, vector<36x8xf32>
    "tpu.trace_start"() <{level = 10 : i32, message = "hwc,cd->hwd"}> : () -> ()
    %cst = arith.constant dense<0.000000e+00> : vector<16x16x8xf32>
    %13 = tpu.matmul %11, %12, %cst {dimension_numbers = #tpu.dot_dimension_numbers<[2], [0], [0, 1], [1], [0, 0, 0, 1, 1, 1], [], []>} : vector<16x16x36xf32>, vector<36x8xf32>, vector<16x16x8xf32> -> vector<16x16x8xf32>
    "tpu.trace_stop"() : () -> ()
    %c0_5 = arith.constant 0 : index
    %c0_6 = arith.constant 0 : index
    %14 = vector.load %arg3[%c0_5, %c0_6] : memref<1x8xf32, #tpu.memory_space<vmem>>, vector<1x8xf32>
    %15 = vector.shape_cast %14 : vector<1x8xf32> to vector<8xf32>
    %16 = vector.shape_cast %15 : vector<8xf32> to vector<1x1x8xf32>
    %17 = vector.broadcast %16 : vector<1x1x8xf32> to vector<16x16x8xf32>
    %18 = arith.addf %13, %17 : vector<16x16x8xf32>
    %cst_7 = arith.constant 0.000000e+00 : f32
    %19 = vector.broadcast %cst_7 : f32 to vector<1x18x8xf32>
    %cst_8 = arith.constant 0.000000e+00 : f32
    %20 = vector.broadcast %cst_8 : f32 to vector<18x1x8xf32>
    %c0_9 = arith.constant 0 : index
    %c0_10 = arith.constant 0 : index
    %c0_11 = arith.constant 0 : index
    %21 = vector.load %arg9[%c0_9, %c0_10, %c0_11] : memref<18x18x8xf32, #tpu.memory_space<vmem>>, vector<1x18x8xf32>
    tpu.vector_store %arg9[%c0_9, %c0_10, %c0_11], %19 {strides = array<i32>} : memref<18x18x8xf32, #tpu.memory_space<vmem>>, vector<1x18x8xf32>,
    %c17 = arith.constant 17 : index
    %c0_12 = arith.constant 0 : index
    %c0_13 = arith.constant 0 : index
    %22 = vector.load %arg9[%c17, %c0_12, %c0_13] : memref<18x18x8xf32, #tpu.memory_space<vmem>>, vector<1x18x8xf32>
    tpu.vector_store %arg9[%c17, %c0_12, %c0_13], %19 {strides = array<i32>} : memref<18x18x8xf32, #tpu.memory_space<vmem>>, vector<1x18x8xf32>,
    %c0_14 = arith.constant 0 : index
    %c0_15 = arith.constant 0 : index
    %c0_16 = arith.constant 0 : index
    %23 = vector.load %arg9[%c0_14, %c0_15, %c0_16] : memref<18x18x8xf32, #tpu.memory_space<vmem>>, vector<18x1x8xf32>
    tpu.vector_store %arg9[%c0_14, %c0_15, %c0_16], %20 {strides = array<i32>} : memref<18x18x8xf32, #tpu.memory_space<vmem>>, vector<18x1x8xf32>,
    %c0_17 = arith.constant 0 : index
    %c17_18 = arith.constant 17 : index
    %c0_19 = arith.constant 0 : index
    %24 = vector.load %arg9[%c0_17, %c17_18, %c0_19] : memref<18x18x8xf32, #tpu.memory_space<vmem>>, vector<18x1x8xf32>
    tpu.vector_store %arg9[%c0_17, %c17_18, %c0_19], %20 {strides = array<i32>} : memref<18x18x8xf32, #tpu.memory_space<vmem>>, vector<18x1x8xf32>,
    %c1 = arith.constant 1 : index
    %c1_20 = arith.constant 1 : index
    %c0_21 = arith.constant 0 : index
    %25 = vector.load %arg9[%c1, %c1_20, %c0_21] : memref<18x18x8xf32, #tpu.memory_space<vmem>>, vector<16x16x8xf32>
    tpu.vector_store %arg9[%c1, %c1_20, %c0_21], %18 {strides = array<i32>} : memref<18x18x8xf32, #tpu.memory_space<vmem>>, vector<16x16x8xf32>,
    %c0_22 = arith.constant 0 : index
    %c0_23 = arith.constant 0 : index
    %c0_24 = arith.constant 0 : index
    %26 = vector.load %arg9[%c0_22, %c0_23, %c0_24] : memref<18x18x8xf32, #tpu.memory_space<vmem>>, vector<16x16x8xf32>
    %c0_25 = arith.constant 0 : index
    %c1_26 = arith.constant 1 : index
    %c0_27 = arith.constant 0 : index
    %27 = vector.load %arg9[%c0_25, %c1_26, %c0_27] : memref<18x18x8xf32, #tpu.memory_space<vmem>>, vector<16x16x8xf32>
    %c0_28 = arith.constant 0 : index
    %c2 = arith.constant 2 : index
    %c0_29 = arith.constant 0 : index
    %28 = vector.load %arg9[%c0_28, %c2, %c0_29] : memref<18x18x8xf32, #tpu.memory_space<vmem>>, vector<16x16x8xf32>
    %c1_30 = arith.constant 1 : index
    %c0_31 = arith.constant 0 : index
    %c0_32 = arith.constant 0 : index
    %29 = vector.load %arg9[%c1_30, %c0_31, %c0_32] : memref<18x18x8xf32, #tpu.memory_space<vmem>>, vector<16x16x8xf32>
    %c1_33 = arith.constant 1 : index
    %c1_34 = arith.constant 1 : index
    %c0_35 = arith.constant 0 : index
    %30 = vector.load %arg9[%c1_33, %c1_34, %c0_35] : memref<18x18x8xf32, #tpu.memory_space<vmem>>, vector<16x16x8xf32>
    %c1_36 = arith.constant 1 : index
    %c2_37 = arith.constant 2 : index
    %c0_38 = arith.constant 0 : index
    %31 = vector.load %arg9[%c1_36, %c2_37, %c0_38] : memref<18x18x8xf32, #tpu.memory_space<vmem>>, vector<16x16x8xf32>
    %c2_39 = arith.constant 2 : index
    %c0_40 = arith.constant 0 : index
    %c0_41 = arith.constant 0 : index
    %32 = vector.load %arg9[%c2_39, %c0_40, %c0_41] : memref<18x18x8xf32, #tpu.memory_space<vmem>>, vector<16x16x8xf32>
    %c2_42 = arith.constant 2 : index
    %c1_43 = arith.constant 1 : index
    %c0_44 = arith.constant 0 : index
    %33 = vector.load %arg9[%c2_42, %c1_43, %c0_44] : memref<18x18x8xf32, #tpu.memory_space<vmem>>, vector<16x16x8xf32>
    %c2_45 = arith.constant 2 : index
    %c2_46 = arith.constant 2 : index
    %c0_47 = arith.constant 0 : index
    %34 = vector.load %arg9[%c2_45, %c2_46, %c0_47] : memref<18x18x8xf32, #tpu.memory_space<vmem>>, vector<16x16x8xf32>
    %35 = tpu.concatenate %26, %27, %28, %29, %30, %31, %32, %33, %34 in 2 : vector<16x16x8xf32>, vector<16x16x8xf32>, vector<16x16x8xf32>, vector<16x16x8xf32>, vector<16x16x8xf32>, vector<16x16x8xf32>, vector<16x16x8xf32>, vector<16x16x8xf32>, vector<16x16x8xf32> -> vector<16x16x72xf32>
    %c0_48 = arith.constant 0 : index
    %c0_49 = arith.constant 0 : index
    %36 = vector.load %arg4[%c0_48, %c0_49] : memref<72x4xf32, #tpu.memory_space<vmem>>, vector<72x4xf32>
    "tpu.trace_start"() <{level = 10 : i32, message = "hwc,cd->hwd"}> : () -> ()
    %cst_50 = arith.constant dense<0.000000e+00> : vector<16x16x4xf32>
    %37 = tpu.matmul %35, %36, %cst_50 {dimension_numbers = #tpu.dot_dimension_numbers<[2], [0], [0, 1], [1], [0, 0, 0, 1, 1, 1], [], []>} : vector<16x16x72xf32>, vector<72x4xf32>, vector<16x16x4xf32> -> vector<16x16x4xf32>
    "tpu.trace_stop"() : () -> ()
    %c0_51 = arith.constant 0 : index
    %c0_52 = arith.constant 0 : index
    %38 = vector.load %arg5[%c0_51, %c0_52] : memref<1x4xf32, #tpu.memory_space<vmem>>, vector<1x4xf32>
    %39 = vector.shape_cast %38 : vector<1x4xf32> to vector<4xf32>
    %40 = vector.shape_cast %39 : vector<4xf32> to vector<1x1x4xf32>
    %41 = vector.broadcast %40 : vector<1x1x4xf32> to vector<16x16x4xf32>
    %42 = arith.addf %37, %41 : vector<16x16x4xf32>
    %c0_53 = arith.constant 0 : index
    %c0_54 = arith.constant 0 : index
    %43 = vector.load %arg6[%c0_53, %c0_54] : memref<1x4xf32, #tpu.memory_space<vmem>>, vector<1x4xf32>
    %44 = vector.shape_cast %43 : vector<1x4xf32> to vector<4xf32>
    %45 = vector.shape_cast %44 : vector<4xf32> to vector<1x1x4xf32>
    %46 = vector.broadcast %45 : vector<1x1x4xf32> to vector<16x16x4xf32>
    %47 = arith.mulf %42, %46 : vector<16x16x4xf32>
    %c0_55 = arith.constant 0 : index
    %c0_56 = arith.constant 0 : index
    %48 = vector.load %arg7[%c0_55, %c0_56] : memref<1x4xf32, #tpu.memory_space<vmem>>, vector<1x4xf32>
    %49 = vector.shape_cast %48 : vector<1x4xf32> to vector<4xf32>
    %50 = vector.shape_cast %49 : vector<4xf32> to vector<1x1x4xf32>
    %51 = vector.broadcast %50 : vector<1x1x4xf32> to vector<16x16x4xf32>
    %52 = arith.addf %47, %51 : vector<16x16x4xf32>
    %cst_57 = arith.constant 0.000000e+00 : f32
    %53 = vector.broadcast %cst_57 : f32 to vector<16x16x4xf32>
    %54 = arith.maximumf %52, %53 : vector<16x16x4xf32>
    %55 = vector.extract_strided_slice %1 {offsets = [1, 1, 0], sizes = [16, 16, 4], strides = [1, 1, 1]} : vector<18x18x4xf32> to vector<16x16x4xf32>
    %56 = arith.addf %54, %55 : vector<16x16x4xf32>
    %c0_58 = arith.constant 0 : index
    %c0_59 = arith.constant 0 : index
    %c0_60 = arith.constant 0 : index
    %c0_61 = arith.constant 0 : index
    %57 = vector.load %arg8[%c0_58, %c0_59, %c0_60, %c0_61] : memref<1x16x16x4xf32, #tpu.memory_space<vmem>>, vector<1x16x16x4xf32>
    %58 = vector.shape_cast %57 : vector<1x16x16x4xf32> to vector<16x16x4xf32>
    %59 = vector.shape_cast %56 : vector<16x16x4xf32> to vector<1x16x16x4xf32>
    tpu.vector_store %arg8[%c0_58, %c0_59, %c0_60, %c0_61], %59 {strides = array<i32>} : memref<1x16x16x4xf32, #tpu.memory_space<vmem>>, vector<1x16x16x4xf32>,
    return
  }
  func.func @transform_0(%arg0: i32) -> (i32, i32, i32, i32) {
    %c0_i32 = arith.constant 0 : i32
    %c0_i32_0 = arith.constant 0 : i32
    %c0_i32_1 = arith.constant 0 : i32
    %c0_i32_2 = arith.constant 0 : i32
    return %arg0, %c0_i32, %c0_i32_0, %c0_i32_1 : i32, i32, i32, i32
  }
  func.func @transform_1(%arg0: i32) -> (i32, i32) {
    %c0_i32 = arith.constant 0 : i32
    %c0_i32_0 = arith.constant 0 : i32
    %c0_i32_1 = arith.constant 0 : i32
    return %c0_i32, %c0_i32_0 : i32, i32
  }
  func.func @transform_2(%arg0: i32) -> (i32, i32) {
    %c0_i32 = arith.constant 0 : i32
    %c0_i32_0 = arith.constant 0 : i32
    %c0_i32_1 = arith.constant 0 : i32
    return %c0_i32, %c0_i32_0 : i32, i32
  }
  func.func @transform_3(%arg0: i32) -> (i32, i32) {
    %c0_i32 = arith.constant 0 : i32
    %c0_i32_0 = arith.constant 0 : i32
    %c0_i32_1 = arith.constant 0 : i32
    return %c0_i32, %c0_i32_0 : i32, i32
  }
  func.func @transform_4(%arg0: i32) -> (i32, i32) {
    %c0_i32 = arith.constant 0 : i32
    %c0_i32_0 = arith.constant 0 : i32
    %c0_i32_1 = arith.constant 0 : i32
    return %c0_i32, %c0_i32_0 : i32, i32
  }
  func.func @transform_5(%arg0: i32) -> (i32, i32) {
    %c0_i32 = arith.constant 0 : i32
    %c0_i32_0 = arith.constant 0 : i32
    %c0_i32_1 = arith.constant 0 : i32
    return %c0_i32, %c0_i32_0 : i32, i32
  }
  func.func @transform_6(%arg0: i32) -> (i32, i32) {
    %c0_i32 = arith.constant 0 : i32
    %c0_i32_0 = arith.constant 0 : i32
    %c0_i32_1 = arith.constant 0 : i32
    return %c0_i32, %c0_i32_0 : i32, i32
  }
  func.func @transform_7(%arg0: i32) -> (i32, i32, i32, i32) {
    %c0_i32 = arith.constant 0 : i32
    %c0_i32_0 = arith.constant 0 : i32
    %c0_i32_1 = arith.constant 0 : i32
    %c0_i32_2 = arith.constant 0 : i32
    return %arg0, %c0_i32, %c0_i32_0, %c0_i32_1 : i32, i32, i32, i32
  }
}

</mosaic_0001>

<llo_original>
// kernel: tpu_custom_call.1
$region0: #{tpu_custom_call.1}
  #allocation0 [shape = 'u32[]', space=smem, size = 0x4, offset = 0x4, fixed_abs, tag = 'smem constant byte address 0x4 - core index']
  #allocation1 [shape = 'u32[144,128]{1,0:T(1,128)}', space=vmem, size = 0x12000, scoped, tag = 'internal scratch']
  #allocation2 [shape = 'f32[18,18,8]{2,1,0:T(8,128)}', space=vmem, size = 0x36000, scoped, tag = 'scratch operand']
  %s0 = inlined_call_operand.vmem [shape: f32[2,18,18,4], index: 0, kind: input, shape index: {}]
  %s1 = inlined_call_operand.vmem [shape: f32[36,8], index: 1, kind: input, shape index: {}]
  %s2 = inlined_call_operand.vmem [shape: f32[1,8], index: 2, kind: input, shape index: {}]
  %s3 = inlined_call_operand.vmem [shape: f32[72,4], index: 3, kind: input, shape index: {}]
  %s4 = inlined_call_operand.vmem [shape: f32[1,4], index: 4, kind: input, shape index: {}]
  %s5 = inlined_call_operand.vmem [shape: f32[1,4], index: 5, kind: input, shape index: {}]
  %s6 = inlined_call_operand.vmem [shape: f32[1,4], index: 6, kind: input, shape index: {}]
  %s7 = inlined_call_operand.vmem [shape: f32[2,16,16,4], index: 7, kind: output, shape index: {}]
  %s8 = sld [smem:[#allocation0]]
  $region61: #{tpu_custom_call.1} parent=0
    _
  %s10 = ssub.s32 1, %s8
  %s11 = scalar_select 0, %s10, %s8
  loop: start=0, step=1, limit=4
  $region2: #{tpu_custom_call.1} parent=0 // loop_pre_header
    _
  $region3: #{tpu_custom_call.1} parent=0 // loop_header
    %s13 = sphi 0, %s17
    %p14 = scmp.ge.s32.totalorder %s13, 4
    %s23 = sphi 0, %s25
    %s26 = sphi 0, %s23
    %s27 = sphi 0, %s26
    %s43 = sphi 0, %s27
    %s47 = sphi 0, %s47
    %s49 = sphi 0, %s47
    %s50 = sphi 0, %s49
    %s64 = sphi 0, %s50
    %s68 = sphi 0, %s68
    %s70 = sphi 0, %s68
    %s71 = sphi 0, %s70
    %s85 = sphi 0, %s71
    %s89 = sphi 0, %s89
    %s91 = sphi 0, %s89
    %s92 = sphi 0, %s91
    %s106 = sphi 0, %s92
    %s110 = sphi 0, %s110
    %s112 = sphi 0, %s110
    %s113 = sphi 0, %s112
    %s127 = sphi 0, %s113
    %s131 = sphi 0, %s131
    %s133 = sphi 0, %s131
    %s134 = sphi 0, %s133
    %s148 = sphi 0, %s134
    %s152 = sphi 0, %s152
    %s154 = sphi 0, %s152
    %s155 = sphi 0, %s154
    %s169 = sphi 0, %s155
    %s175 = sphi 0, %s177
    %s178 = sphi 0, %s175
    %s179 = sphi 0, %s178
    %s195 = sphi 0, %s179
  $region4: #{tpu_custom_call.1} parent=0 // loop_header_branch
    %16 = sbr.rel (%p14) target = $region8
  $region5: #{tpu_custom_call.1} parent=0 // loop_body
    %s18 = ssub.s32 %s13, 1
    %s19 = ssub.s32 %s13, 2
    %s20 = sadd.s32 %s13, 1
    %s21 = ssub.s32 %s13, %s20
    %p22 = scmp.eq.s32.totalorder %s21, 0
    %s24 = sadd.s32 %s23, 1
    %s25 = scalar_select %p22, %s23, %s24
    %p28 = pneg %p22
    %p29 = scmp.eq.s32.totalorder %s13, 1
    %p30 = por %p28, %p29
    %p31 = scmp.ne.s32.totalorder %s23, %s26
    %p32 = scmp.eq.s32.totalorder %s13, 0
    %p33 = por %p31, %p32
    %p34 = scmp.ne.s32.totalorder %s23, %s26
    %p35 = scmp.eq.s32.totalorder %s18, 1
    %p36 = por %p34, %p35
    %p37 = scmp.ne.s32.totalorder %s26, %s27
    %p38 = scmp.eq.s32.totalorder %s18, 0
    %p39 = por %p37, %p38
    %p40 = scmp.ne.s32.totalorder %s26, %s27
    %p41 = scmp.eq.s32.totalorder %s19, 1
    %p42 = por %p40, %p41
    %p44 = scmp.ne.s32.totalorder %s27, %s43
    %p45 = scmp.eq.s32.totalorder %s19, 0
    %p46 = por %p44, %p45
    %s48 = sadd.s32 %s47, 1
    %p51 = scmp.eq.s32.totalorder %s13, 1
    %p52 = scmp.ne.s32.totalorder %s47, %s49
    %p53 = scmp.eq.s32.totalorder %s13, 0
    %p54 = por %p52, %p53
    %p55 = scmp.ne.s32.totalorder %s47, %s49
    %p56 = scmp.eq.s32.totalorder %s18, 1
    %p57 = por %p55, %p56
    %p58 = scmp.ne.s32.totalorder %s49, %s50
    %p59 = scmp.eq.s32.totalorder %s18, 0
    %p60 = por %p58, %p59
    %p61 = scmp.ne.s32.totalorder %s49, %s50
    %p62 = scmp.eq.s32.totalorder %s19, 1
    %p63 = por %p61, %p62
    %p65 = scmp.ne.s32.totalorder %s50, %s64
    %p66 = scmp.eq.s32.totalorder %s19, 0
    %p67 = por %p65, %p66
    %s69 = sadd.s32 %s68, 1
    %p72 = scmp.eq.s32.totalorder %s13, 1
    %p73 = scmp.ne.s32.totalorder %s68, %s70
    %p74 = scmp.eq.s32.totalorder %s13, 0
    %p75 = por %p73, %p74
    %p76 = scmp.ne.s32.totalorder %s68, %s70
    %p77 = scmp.eq.s32.totalorder %s18, 1
    %p78 = por %p76, %p77
    %p79 = scmp.ne.s32.totalorder %s70, %s71
    %p80 = scmp.eq.s32.totalorder %s18, 0
    %p81 = por %p79, %p80
    %p82 = scmp.ne.s32.totalorder %s70, %s71
    %p83 = scmp.eq.s32.totalorder %s19, 1
    %p84 = por %p82, %p83
    %p86 = scmp.ne.s32.totalorder %s71, %s85
    %p87 = scmp.eq.s32.totalorder %s19, 0
    %p88 = por %p86, %p87
    %s90 = sadd.s32 %s89, 1
    %p93 = scmp.eq.s32.totalorder %s13, 1
    %p94 = scmp.ne.s32.totalorder %s89, %s91
    %p95 = scmp.eq.s32.totalorder %s13, 0
    %p96 = por %p94, %p95
    %p97 = scmp.ne.s32.totalorder %s89, %s91
    %p98 = scmp.eq.s32.totalorder %s18, 1
    %p99 = por %p97, %p98
    %p100 = scmp.ne.s32.totalorder %s91, %s92
    %p101 = scmp.eq.s32.totalorder %s18, 0
    %p102 = por %p100, %p101
    %p103 = scmp.ne.s32.totalorder %s91, %s92
    %p104 = scmp.eq.s32.totalorder %s19, 1
    %p105 = por %p103, %p104
    %p107 = scmp.ne.s32.totalorder %s92, %s106
    %p108 = scmp.eq.s32.totalorder %s19, 0
    %p109 = por %p107, %p108
    %s111 = sadd.s32 %s110, 1
    %p114 = scmp.eq.s32.totalorder %s13, 1
    %p115 = scmp.ne.s32.totalorder %s110, %s112
    %p116 = scmp.eq.s32.totalorder %s13, 0
    %p117 = por %p115, %p116
    %p118 = scmp.ne.s32.totalorder %s110, %s112
    %p119 = scmp.eq.s32.totalorder %s18, 1
    %p120 = por %p118, %p119
    %p121 = scmp.ne.s32.totalorder %s112, %s113
    %p122 = scmp.eq.s32.totalorder %s18, 0
    %p123 = por %p121, %p122
    %p124 = scmp.ne.s32.totalorder %s112, %s113
    %p125 = scmp.eq.s32.totalorder %s19, 1
    %p126 = por %p124, %p125
    %p128 = scmp.ne.s32.totalorder %s113, %s127
    %p129 = scmp.eq.s32.totalorder %s19, 0
    %p130 = por %p128, %p129
    %s132 = sadd.s32 %s131, 1
    %p135 = scmp.eq.s32.totalorder %s13, 1
    %p136 = scmp.ne.s32.totalorder %s131, %s133
    %p137 = scmp.eq.s32.totalorder %s13, 0
    %p138 = por %p136, %p137
    %p139 = scmp.ne.s32.totalorder %s131, %s133
    %p140 = scmp.eq.s32.totalorder %s18, 1
    %p141 = por %p139, %p140
    %p142 = scmp.ne.s32.totalorder %s133, %s134
    %p143 = scmp.eq.s32.totalorder %s18, 0
    %p144 = por %p142, %p143
    %p145 = scmp.ne.s32.totalorder %s133, %s134
    %p146 = scmp.eq.s32.totalorder %s19, 1
    %p147 = por %p145, %p146
    %p149 = scmp.ne.s32.totalorder %s134, %s148
    %p150 = scmp.eq.s32.totalorder %s19, 0
    %p151 = por %p149, %p150
    %s153 = sadd.s32 %s152, 1
    %p156 = scmp.eq.s32.totalorder %s13, 1
    %p157 = scmp.ne.s32.totalorder %s152, %s154
    %p158 = scmp.eq.s32.totalorder %s13, 0
    %p159 = por %p157, %p158
    %p160 = scmp.ne.s32.totalorder %s152, %s154
    %p161 = scmp.eq.s32.totalorder %s18, 1
    %p162 = por %p160, %p161
    %p163 = scmp.ne.s32.totalorder %s154, %s155
    %p164 = scmp.eq.s32.totalorder %s18, 0
    %p165 = por %p163, %p164
    %p166 = scmp.ne.s32.totalorder %s154, %s155
    %p167 = scmp.eq.s32.totalorder %s19, 1
    %p168 = por %p166, %p167
    %p170 = scmp.ne.s32.totalorder %s155, %s169
    %p171 = scmp.eq.s32.totalorder %s19, 0
    %p172 = por %p170, %p171
    %s173 = ssub.s32 %s13, %s20
    %p174 = scmp.eq.s32.totalorder %s173, 0
    %s176 = sadd.s32 %s175, 1
    %s177 = scalar_select %p174, %s175, %s176
    %p180 = pneg %p174
    %p181 = scmp.eq.s32.totalorder %s13, 1
    %p182 = por %p180, %p181
    %p183 = scmp.ne.s32.totalorder %s175, %s178
    %p184 = scmp.eq.s32.totalorder %s13, 0
    %p185 = por %p183, %p184
    %p186 = scmp.ne.s32.totalorder %s175, %s178
    %p187 = scmp.eq.s32.totalorder %s18, 1
    %p188 = por %p186, %p187
    %p189 = scmp.ne.s32.totalorder %s178, %s179
    %p190 = scmp.eq.s32.totalorder %s18, 0
    %p191 = por %p189, %p190
    %p192 = scmp.ne.s32.totalorder %s178, %s179
    %p193 = scmp.eq.s32.totalorder %s19, 1
    %p194 = por %p192, %p193
    %p196 = scmp.ne.s32.totalorder %s179, %s195
    %p197 = scmp.eq.s32.totalorder %s19, 0
    %p198 = por %p196, %p197
    %p199 = scmp.le.s32.totalorder 1, %s13
    %p200 = scmp.lt.s32.totalorder %s13, 3
    %p201 = pnand %p199, %p200
    %p202 = pneg %p201
    // Predicated region
    $region9: #{tpu_custom_call.1} parent=5 // pred_check
      _
    $region10: #{tpu_custom_call.1} parent=5 // pred_check_branch
      %204 = sbr.rel (%p201) target = $region12
    $region11: #{tpu_custom_call.1} parent=5 // pred_region
      %s205 = ssub.s32 %s13, 1
      // Predicated region
      $region13: #{tpu_custom_call.1} parent=11 // pred_check
        %p206 = pneg %p60
      $region14: #{tpu_custom_call.1} parent=11 // pred_check_branch
        %208 = sbr.rel (%p206) target = $region16
      $region15: #{tpu_custom_call.1} parent=11 // pred_region
        _
      $region16: #{tpu_custom_call.1} parent=11 // pred_fallthru
        _
      // Predicated region
      $region17: #{tpu_custom_call.1} parent=11 // pred_check
        %p209 = pneg %p81
      $region18: #{tpu_custom_call.1} parent=11 // pred_check_branch
        %211 = sbr.rel (%p209) target = $region20
      $region19: #{tpu_custom_call.1} parent=11 // pred_region
        _
      $region20: #{tpu_custom_call.1} parent=11 // pred_fallthru
        _
      // Predicated region
      $region21: #{tpu_custom_call.1} parent=11 // pred_check
        %p212 = pneg %p102
      $region22: #{tpu_custom_call.1} parent=11 // pred_check_branch
        %214 = sbr.rel (%p212) target = $region24
      $region23: #{tpu_custom_call.1} parent=11 // pred_region
        _
      $region24: #{tpu_custom_call.1} parent=11 // pred_fallthru
        _
      // Predicated region
      $region25: #{tpu_custom_call.1} parent=11 // pred_check
        %p215 = pneg %p123
      $region26: #{tpu_custom_call.1} parent=11 // pred_check_branch
        %217 = sbr.rel (%p215) target = $region28
      $region27: #{tpu_custom_call.1} parent=11 // pred_region
        _
      $region28: #{tpu_custom_call.1} parent=11 // pred_fallthru
        _
      // Predicated region
      $region29: #{tpu_custom_call.1} parent=11 // pred_check
        %p218 = pneg %p144
      $region30: #{tpu_custom_call.1} parent=11 // pred_check_branch
        %220 = sbr.rel (%p218) target = $region32
      $region31: #{tpu_custom_call.1} parent=11 // pred_region
        _
      $region32: #{tpu_custom_call.1} parent=11 // pred_fallthru
        _
      // Predicated region
      $region33: #{tpu_custom_call.1} parent=11 // pred_check
        %p221 = pneg %p165
      $region34: #{tpu_custom_call.1} parent=11 // pred_check_branch
        %223 = sbr.rel (%p221) target = $region36
      $region35: #{tpu_custom_call.1} parent=11 // pred_region
        _
      $region36: #{tpu_custom_call.1} parent=11 // pred_fallthru
        _
    $region12: #{tpu_custom_call.1} parent=5 // pred_fallthru
      _
    %p224 = scmp.lt.s32.totalorder %s13, 2
    // Predicated region
    $region37: #{tpu_custom_call.1} parent=5 // pred_check
      %p225 = pneg %p224
    $region38: #{tpu_custom_call.1} parent=5 // pred_check_branch
      %227 = sbr.rel (%p225) target = $region40
    $region39: #{tpu_custom_call.1} parent=5 // pred_region
      // Predicated region
      $region41: #{tpu_custom_call.1} parent=39 // pred_check
        %p228 = pneg %p33
      $region42: #{tpu_custom_call.1} parent=39 // pred_check_branch
        %230 = sbr.rel (%p228) target = $region44
      $region43: #{tpu_custom_call.1} parent=39 // pred_region
        %p231 = scmp.lt.s32.totalorder %s13, 1
        %s232 = scalar_select %p231, %s13, 1
        %s233 = smul.addr %s232, 54
        %s234 = smul.addr %s233, 8
        %s235 = scalar_lea.vmem %s0, %s234
      $region44: #{tpu_custom_call.1} parent=39 // pred_fallthru
        _
    $region40: #{tpu_custom_call.1} parent=5 // pred_fallthru
      _
    %p236 = scmp.le.s32.totalorder 1, %s13
    %p237 = scmp.lt.s32.totalorder %s13, 3
    %p238 = pnand %p236, %p237
    %p239 = pneg %p238
    // Predicated region
    $region45: #{tpu_custom_call.1} parent=5 // pred_check
      _
    $region46: #{tpu_custom_call.1} parent=5 // pred_check_branch
      %241 = sbr.rel (%p238) target = $region48
    $region47: #{tpu_custom_call.1} parent=5 // pred_region
      %s242 = ssub.s32 %s13, 1
      %p243 = scmp.lt.s32.totalorder %s18, 1
      %s244 = scalar_select %p243, %s18, 1
      %s245 = smul.addr %s244, 54
      %s246 = smul.addr %s245, 8
      %s247 = scalar_lea.vmem %s0, %s246
      %p248 = pneg %p39
      %p249 = pneg %p36
      %p250 = pneg %p60
      %p251 = pneg %p57
      %p252 = pneg %p81
      %p253 = pneg %p78
      %p254 = pneg %p102
      %p255 = pneg %p99
      %p256 = pneg %p123
      %p257 = pneg %p120
      %p258 = pneg %p144
      %p259 = pneg %p141
      %p260 = pneg %p165
      %p261 = pneg %p162
      %p262 = pneg %p191
      %p263 = pneg %p188
      %p264 = scmp.lt.s32.totalorder %s18, 1
      %s265 = scalar_select %p264, %s18, 1
      %s266 = smul.addr %s265, 32
      %s267 = smul.addr %s266, 8
      %s268 = scalar_lea.vmem %s7, %s267
      %p269 = scmp.lt.s32.totalorder %s18, 1
      %s270 = scalar_select %p269, %s18, 1
      %s271 = smul.addr %s270, 54
      %s272 = smul.addr %s271, 8
      %s273 = scalar_lea.vmem %s0, %s272
      %p274 = scmp.lt.s32.totalorder %s18, 1
      %s275 = scalar_select %p274, %s18, 1
      %s276 = smul.addr %s275, 32
      %s277 = smul.addr %s276, 8
      %s278 = scalar_lea.vmem %s7, %s277
      %v279 = vld [vmem:[%s273] sm:$0xff]
      %v280 = vld [vmem:[%s273 + $0x8] sm:$0xff]
      %v281 = vld [vmem:[%s273 + $0x10] sm:$0x3]
      %v282 = vld [vmem:[%s273 + $0x18] sm:$0xff]
      %v283 = vld [vmem:[%s273 + $0x20] sm:$0xff]
      %v284 = vld [vmem:[%s273 + $0x28] sm:$0x3]
      %v285 = vld [vmem:[%s273 + $0x30] sm:$0xff]
      %v286 = vld [vmem:[%s273 + $0x38] sm:$0xff]
      %v287 = vld [vmem:[%s273 + $0x40] sm:$0x3]
      %v288 = vld [vmem:[%s273 + $0x48] sm:$0xff]
      %v289 = vld [vmem:[%s273 + $0x50] sm:$0xff]
      %v290 = vld [vmem:[%s273 + $0x58] sm:$0x3]
      %v291 = vld [vmem:[%s273 + $0x60] sm:$0xff]
      %v292 = vld [vmem:[%s273 + $0x68] sm:$0xff]
      %v293 = vld [vmem:[%s273 + $0x70] sm:$0x3]
      %v294 = vld [vmem:[%s273 + $0x78] sm:$0xff]
      %v295 = vld [vmem:[%s273 + $0x80] sm:$0xff]
      %v296 = vld [vmem:[%s273 + $0x88] sm:$0x3]
      %v297 = vld [vmem:[%s273 + $0x90] sm:$0xff]
      %v298 = vld [vmem:[%s273 + $0x98] sm:$0xff]
      %v299 = vld [vmem:[%s273 + $0xa0] sm:$0x3]
      %v300 = vld [vmem:[%s273 + $0xa8] sm:$0xff]
      %v301 = vld [vmem:[%s273 + $0xb0] sm:$0xff]
      %v302 = vld [vmem:[%s273 + $0xb8] sm:$0x3]
      %v303 = vld [vmem:[%s273 + $0xc0] sm:$0xff]
      %v304 = vld [vmem:[%s273 + $0xc8] sm:$0xff]
      %v305 = vld [vmem:[%s273 + $0xd0] sm:$0x3]
      %v306 = vld [vmem:[%s273 + $0xd8] sm:$0xff]
      %v307 = vld [vmem:[%s273 + $0xe0] sm:$0xff]
      %v308 = vld [vmem:[%s273 + $0xe8] sm:$0x3]
      %v309 = vld [vmem:[%s273 + $0xf0] sm:$0xff]
      %v310 = vld [vmem:[%s273 + $0xf8] sm:$0xff]
      %v311 = vld [vmem:[%s273 + $0x100] sm:$0x3]
      %v312 = vld [vmem:[%s273 + $0x108] sm:$0xff]
      %v313 = vld [vmem:[%s273 + $0x110] sm:$0xff]
      %v314 = vld [vmem:[%s273 + $0x118] sm:$0x3]
      %v315 = vld [vmem:[%s273 + $0x120] sm:$0xff]
      %v316 = vld [vmem:[%s273 + $0x128] sm:$0xff]
      %v317 = vld [vmem:[%s273 + $0x130] sm:$0x3]
      %v318 = vld [vmem:[%s273 + $0x138] sm:$0xff]
      %v319 = vld [vmem:[%s273 + $0x140] sm:$0xff]
      %v320 = vld [vmem:[%s273 + $0x148] sm:$0x3]
      %v321 = vld [vmem:[%s273 + $0x150] sm:$0xff]
      %v322 = vld [vmem:[%s273 + $0x158] sm:$0xff]
      %v323 = vld [vmem:[%s273 + $0x160] sm:$0x3]
      %v324 = vld [vmem:[%s273 + $0x168] sm:$0xff]
      %v325 = vld [vmem:[%s273 + $0x170] sm:$0xff]
      %v326 = vld [vmem:[%s273 + $0x178] sm:$0x3]
      %v327 = vld [vmem:[%s273 + $0x180] sm:$0xff]
      %v328 = vld [vmem:[%s273 + $0x188] sm:$0xff]
      %v329 = vld [vmem:[%s273 + $0x190] sm:$0x3]
      %v330 = vld [vmem:[%s273 + $0x198] sm:$0xff]
      %v331 = vld [vmem:[%s273 + $0x1a0] sm:$0xff]
      %v332 = vld [vmem:[%s273 + $0x1a8] sm:$0x3]
      %vm381 = vcmask 1046528
      %v382 = vrot.slane %v279, 1
      %v383 = vrot.slane %v280, 1
      %v384 = vsel %vm381, %v382, %v383
      %v385 = vrot.slane %v281, 1
      %v386 = vsel %vm381, %v383, %v385
      %v387 = vrot.slane %v282, 1
      %v388 = vrot.slane %v283, 1
      %v389 = vsel %vm381, %v387, %v388
      %v390 = vrot.slane %v284, 1
      %v391 = vsel %vm381, %v388, %v390
      %v392 = vrot.slane %v285, 1
      %v393 = vrot.slane %v286, 1
      %v394 = vsel %vm381, %v392, %v393
      %v395 = vrot.slane %v287, 1
      %v396 = vsel %vm381, %v393, %v395
      %v397 = vrot.slane %v288, 1
      %v398 = vrot.slane %v289, 1
      %v399 = vsel %vm381, %v397, %v398
      %v400 = vrot.slane %v290, 1
      %v401 = vsel %vm381, %v398, %v400
      %v402 = vrot.slane %v291, 1
      %v403 = vrot.slane %v292, 1
      %v404 = vsel %vm381, %v402, %v403
      %v405 = vrot.slane %v293, 1
      %v406 = vsel %vm381, %v403, %v405
      %v407 = vrot.slane %v294, 1
      %v408 = vrot.slane %v295, 1
      %v409 = vsel %vm381, %v407, %v408
      %v410 = vrot.slane %v296, 1
      %v411 = vsel %vm381, %v408, %v410
      %v412 = vrot.slane %v297, 1
      %v413 = vrot.slane %v298, 1
      %v414 = vsel %vm381, %v412, %v413
      %v415 = vrot.slane %v299, 1
      %v416 = vsel %vm381, %v413, %v415
      %v417 = vrot.slane %v300, 1
      %v418 = vrot.slane %v301, 1
      %v419 = vsel %vm381, %v417, %v418
      %v420 = vrot.slane %v302, 1
      %v421 = vsel %vm381, %v418, %v420
      %v422 = vrot.slane %v303, 1
      %v423 = vrot.slane %v304, 1
      %v424 = vsel %vm381, %v422, %v423
      %v425 = vrot.slane %v305, 1
      %v426 = vsel %vm381, %v423, %v425
      %v427 = vrot.slane %v306, 1
      %v428 = vrot.slane %v307, 1
      %v429 = vsel %vm381, %v427, %v428
      %v430 = vrot.slane %v308, 1
      %v431 = vsel %vm381, %v428, %v430
      %v432 = vrot.slane %v309, 1
      %v433 = vrot.slane %v310, 1
      %v434 = vsel %vm381, %v432, %v433
      %v435 = vrot.slane %v311, 1
      %v436 = vsel %vm381, %v433, %v435
      %v437 = vrot.slane %v312, 1
      %v438 = vrot.slane %v313, 1
      %v439 = vsel %vm381, %v437, %v438
      %v440 = vrot.slane %v314, 1
      %v441 = vsel %vm381, %v438, %v440
      %v442 = vrot.slane %v315, 1
      %v443 = vrot.slane %v316, 1
      %v444 = vsel %vm381, %v442, %v443
      %v445 = vrot.slane %v317, 1
      %v446 = vsel %vm381, %v443, %v445
      %v447 = vrot.slane %v318, 1
      %v448 = vrot.slane %v319, 1
      %v449 = vsel %vm381, %v447, %v448
      %v450 = vrot.slane %v320, 1
      %v451 = vsel %vm381, %v448, %v450
      %v452 = vrot.slane %v321, 1
      %v453 = vrot.slane %v322, 1
      %v454 = vsel %vm381, %v452, %v453
      %v455 = vrot.slane %v323, 1
      %v456 = vsel %vm381, %v453, %v455
      %v457 = vrot.slane %v324, 1
      %v458 = vrot.slane %v325, 1
      %v459 = vsel %vm381, %v457, %v458
      %v460 = vrot.slane %v326, 1
      %v461 = vsel %vm381, %v458, %v460
      %462 = vrot.lane.b32.xlu0 %v384, 4
      %v463 = vpop.permute.xlu0 %462
      %464 = vrot.lane.b32.xlu0 %v386, 4
      %v465 = vpop.permute.xlu0 %464
      %466 = vrot.lane.b32.xlu0 %v389, 4
      %v467 = vpop.permute.xlu0 %466
      %468 = vrot.lane.b32.xlu0 %v391, 4
      %v469 = vpop.permute.xlu0 %468
      %470 = vrot.lane.b32.xlu0 %v394, 4
      %v471 = vpop.permute.xlu0 %470
      %472 = vrot.lane.b32.xlu0 %v396, 4
      %v473 = vpop.permute.xlu0 %472
      %474 = vrot.lane.b32.xlu0 %v399, 4
      %v475 = vpop.permute.xlu0 %474
      %476 = vrot.lane.b32.xlu0 %v401, 4
      %v477 = vpop.permute.xlu0 %476
      %478 = vrot.lane.b32.xlu0 %v404, 4
      %v479 = vpop.permute.xlu0 %478
      %480 = vrot.lane.b32.xlu0 %v406, 4
      %v481 = vpop.permute.xlu0 %480
      %482 = vrot.lane.b32.xlu0 %v409, 4
      %v483 = vpop.permute.xlu0 %482
      %484 = vrot.lane.b32.xlu0 %v411, 4
      %v485 = vpop.permute.xlu0 %484
      %486 = vrot.lane.b32.xlu0 %v414, 4
      %v487 = vpop.permute.xlu0 %486
      %488 = vrot.lane.b32.xlu0 %v416, 4
      %v489 = vpop.permute.xlu0 %488
      %490 = vrot.lane.b32.xlu0 %v419, 4
      %v491 = vpop.permute.xlu0 %490
      %492 = vrot.lane.b32.xlu0 %v421, 4
      %v493 = vpop.permute.xlu0 %492
      %494 = vrot.lane.b32.xlu0 %v424, 4
      %v495 = vpop.permute.xlu0 %494
      %496 = vrot.lane.b32.xlu0 %v426, 4
      %v497 = vpop.permute.xlu0 %496
      %498 = vrot.lane.b32.xlu0 %v429, 4
      %v499 = vpop.permute.xlu0 %498
      %500 = vrot.lane.b32.xlu0 %v431, 4
      %v501 = vpop.permute.xlu0 %500
      %502 = vrot.lane.b32.xlu0 %v434, 4
      %v503 = vpop.permute.xlu0 %502
      %504 = vrot.lane.b32.xlu0 %v436, 4
      %v505 = vpop.permute.xlu0 %504
      %506 = vrot.lane.b32.xlu0 %v439, 4
      %v507 = vpop.permute.xlu0 %506
      %508 = vrot.lane.b32.xlu0 %v441, 4
      %v509 = vpop.permute.xlu0 %508
      %510 = vrot.lane.b32.xlu0 %v444, 4
      %v511 = vpop.permute.xlu0 %510
      %512 = vrot.lane.b32.xlu0 %v446, 4
      %v513 = vpop.permute.xlu0 %512
      %514 = vrot.lane.b32.xlu0 %v449, 4
      %v515 = vpop.permute.xlu0 %514
      %516 = vrot.lane.b32.xlu0 %v451, 4
      %v517 = vpop.permute.xlu0 %516
      %518 = vrot.lane.b32.xlu0 %v454, 4
      %v519 = vpop.permute.xlu0 %518
      %520 = vrot.lane.b32.xlu0 %v456, 4
      %v521 = vpop.permute.xlu0 %520
      %522 = vrot.lane.b32.xlu0 %v459, 4
      %v523 = vpop.permute.xlu0 %522
      %524 = vrot.lane.b32.xlu0 %v461, 4
      %v525 = vpop.permute.xlu0 %524
      %vm558 = vcmask 1045504
      %v559 = vrot.slane %v279, 2
      %v560 = vrot.slane %v280, 2
      %v561 = vsel %vm558, %v559, %v560
      %v562 = vrot.slane %v281, 2
      %v563 = vsel %vm558, %v560, %v562
      %v564 = vrot.slane %v282, 2
      %v565 = vrot.slane %v283, 2
      %v566 = vsel %vm558, %v564, %v565
      %v567 = vrot.slane %v284, 2
      %v568 = vsel %vm558, %v565, %v567
      %v569 = vrot.slane %v285, 2
      %v570 = vrot.slane %v286, 2
      %v571 = vsel %vm558, %v569, %v570
      %v572 = vrot.slane %v287, 2
      %v573 = vsel %vm558, %v570, %v572
      %v574 = vrot.slane %v288, 2
      %v575 = vrot.slane %v289, 2
      %v576 = vsel %vm558, %v574, %v575
      %v577 = vrot.slane %v290, 2
      %v578 = vsel %vm558, %v575, %v577
      %v579 = vrot.slane %v291, 2
      %v580 = vrot.slane %v292, 2
      %v581 = vsel %vm558, %v579, %v580
      %v582 = vrot.slane %v293, 2
      %v583 = vsel %vm558, %v580, %v582
      %v584 = vrot.slane %v294, 2
      %v585 = vrot.slane %v295, 2
      %v586 = vsel %vm558, %v584, %v585
      %v587 = vrot.slane %v296, 2
      %v588 = vsel %vm558, %v585, %v587
      %v589 = vrot.slane %v297, 2
      %v590 = vrot.slane %v298, 2
      %v591 = vsel %vm558, %v589, %v590
      %v592 = vrot.slane %v299, 2
      %v593 = vsel %vm558, %v590, %v592
      %v594 = vrot.slane %v300, 2
      %v595 = vrot.slane %v301, 2
      %v596 = vsel %vm558, %v594, %v595
      %v597 = vrot.slane %v302, 2
      %v598 = vsel %vm558, %v595, %v597
      %v599 = vrot.slane %v303, 2
      %v600 = vrot.slane %v304, 2
      %v601 = vsel %vm558, %v599, %v600
      %v602 = vrot.slane %v305, 2
      %v603 = vsel %vm558, %v600, %v602
      %v604 = vrot.slane %v306, 2
      %v605 = vrot.slane %v307, 2
      %v606 = vsel %vm558, %v604, %v605
      %v607 = vrot.slane %v308, 2
      %v608 = vsel %vm558, %v605, %v607
      %v609 = vrot.slane %v309, 2
      %v610 = vrot.slane %v310, 2
      %v611 = vsel %vm558, %v609, %v610
      %v612 = vrot.slane %v311, 2
      %v613 = vsel %vm558, %v610, %v612
      %v614 = vrot.slane %v312, 2
      %v615 = vrot.slane %v313, 2
      %v616 = vsel %vm558, %v614, %v615
      %v617 = vrot.slane %v314, 2
      %v618 = vsel %vm558, %v615, %v617
      %v619 = vrot.slane %v315, 2
      %v620 = vrot.slane %v316, 2
      %v621 = vsel %vm558, %v619, %v620
      %v622 = vrot.slane %v317, 2
      %v623 = vsel %vm558, %v620, %v622
      %v624 = vrot.slane %v318, 2
      %v625 = vrot.slane %v319, 2
      %v626 = vsel %vm558, %v624, %v625
      %v627 = vrot.slane %v320, 2
      %v628 = vsel %vm558, %v625, %v627
      %v629 = vrot.slane %v321, 2
      %v630 = vrot.slane %v322, 2
      %v631 = vsel %vm558, %v629, %v630
      %v632 = vrot.slane %v323, 2
      %v633 = vsel %vm558, %v630, %v632
      %v634 = vrot.slane %v324, 2
      %v635 = vrot.slane %v325, 2
      %v636 = vsel %vm558, %v634, %v635
      %v637 = vrot.slane %v326, 2
      %v638 = vsel %vm558, %v635, %v637
      %639 = vrot.lane.b32.xlu0 %v561, 8
      %v640 = vpop.permute.xlu0 %639
      %641 = vrot.lane.b32.xlu0 %v563, 8
      %v642 = vpop.permute.xlu0 %641
      %643 = vrot.lane.b32.xlu0 %v566, 8
      %v644 = vpop.permute.xlu0 %643
      %645 = vrot.lane.b32.xlu0 %v568, 8
      %v646 = vpop.permute.xlu0 %645
      %647 = vrot.lane.b32.xlu0 %v571, 8
      %v648 = vpop.permute.xlu0 %647
      %649 = vrot.lane.b32.xlu0 %v573, 8
      %v650 = vpop.permute.xlu0 %649
      %651 = vrot.lane.b32.xlu0 %v576, 8
      %v652 = vpop.permute.xlu0 %651
      %653 = vrot.lane.b32.xlu0 %v578, 8
      %v654 = vpop.permute.xlu0 %653
      %655 = vrot.lane.b32.xlu0 %v581, 8
      %v656 = vpop.permute.xlu0 %655
      %657 = vrot.lane.b32.xlu0 %v583, 8
      %v658 = vpop.permute.xlu0 %657
      %659 = vrot.lane.b32.xlu0 %v586, 8
      %v660 = vpop.permute.xlu0 %659
      %661 = vrot.lane.b32.xlu0 %v588, 8
      %v662 = vpop.permute.xlu0 %661
      %663 = vrot.lane.b32.xlu0 %v591, 8
      %v664 = vpop.permute.xlu0 %663
      %665 = vrot.lane.b32.xlu0 %v593, 8
      %v666 = vpop.permute.xlu0 %665
      %667 = vrot.lane.b32.xlu0 %v596, 8
      %v668 = vpop.permute.xlu0 %667
      %669 = vrot.lane.b32.xlu0 %v598, 8
      %v670 = vpop.permute.xlu0 %669
      %671 = vrot.lane.b32.xlu0 %v601, 8
      %v672 = vpop.permute.xlu0 %671
      %673 = vrot.lane.b32.xlu0 %v603, 8
      %v674 = vpop.permute.xlu0 %673
      %675 = vrot.lane.b32.xlu0 %v606, 8
      %v676 = vpop.permute.xlu0 %675
      %677 = vrot.lane.b32.xlu0 %v608, 8
      %v678 = vpop.permute.xlu0 %677
      %679 = vrot.lane.b32.xlu0 %v611, 8
      %v680 = vpop.permute.xlu0 %679
      %681 = vrot.lane.b32.xlu0 %v613, 8
      %v682 = vpop.permute.xlu0 %681
      %683 = vrot.lane.b32.xlu0 %v616, 8
      %v684 = vpop.permute.xlu0 %683
      %685 = vrot.lane.b32.xlu0 %v618, 8
      %v686 = vpop.permute.xlu0 %685
      %687 = vrot.lane.b32.xlu0 %v621, 8
      %v688 = vpop.permute.xlu0 %687
      %689 = vrot.lane.b32.xlu0 %v623, 8
      %v690 = vpop.permute.xlu0 %689
      %691 = vrot.lane.b32.xlu0 %v626, 8
      %v692 = vpop.permute.xlu0 %691
      %693 = vrot.lane.b32.xlu0 %v628, 8
      %v694 = vpop.permute.xlu0 %693
      %695 = vrot.lane.b32.xlu0 %v631, 8
      %v696 = vpop.permute.xlu0 %695
      %697 = vrot.lane.b32.xlu0 %v633, 8
      %v698 = vpop.permute.xlu0 %697
      %699 = vrot.lane.b32.xlu0 %v636, 8
      %v700 = vpop.permute.xlu0 %699
      %701 = vrot.lane.b32.xlu0 %v638, 8
      %v702 = vpop.permute.xlu0 %701
      %737 = vrot.lane.b32.xlu0 %v282, 12
      %v738 = vpop.permute.xlu0 %737
      %739 = vrot.lane.b32.xlu0 %v283, 12
      %v740 = vpop.permute.xlu0 %739
      %741 = vrot.lane.b32.xlu0 %v285, 12
      %v742 = vpop.permute.xlu0 %741
      %743 = vrot.lane.b32.xlu0 %v286, 12
      %v744 = vpop.permute.xlu0 %743
      %745 = vrot.lane.b32.xlu0 %v288, 12
      %v746 = vpop.permute.xlu0 %745
      %747 = vrot.lane.b32.xlu0 %v289, 12
      %v748 = vpop.permute.xlu0 %747
      %749 = vrot.lane.b32.xlu0 %v291, 12
      %v750 = vpop.permute.xlu0 %749
      %751 = vrot.lane.b32.xlu0 %v292, 12
      %v752 = vpop.permute.xlu0 %751
      %753 = vrot.lane.b32.xlu0 %v294, 12
      %v754 = vpop.permute.xlu0 %753
      %755 = vrot.lane.b32.xlu0 %v295, 12
      %v756 = vpop.permute.xlu0 %755
      %757 = vrot.lane.b32.xlu0 %v297, 12
      %v758 = vpop.permute.xlu0 %757
      %759 = vrot.lane.b32.xlu0 %v298, 12
      %v760 = vpop.permute.xlu0 %759
      %761 = vrot.lane.b32.xlu0 %v300, 12
      %v762 = vpop.permute.xlu0 %761
      %763 = vrot.lane.b32.xlu0 %v301, 12
      %v764 = vpop.permute.xlu0 %763
      %765 = vrot.lane.b32.xlu0 %v303, 12
      %v766 = vpop.permute.xlu0 %765
      %767 = vrot.lane.b32.xlu0 %v304, 12
      %v768 = vpop.permute.xlu0 %767
      %769 = vrot.lane.b32.xlu0 %v306, 12
      %v770 = vpop.permute.xlu0 %769
      %771 = vrot.lane.b32.xlu0 %v307, 12
      %v772 = vpop.permute.xlu0 %771
      %773 = vrot.lane.b32.xlu0 %v309, 12
      %v774 = vpop.permute.xlu0 %773
      %775 = vrot.lane.b32.xlu0 %v310, 12
      %v776 = vpop.permute.xlu0 %775
      %777 = vrot.lane.b32.xlu0 %v312, 12
      %v778 = vpop.permute.xlu0 %777
      %779 = vrot.lane.b32.xlu0 %v313, 12
      %v780 = vpop.permute.xlu0 %779
      %781 = vrot.lane.b32.xlu0 %v315, 12
      %v782 = vpop.permute.xlu0 %781
      %783 = vrot.lane.b32.xlu0 %v316, 12
      %v784 = vpop.permute.xlu0 %783
      %785 = vrot.lane.b32.xlu0 %v318, 12
      %v786 = vpop.permute.xlu0 %785
      %787 = vrot.lane.b32.xlu0 %v319, 12
      %v788 = vpop.permute.xlu0 %787
      %789 = vrot.lane.b32.xlu0 %v321, 12
      %v790 = vpop.permute.xlu0 %789
      %791 = vrot.lane.b32.xlu0 %v322, 12
      %v792 = vpop.permute.xlu0 %791
      %793 = vrot.lane.b32.xlu0 %v324, 12
      %v794 = vpop.permute.xlu0 %793
      %795 = vrot.lane.b32.xlu0 %v325, 12
      %v796 = vpop.permute.xlu0 %795
      %797 = vrot.lane.b32.xlu0 %v327, 12
      %v798 = vpop.permute.xlu0 %797
      %799 = vrot.lane.b32.xlu0 %v328, 12
      %v800 = vpop.permute.xlu0 %799
      %v834 = vrot.slane %v327, 1
      %v835 = vrot.slane %v328, 1
      %v836 = vsel %vm381, %v834, %v835
      %v837 = vrot.slane %v329, 1
      %v838 = vsel %vm381, %v835, %v837
      %839 = vrot.lane.b32.xlu0 %v389, 16
      %v840 = vpop.permute.xlu0 %839
      %841 = vrot.lane.b32.xlu0 %v391, 16
      %v842 = vpop.permute.xlu0 %841
      %843 = vrot.lane.b32.xlu0 %v394, 16
      %v844 = vpop.permute.xlu0 %843
      %845 = vrot.lane.b32.xlu0 %v396, 16
      %v846 = vpop.permute.xlu0 %845
      %847 = vrot.lane.b32.xlu0 %v399, 16
      %v848 = vpop.permute.xlu0 %847
      %849 = vrot.lane.b32.xlu0 %v401, 16
      %v850 = vpop.permute.xlu0 %849
      %851 = vrot.lane.b32.xlu0 %v404, 16
      %v852 = vpop.permute.xlu0 %851
      %853 = vrot.lane.b32.xlu0 %v406, 16
      %v854 = vpop.permute.xlu0 %853
      %855 = vrot.lane.b32.xlu0 %v409, 16
      %v856 = vpop.permute.xlu0 %855
      %857 = vrot.lane.b32.xlu0 %v411, 16
      %v858 = vpop.permute.xlu0 %857
      %859 = vrot.lane.b32.xlu0 %v414, 16
      %v860 = vpop.permute.xlu0 %859
      %861 = vrot.lane.b32.xlu0 %v416, 16
      %v862 = vpop.permute.xlu0 %861
      %863 = vrot.lane.b32.xlu0 %v419, 16
      %v864 = vpop.permute.xlu0 %863
      %865 = vrot.lane.b32.xlu0 %v421, 16
      %v866 = vpop.permute.xlu0 %865
      %867 = vrot.lane.b32.xlu0 %v424, 16
      %v868 = vpop.permute.xlu0 %867
      %869 = vrot.lane.b32.xlu0 %v426, 16
      %v870 = vpop.permute.xlu0 %869
      %871 = vrot.lane.b32.xlu0 %v429, 16
      %v872 = vpop.permute.xlu0 %871
      %873 = vrot.lane.b32.xlu0 %v431, 16
      %v874 = vpop.permute.xlu0 %873
      %875 = vrot.lane.b32.xlu0 %v434, 16
      %v876 = vpop.permute.xlu0 %875
      %877 = vrot.lane.b32.xlu0 %v436, 16
      %v878 = vpop.permute.xlu0 %877
      %879 = vrot.lane.b32.xlu0 %v439, 16
      %v880 = vpop.permute.xlu0 %879
      %881 = vrot.lane.b32.xlu0 %v441, 16
      %v882 = vpop.permute.xlu0 %881
      %883 = vrot.lane.b32.xlu0 %v444, 16
      %v884 = vpop.permute.xlu0 %883
      %885 = vrot.lane.b32.xlu0 %v446, 16
      %v886 = vpop.permute.xlu0 %885
      %887 = vrot.lane.b32.xlu0 %v449, 16
      %v888 = vpop.permute.xlu0 %887
      %889 = vrot.lane.b32.xlu0 %v451, 16
      %v890 = vpop.permute.xlu0 %889
      %891 = vrot.lane.b32.xlu0 %v454, 16
      %v892 = vpop.permute.xlu0 %891
      %893 = vrot.lane.b32.xlu0 %v456, 16
      %v894 = vpop.permute.xlu0 %893
      %895 = vrot.lane.b32.xlu0 %v459, 16
      %v896 = vpop.permute.xlu0 %895
      %897 = vrot.lane.b32.xlu0 %v461, 16
      %v898 = vpop.permute.xlu0 %897
      %899 = vrot.lane.b32.xlu0 %v836, 16
      %v900 = vpop.permute.xlu0 %899
      %901 = vrot.lane.b32.xlu0 %v838, 16
      %v902 = vpop.permute.xlu0 %901
      %v935 = vrot.slane %v327, 2
      %v936 = vrot.slane %v328, 2
      %v937 = vsel %vm558, %v935, %v936
      %v938 = vrot.slane %v329, 2
      %v939 = vsel %vm558, %v936, %v938
      %940 = vrot.lane.b32.xlu0 %v566, 20
      %v941 = vpop.permute.xlu0 %940
      %942 = vrot.lane.b32.xlu0 %v568, 20
      %v943 = vpop.permute.xlu0 %942
      %944 = vrot.lane.b32.xlu0 %v571, 20
      %v945 = vpop.permute.xlu0 %944
      %946 = vrot.lane.b32.xlu0 %v573, 20
      %v947 = vpop.permute.xlu0 %946
      %948 = vrot.lane.b32.xlu0 %v576, 20
      %v949 = vpop.permute.xlu0 %948
      %950 = vrot.lane.b32.xlu0 %v578, 20
      %v951 = vpop.permute.xlu0 %950
      %952 = vrot.lane.b32.xlu0 %v581, 20
      %v953 = vpop.permute.xlu0 %952
      %954 = vrot.lane.b32.xlu0 %v583, 20
      %v955 = vpop.permute.xlu0 %954
      %956 = vrot.lane.b32.xlu0 %v586, 20
      %v957 = vpop.permute.xlu0 %956
      %958 = vrot.lane.b32.xlu0 %v588, 20
      %v959 = vpop.permute.xlu0 %958
      %960 = vrot.lane.b32.xlu0 %v591, 20
      %v961 = vpop.permute.xlu0 %960
      %962 = vrot.lane.b32.xlu0 %v593, 20
      %v963 = vpop.permute.xlu0 %962
      %964 = vrot.lane.b32.xlu0 %v596, 20
      %v965 = vpop.permute.xlu0 %964
      %966 = vrot.lane.b32.xlu0 %v598, 20
      %v967 = vpop.permute.xlu0 %966
      %968 = vrot.lane.b32.xlu0 %v601, 20
      %v969 = vpop.permute.xlu0 %968
      %970 = vrot.lane.b32.xlu0 %v603, 20
      %v971 = vpop.permute.xlu0 %970
      %972 = vrot.lane.b32.xlu0 %v606, 20
      %v973 = vpop.permute.xlu0 %972
      %974 = vrot.lane.b32.xlu0 %v608, 20
      %v975 = vpop.permute.xlu0 %974
      %976 = vrot.lane.b32.xlu0 %v611, 20
      %v977 = vpop.permute.xlu0 %976
      %978 = vrot.lane.b32.xlu0 %v613, 20
      %v979 = vpop.permute.xlu0 %978
      %980 = vrot.lane.b32.xlu0 %v616, 20
      %v981 = vpop.permute.xlu0 %980
      %982 = vrot.lane.b32.xlu0 %v618, 20
      %v983 = vpop.permute.xlu0 %982
      %984 = vrot.lane.b32.xlu0 %v621, 20
      %v985 = vpop.permute.xlu0 %984
      %986 = vrot.lane.b32.xlu0 %v623, 20
      %v987 = vpop.permute.xlu0 %986
      %988 = vrot.lane.b32.xlu0 %v626, 20
      %v989 = vpop.permute.xlu0 %988
      %990 = vrot.lane.b32.xlu0 %v628, 20
      %v991 = vpop.permute.xlu0 %990
      %992 = vrot.lane.b32.xlu0 %v631, 20
      %v993 = vpop.permute.xlu0 %992
      %994 = vrot.lane.b32.xlu0 %v633, 20
      %v995 = vpop.permute.xlu0 %994
      %996 = vrot.lane.b32.xlu0 %v636, 20
      %v997 = vpop.permute.xlu0 %996
      %998 = vrot.lane.b32.xlu0 %v638, 20
      %v999 = vpop.permute.xlu0 %998
      %1000 = vrot.lane.b32.xlu0 %v937, 20
      %v1001 = vpop.permute.xlu0 %1000
      %1002 = vrot.lane.b32.xlu0 %v939, 20
      %v1003 = vpop.permute.xlu0 %1002
      %1038 = vrot.lane.b32.xlu0 %v285, 24
      %v1039 = vpop.permute.xlu0 %1038
      %1040 = vrot.lane.b32.xlu0 %v286, 24
      %v1041 = vpop.permute.xlu0 %1040
      %1042 = vrot.lane.b32.xlu0 %v288, 24
      %v1043 = vpop.permute.xlu0 %1042
      %1044 = vrot.lane.b32.xlu0 %v289, 24
      %v1045 = vpop.permute.xlu0 %1044
      %1046 = vrot.lane.b32.xlu0 %v291, 24
      %v1047 = vpop.permute.xlu0 %1046
      %1048 = vrot.lane.b32.xlu0 %v292, 24
      %v1049 = vpop.permute.xlu0 %1048
      %1050 = vrot.lane.b32.xlu0 %v294, 24
      %v1051 = vpop.permute.xlu0 %1050
      %1052 = vrot.lane.b32.xlu0 %v295, 24
      %v1053 = vpop.permute.xlu0 %1052
      %1054 = vrot.lane.b32.xlu0 %v297, 24
      %v1055 = vpop.permute.xlu0 %1054
      %1056 = vrot.lane.b32.xlu0 %v298, 24
      %v1057 = vpop.permute.xlu0 %1056
      %1058 = vrot.lane.b32.xlu0 %v300, 24
      %v1059 = vpop.permute.xlu0 %1058
      %1060 = vrot.lane.b32.xlu0 %v301, 24
      %v1061 = vpop.permute.xlu0 %1060
      %1062 = vrot.lane.b32.xlu0 %v303, 24
      %v1063 = vpop.permute.xlu0 %1062
      %1064 = vrot.lane.b32.xlu0 %v304, 24
      %v1065 = vpop.permute.xlu0 %1064
      %1066 = vrot.lane.b32.xlu0 %v306, 24
      %v1067 = vpop.permute.xlu0 %1066
      %1068 = vrot.lane.b32.xlu0 %v307, 24
      %v1069 = vpop.permute.xlu0 %1068
      %1070 = vrot.lane.b32.xlu0 %v309, 24
      %v1071 = vpop.permute.xlu0 %1070
      %1072 = vrot.lane.b32.xlu0 %v310, 24
      %v1073 = vpop.permute.xlu0 %1072
      %1074 = vrot.lane.b32.xlu0 %v312, 24
      %v1075 = vpop.permute.xlu0 %1074
      %1076 = vrot.lane.b32.xlu0 %v313, 24
      %v1077 = vpop.permute.xlu0 %1076
      %1078 = vrot.lane.b32.xlu0 %v315, 24
      %v1079 = vpop.permute.xlu0 %1078
      %1080 = vrot.lane.b32.xlu0 %v316, 24
      %v1081 = vpop.permute.xlu0 %1080
      %1082 = vrot.lane.b32.xlu0 %v318, 24
      %v1083 = vpop.permute.xlu0 %1082
      %1084 = vrot.lane.b32.xlu0 %v319, 24
      %v1085 = vpop.permute.xlu0 %1084
      %1086 = vrot.lane.b32.xlu0 %v321, 24
      %v1087 = vpop.permute.xlu0 %1086
      %1088 = vrot.lane.b32.xlu0 %v322, 24
      %v1089 = vpop.permute.xlu0 %1088
      %1090 = vrot.lane.b32.xlu0 %v324, 24
      %v1091 = vpop.permute.xlu0 %1090
      %1092 = vrot.lane.b32.xlu0 %v325, 24
      %v1093 = vpop.permute.xlu0 %1092
      %1094 = vrot.lane.b32.xlu0 %v327, 24
      %v1095 = vpop.permute.xlu0 %1094
      %1096 = vrot.lane.b32.xlu0 %v328, 24
      %v1097 = vpop.permute.xlu0 %1096
      %1098 = vrot.lane.b32.xlu0 %v330, 24
      %v1099 = vpop.permute.xlu0 %1098
      %1100 = vrot.lane.b32.xlu0 %v331, 24
      %v1101 = vpop.permute.xlu0 %1100
      %v1135 = vrot.slane %v330, 1
      %v1136 = vrot.slane %v331, 1
      %v1137 = vsel %vm381, %v1135, %v1136
      %v1138 = vrot.slane %v332, 1
      %v1139 = vsel %vm381, %v1136, %v1138
      %1140 = vrot.lane.b32.xlu0 %v394, 28
      %v1141 = vpop.permute.xlu0 %1140
      %1142 = vrot.lane.b32.xlu0 %v396, 28
      %v1143 = vpop.permute.xlu0 %1142
      %1144 = vrot.lane.b32.xlu0 %v399, 28
      %v1145 = vpop.permute.xlu0 %1144
      %1146 = vrot.lane.b32.xlu0 %v401, 28
      %v1147 = vpop.permute.xlu0 %1146
      %1148 = vrot.lane.b32.xlu0 %v404, 28
      %v1149 = vpop.permute.xlu0 %1148
      %1150 = vrot.lane.b32.xlu0 %v406, 28
      %v1151 = vpop.permute.xlu0 %1150
      %1152 = vrot.lane.b32.xlu0 %v409, 28
      %v1153 = vpop.permute.xlu0 %1152
      %1154 = vrot.lane.b32.xlu0 %v411, 28
      %v1155 = vpop.permute.xlu0 %1154
      %1156 = vrot.lane.b32.xlu0 %v414, 28
      %v1157 = vpop.permute.xlu0 %1156
      %1158 = vrot.lane.b32.xlu0 %v416, 28
      %v1159 = vpop.permute.xlu0 %1158
      %1160 = vrot.lane.b32.xlu0 %v419, 28
      %v1161 = vpop.permute.xlu0 %1160
      %1162 = vrot.lane.b32.xlu0 %v421, 28
      %v1163 = vpop.permute.xlu0 %1162
      %1164 = vrot.lane.b32.xlu0 %v424, 28
      %v1165 = vpop.permute.xlu0 %1164
      %1166 = vrot.lane.b32.xlu0 %v426, 28
      %v1167 = vpop.permute.xlu0 %1166
      %1168 = vrot.lane.b32.xlu0 %v429, 28
      %v1169 = vpop.permute.xlu0 %1168
      %1170 = vrot.lane.b32.xlu0 %v431, 28
      %v1171 = vpop.permute.xlu0 %1170
      %1172 = vrot.lane.b32.xlu0 %v434, 28
      %v1173 = vpop.permute.xlu0 %1172
      %1174 = vrot.lane.b32.xlu0 %v436, 28
      %v1175 = vpop.permute.xlu0 %1174
      %1176 = vrot.lane.b32.xlu0 %v439, 28
      %v1177 = vpop.permute.xlu0 %1176
      %1178 = vrot.lane.b32.xlu0 %v441, 28
      %v1179 = vpop.permute.xlu0 %1178
      %1180 = vrot.lane.b32.xlu0 %v444, 28
      %v1181 = vpop.permute.xlu0 %1180
      %1182 = vrot.lane.b32.xlu0 %v446, 28
      %v1183 = vpop.permute.xlu0 %1182
      %1184 = vrot.lane.b32.xlu0 %v449, 28
      %v1185 = vpop.permute.xlu0 %1184
      %1186 = vrot.lane.b32.xlu0 %v451, 28
      %v1187 = vpop.permute.xlu0 %1186
      %1188 = vrot.lane.b32.xlu0 %v454, 28
      %v1189 = vpop.permute.xlu0 %1188
      %1190 = vrot.lane.b32.xlu0 %v456, 28
      %v1191 = vpop.permute.xlu0 %1190
      %1192 = vrot.lane.b32.xlu0 %v459, 28
      %v1193 = vpop.permute.xlu0 %1192
      %1194 = vrot.lane.b32.xlu0 %v461, 28
      %v1195 = vpop.permute.xlu0 %1194
      %1196 = vrot.lane.b32.xlu0 %v836, 28
      %v1197 = vpop.permute.xlu0 %1196
      %1198 = vrot.lane.b32.xlu0 %v838, 28
      %v1199 = vpop.permute.xlu0 %1198
      %1200 = vrot.lane.b32.xlu0 %v1137, 28
      %v1201 = vpop.permute.xlu0 %1200
      %1202 = vrot.lane.b32.xlu0 %v1139, 28
      %v1203 = vpop.permute.xlu0 %1202
      %v1236 = vrot.slane %v330, 2
      %v1237 = vrot.slane %v331, 2
      %v1238 = vsel %vm558, %v1236, %v1237
      %v1239 = vrot.slane %v332, 2
      %v1240 = vsel %vm558, %v1237, %v1239
      %1241 = vrot.lane.b32.xlu0 %v571, 32
      %v1242 = vpop.permute.xlu0 %1241
      %1243 = vrot.lane.b32.xlu0 %v573, 32
      %v1244 = vpop.permute.xlu0 %1243
      %1245 = vrot.lane.b32.xlu0 %v576, 32
      %v1246 = vpop.permute.xlu0 %1245
      %1247 = vrot.lane.b32.xlu0 %v578, 32
      %v1248 = vpop.permute.xlu0 %1247
      %1249 = vrot.lane.b32.xlu0 %v581, 32
      %v1250 = vpop.permute.xlu0 %1249
      %1251 = vrot.lane.b32.xlu0 %v583, 32
      %v1252 = vpop.permute.xlu0 %1251
      %1253 = vrot.lane.b32.xlu0 %v586, 32
      %v1254 = vpop.permute.xlu0 %1253
      %1255 = vrot.lane.b32.xlu0 %v588, 32
      %v1256 = vpop.permute.xlu0 %1255
      %1257 = vrot.lane.b32.xlu0 %v591, 32
      %v1258 = vpop.permute.xlu0 %1257
      %1259 = vrot.lane.b32.xlu0 %v593, 32
      %v1260 = vpop.permute.xlu0 %1259
      %1261 = vrot.lane.b32.xlu0 %v596, 32
      %v1262 = vpop.permute.xlu0 %1261
      %1263 = vrot.lane.b32.xlu0 %v598, 32
      %v1264 = vpop.permute.xlu0 %1263
      %1265 = vrot.lane.b32.xlu0 %v601, 32
      %v1266 = vpop.permute.xlu0 %1265
      %1267 = vrot.lane.b32.xlu0 %v603, 32
      %v1268 = vpop.permute.xlu0 %1267
      %1269 = vrot.lane.b32.xlu0 %v606, 32
      %v1270 = vpop.permute.xlu0 %1269
      %1271 = vrot.lane.b32.xlu0 %v608, 32
      %v1272 = vpop.permute.xlu0 %1271
      %1273 = vrot.lane.b32.xlu0 %v611, 32
      %v1274 = vpop.permute.xlu0 %1273
      %1275 = vrot.lane.b32.xlu0 %v613, 32
      %v1276 = vpop.permute.xlu0 %1275
      %1277 = vrot.lane.b32.xlu0 %v616, 32
      %v1278 = vpop.permute.xlu0 %1277
      %1279 = vrot.lane.b32.xlu0 %v618, 32
      %v1280 = vpop.permute.xlu0 %1279
      %1281 = vrot.lane.b32.xlu0 %v621, 32
      %v1282 = vpop.permute.xlu0 %1281
      %1283 = vrot.lane.b32.xlu0 %v623, 32
      %v1284 = vpop.permute.xlu0 %1283
      %1285 = vrot.lane.b32.xlu0 %v626, 32
      %v1286 = vpop.permute.xlu0 %1285
      %1287 = vrot.lane.b32.xlu0 %v628, 32
      %v1288 = vpop.permute.xlu0 %1287
      %1289 = vrot.lane.b32.xlu0 %v631, 32
      %v1290 = vpop.permute.xlu0 %1289
      %1291 = vrot.lane.b32.xlu0 %v633, 32
      %v1292 = vpop.permute.xlu0 %1291
      %1293 = vrot.lane.b32.xlu0 %v636, 32
      %v1294 = vpop.permute.xlu0 %1293
      %1295 = vrot.lane.b32.xlu0 %v638, 32
      %v1296 = vpop.permute.xlu0 %1295
      %1297 = vrot.lane.b32.xlu0 %v937, 32
      %v1298 = vpop.permute.xlu0 %1297
      %1299 = vrot.lane.b32.xlu0 %v939, 32
      %v1300 = vpop.permute.xlu0 %1299
      %1301 = vrot.lane.b32.xlu0 %v1238, 32
      %v1302 = vpop.permute.xlu0 %1301
      %1303 = vrot.lane.b32.xlu0 %v1240, 32
      %v1304 = vpop.permute.xlu0 %1303
      %vm1337 = vcmask 31744
      %v1338 = vsel %vm1337, %v279, %v463
      %v1339 = vsel %vm1337, %v280, %v465
      %v1340 = vsel %vm1337, %v282, %v467
      %v1341 = vsel %vm1337, %v283, %v469
      %v1342 = vsel %vm1337, %v285, %v471
      %v1343 = vsel %vm1337, %v286, %v473
      %v1344 = vsel %vm1337, %v288, %v475
      %v1345 = vsel %vm1337, %v289, %v477
      %v1346 = vsel %vm1337, %v291, %v479
      %v1347 = vsel %vm1337, %v292, %v481
      %v1348 = vsel %vm1337, %v294, %v483
      %v1349 = vsel %vm1337, %v295, %v485
      %v1350 = vsel %vm1337, %v297, %v487
      %v1351 = vsel %vm1337, %v298, %v489
      %v1352 = vsel %vm1337, %v300, %v491
      %v1353 = vsel %vm1337, %v301, %v493
      %v1354 = vsel %vm1337, %v303, %v495
      %v1355 = vsel %vm1337, %v304, %v497
      %v1356 = vsel %vm1337, %v306, %v499
      %v1357 = vsel %vm1337, %v307, %v501
      %v1358 = vsel %vm1337, %v309, %v503
      %v1359 = vsel %vm1337, %v310, %v505
      %v1360 = vsel %vm1337, %v312, %v507
      %v1361 = vsel %vm1337, %v313, %v509
      %v1362 = vsel %vm1337, %v315, %v511
      %v1363 = vsel %vm1337, %v316, %v513
      %v1364 = vsel %vm1337, %v318, %v515
      %v1365 = vsel %vm1337, %v319, %v517
      %v1366 = vsel %vm1337, %v321, %v519
      %v1367 = vsel %vm1337, %v322, %v521
      %v1368 = vsel %vm1337, %v324, %v523
      %v1369 = vsel %vm1337, %v325, %v525
      %vm1370 = vcmask 64512
      %v1371 = vsel %vm1370, %v1338, %v640
      %v1372 = vsel %vm1370, %v1339, %v642
      %v1373 = vsel %vm1370, %v1340, %v644
      %v1374 = vsel %vm1370, %v1341, %v646
      %v1375 = vsel %vm1370, %v1342, %v648
      %v1376 = vsel %vm1370, %v1343, %v650
      %v1377 = vsel %vm1370, %v1344, %v652
      %v1378 = vsel %vm1370, %v1345, %v654
      %v1379 = vsel %vm1370, %v1346, %v656
      %v1380 = vsel %vm1370, %v1347, %v658
      %v1381 = vsel %vm1370, %v1348, %v660
      %v1382 = vsel %vm1370, %v1349, %v662
      %v1383 = vsel %vm1370, %v1350, %v664
      %v1384 = vsel %vm1370, %v1351, %v666
      %v1385 = vsel %vm1370, %v1352, %v668
      %v1386 = vsel %vm1370, %v1353, %v670
      %v1387 = vsel %vm1370, %v1354, %v672
      %v1388 = vsel %vm1370, %v1355, %v674
      %v1389 = vsel %vm1370, %v1356, %v676
      %v1390 = vsel %vm1370, %v1357, %v678
      %v1391 = vsel %vm1370, %v1358, %v680
      %v1392 = vsel %vm1370, %v1359, %v682
      %v1393 = vsel %vm1370, %v1360, %v684
      %v1394 = vsel %vm1370, %v1361, %v686
      %v1395 = vsel %vm1370, %v1362, %v688
      %v1396 = vsel %vm1370, %v1363, %v690
      %v1397 = vsel %vm1370, %v1364, %v692
      %v1398 = vsel %vm1370, %v1365, %v694
      %v1399 = vsel %vm1370, %v1366, %v696
      %v1400 = vsel %vm1370, %v1367, %v698
      %v1401 = vsel %vm1370, %v1368, %v700
      %v1402 = vsel %vm1370, %v1369, %v702
      %vm1403 = vcmask 97280
      %v1404 = vsel %vm1403, %v1371, %v738
      %v1405 = vsel %vm1403, %v1372, %v740
      %v1406 = vsel %vm1403, %v1373, %v742
      %v1407 = vsel %vm1403, %v1374, %v744
      %v1408 = vsel %vm1403, %v1375, %v746
      %v1409 = vsel %vm1403, %v1376, %v748
      %v1410 = vsel %vm1403, %v1377, %v750
      %v1411 = vsel %vm1403, %v1378, %v752
      %v1412 = vsel %vm1403, %v1379, %v754
      %v1413 = vsel %vm1403, %v1380, %v756
      %v1414 = vsel %vm1403, %v1381, %v758
      %v1415 = vsel %vm1403, %v1382, %v760
      %v1416 = vsel %vm1403, %v1383, %v762
      %v1417 = vsel %vm1403, %v1384, %v764
      %v1418 = vsel %vm1403, %v1385, %v766
      %v1419 = vsel %vm1403, %v1386, %v768
      %v1420 = vsel %vm1403, %v1387, %v770
      %v1421 = vsel %vm1403, %v1388, %v772
      %v1422 = vsel %vm1403, %v1389, %v774
      %v1423 = vsel %vm1403, %v1390, %v776
      %v1424 = vsel %vm1403, %v1391, %v778
      %v1425 = vsel %vm1403, %v1392, %v780
      %v1426 = vsel %vm1403, %v1393, %v782
      %v1427 = vsel %vm1403, %v1394, %v784
      %v1428 = vsel %vm1403, %v1395, %v786
      %v1429 = vsel %vm1403, %v1396, %v788
      %v1430 = vsel %vm1403, %v1397, %v790
      %v1431 = vsel %vm1403, %v1398, %v792
      %v1432 = vsel %vm1403, %v1399, %v794
      %v1433 = vsel %vm1403, %v1400, %v796
      %v1434 = vsel %vm1403, %v1401, %v798
      %v1435 = vsel %vm1403, %v1402, %v800
      %vm1436 = vcmask 130048
      %v1437 = vsel %vm1436, %v1404, %v840
      %v1438 = vsel %vm1436, %v1405, %v842
      %v1439 = vsel %vm1436, %v1406, %v844
      %v1440 = vsel %vm1436, %v1407, %v846
      %v1441 = vsel %vm1436, %v1408, %v848
      %v1442 = vsel %vm1436, %v1409, %v850
      %v1443 = vsel %vm1436, %v1410, %v852
      %v1444 = vsel %vm1436, %v1411, %v854
      %v1445 = vsel %vm1436, %v1412, %v856
      %v1446 = vsel %vm1436, %v1413, %v858
      %v1447 = vsel %vm1436, %v1414, %v860
      %v1448 = vsel %vm1436, %v1415, %v862
      %v1449 = vsel %vm1436, %v1416, %v864
      %v1450 = vsel %vm1436, %v1417, %v866
      %v1451 = vsel %vm1436, %v1418, %v868
      %v1452 = vsel %vm1436, %v1419, %v870
      %v1453 = vsel %vm1436, %v1420, %v872
      %v1454 = vsel %vm1436, %v1421, %v874
      %v1455 = vsel %vm1436, %v1422, %v876
      %v1456 = vsel %vm1436, %v1423, %v878
      %v1457 = vsel %vm1436, %v1424, %v880
      %v1458 = vsel %vm1436, %v1425, %v882
      %v1459 = vsel %vm1436, %v1426, %v884
      %v1460 = vsel %vm1436, %v1427, %v886
      %v1461 = vsel %vm1436, %v1428, %v888
      %v1462 = vsel %vm1436, %v1429, %v890
      %v1463 = vsel %vm1436, %v1430, %v892
      %v1464 = vsel %vm1436, %v1431, %v894
      %v1465 = vsel %vm1436, %v1432, %v896
      %v1466 = vsel %vm1436, %v1433, %v898
      %v1467 = vsel %vm1436, %v1434, %v900
      %v1468 = vsel %vm1436, %v1435, %v902
      %vm1469 = vcmask 162816
      %v1470 = vsel %vm1469, %v1437, %v941
      %v1471 = vsel %vm1469, %v1438, %v943
      %v1472 = vsel %vm1469, %v1439, %v945
      %v1473 = vsel %vm1469, %v1440, %v947
      %v1474 = vsel %vm1469, %v1441, %v949
      %v1475 = vsel %vm1469, %v1442, %v951
      %v1476 = vsel %vm1469, %v1443, %v953
      %v1477 = vsel %vm1469, %v1444, %v955
      %v1478 = vsel %vm1469, %v1445, %v957
      %v1479 = vsel %vm1469, %v1446, %v959
      %v1480 = vsel %vm1469, %v1447, %v961
      %v1481 = vsel %vm1469, %v1448, %v963
      %v1482 = vsel %vm1469, %v1449, %v965
      %v1483 = vsel %vm1469, %v1450, %v967
      %v1484 = vsel %vm1469, %v1451, %v969
      %v1485 = vsel %vm1469, %v1452, %v971
      %v1486 = vsel %vm1469, %v1453, %v973
      %v1487 = vsel %vm1469, %v1454, %v975
      %v1488 = vsel %vm1469, %v1455, %v977
      %v1489 = vsel %vm1469, %v1456, %v979
      %v1490 = vsel %vm1469, %v1457, %v981
      %v1491 = vsel %vm1469, %v1458, %v983
      %v1492 = vsel %vm1469, %v1459, %v985
      %v1493 = vsel %vm1469, %v1460, %v987
      %v1494 = vsel %vm1469, %v1461, %v989
      %v1495 = vsel %vm1469, %v1462, %v991
      %v1496 = vsel %vm1469, %v1463, %v993
      %v1497 = vsel %vm1469, %v1464, %v995
      %v1498 = vsel %vm1469, %v1465, %v997
      %v1499 = vsel %vm1469, %v1466, %v999
      %v1500 = vsel %vm1469, %v1467, %v1001
      %v1501 = vsel %vm1469, %v1468, %v1003
      %vm1502 = vcmask 195584
      %v1503 = vsel %vm1502, %v1470, %v1039
      %v1504 = vsel %vm1502, %v1471, %v1041
      %v1505 = vsel %vm1502, %v1472, %v1043
      %v1506 = vsel %vm1502, %v1473, %v1045
      %v1507 = vsel %vm1502, %v1474, %v1047
      %v1508 = vsel %vm1502, %v1475, %v1049
      %v1509 = vsel %vm1502, %v1476, %v1051
      %v1510 = vsel %vm1502, %v1477, %v1053
      %v1511 = vsel %vm1502, %v1478, %v1055
      %v1512 = vsel %vm1502, %v1479, %v1057
      %v1513 = vsel %vm1502, %v1480, %v1059
      %v1514 = vsel %vm1502, %v1481, %v1061
      %v1515 = vsel %vm1502, %v1482, %v1063
      %v1516 = vsel %vm1502, %v1483, %v1065
      %v1517 = vsel %vm1502, %v1484, %v1067
      %v1518 = vsel %vm1502, %v1485, %v1069
      %v1519 = vsel %vm1502, %v1486, %v1071
      %v1520 = vsel %vm1502, %v1487, %v1073
      %v1521 = vsel %vm1502, %v1488, %v1075
      %v1522 = vsel %vm1502, %v1489, %v1077
      %v1523 = vsel %vm1502, %v1490, %v1079
      %v1524 = vsel %vm1502, %v1491, %v1081
      %v1525 = vsel %vm1502, %v1492, %v1083
      %v1526 = vsel %vm1502, %v1493, %v1085
      %v1527 = vsel %vm1502, %v1494, %v1087
      %v1528 = vsel %vm1502, %v1495, %v1089
      %v1529 = vsel %vm1502, %v1496, %v1091
      %v1530 = vsel %vm1502, %v1497, %v1093
      %v1531 = vsel %vm1502, %v1498, %v1095
      %v1532 = vsel %vm1502, %v1499, %v1097
      %v1533 = vsel %vm1502, %v1500, %v1099
      %v1534 = vsel %vm1502, %v1501, %v1101
      %vm1535 = vcmask 228352
      %v1536 = vsel %vm1535, %v1503, %v1141
      %v1537 = vsel %vm1535, %v1504, %v1143
      %v1538 = vsel %vm1535, %v1505, %v1145
      %v1539 = vsel %vm1535, %v1506, %v1147
      %v1540 = vsel %vm1535, %v1507, %v1149
      %v1541 = vsel %vm1535, %v1508, %v1151
      %v1542 = vsel %vm1535, %v1509, %v1153
      %v1543 = vsel %vm1535, %v1510, %v1155
      %v1544 = vsel %vm1535, %v1511, %v1157
      %v1545 = vsel %vm1535, %v1512, %v1159
      %v1546 = vsel %vm1535, %v1513, %v1161
      %v1547 = vsel %vm1535, %v1514, %v1163
      %v1548 = vsel %vm1535, %v1515, %v1165
      %v1549 = vsel %vm1535, %v1516, %v1167
      %v1550 = vsel %vm1535, %v1517, %v1169
      %v1551 = vsel %vm1535, %v1518, %v1171
      %v1552 = vsel %vm1535, %v1519, %v1173
      %v1553 = vsel %vm1535, %v1520, %v1175
      %v1554 = vsel %vm1535, %v1521, %v1177
      %v1555 = vsel %vm1535, %v1522, %v1179
      %v1556 = vsel %vm1535, %v1523, %v1181
      %v1557 = vsel %vm1535, %v1524, %v1183
      %v1558 = vsel %vm1535, %v1525, %v1185
      %v1559 = vsel %vm1535, %v1526, %v1187
      %v1560 = vsel %vm1535, %v1527, %v1189
      %v1561 = vsel %vm1535, %v1528, %v1191
      %v1562 = vsel %vm1535, %v1529, %v1193
      %v1563 = vsel %vm1535, %v1530, %v1195
      %v1564 = vsel %vm1535, %v1531, %v1197
      %v1565 = vsel %vm1535, %v1532, %v1199
      %v1566 = vsel %vm1535, %v1533, %v1201
      %v1567 = vsel %vm1535, %v1534, %v1203
      %vm1568 = vcmask 261120
      %v1569 = vsel %vm1568, %v1536, %v1242
      %v1570 = vsel %vm1568, %v1537, %v1244
      %v1571 = vsel %vm1568, %v1538, %v1246
      %v1572 = vsel %vm1568, %v1539, %v1248
      %v1573 = vsel %vm1568, %v1540, %v1250
      %v1574 = vsel %vm1568, %v1541, %v1252
      %v1575 = vsel %vm1568, %v1542, %v1254
      %v1576 = vsel %vm1568, %v1543, %v1256
      %v1577 = vsel %vm1568, %v1544, %v1258
      %v1578 = vsel %vm1568, %v1545, %v1260
      %v1579 = vsel %vm1568, %v1546, %v1262
      %v1580 = vsel %vm1568, %v1547, %v1264
      %v1581 = vsel %vm1568, %v1548, %v1266
      %v1582 = vsel %vm1568, %v1549, %v1268
      %v1583 = vsel %vm1568, %v1550, %v1270
      %v1584 = vsel %vm1568, %v1551, %v1272
      %v1585 = vsel %vm1568, %v1552, %v1274
      %v1586 = vsel %vm1568, %v1553, %v1276
      %v1587 = vsel %vm1568, %v1554, %v1278
      %v1588 = vsel %vm1568, %v1555, %v1280
      %v1589 = vsel %vm1568, %v1556, %v1282
      %v1590 = vsel %vm1568, %v1557, %v1284
      %v1591 = vsel %vm1568, %v1558, %v1286
      %v1592 = vsel %vm1568, %v1559, %v1288
      %v1593 = vsel %vm1568, %v1560, %v1290
      %v1594 = vsel %vm1568, %v1561, %v1292
      %v1595 = vsel %vm1568, %v1562, %v1294
      %v1596 = vsel %vm1568, %v1563, %v1296
      %v1597 = vsel %vm1568, %v1564, %v1298
      %v1598 = vsel %vm1568, %v1565, %v1300
      %v1599 = vsel %vm1568, %v1566, %v1302
      %v1600 = vsel %vm1568, %v1567, %v1304
      %v1601 = vld [vmem:[%s1] sm:$0xff]
      %v1602 = vld [vmem:[%s1 + $0x8] sm:$0xff]
      %v1603 = vld [vmem:[%s1 + $0x10] sm:$0xff]
      %v1604 = vld [vmem:[%s1 + $0x18] sm:$0xff]
      %v1605 = vld [vmem:[%s1 + $0x20] sm:$0xf]
      %v1606 = vld [vmem:[%s2] sm:$0x1]
      %v1608 = vlaneseq
      %v1609 = vshrl.u32 %v1608, 7
      %v1610 = vsub.s32 0, %v1609
      %v1611 = vrot.slane %v1606, %v1610
      %vm1613 = vcmask 293888
      %v1615 = vsel %vm1613, %v1569, 0
      %v1618 = vsel %vm1613, %v1570, 0
      %v1621 = vsel %vm1613, %v1571, 0
      %v1624 = vsel %vm1613, %v1572, 0
      %v1627 = vsel %vm1613, %v1573, 0
      %v1630 = vsel %vm1613, %v1574, 0
      %v1633 = vsel %vm1613, %v1575, 0
      %v1636 = vsel %vm1613, %v1576, 0
      %v1639 = vsel %vm1613, %v1577, 0
      %v1642 = vsel %vm1613, %v1578, 0
      %v1645 = vsel %vm1613, %v1579, 0
      %v1648 = vsel %vm1613, %v1580, 0
      %v1651 = vsel %vm1613, %v1581, 0
      %v1654 = vsel %vm1613, %v1582, 0
      %v1657 = vsel %vm1613, %v1583, 0
      %v1660 = vsel %vm1613, %v1584, 0
      %v1663 = vsel %vm1613, %v1585, 0
      %v1666 = vsel %vm1613, %v1586, 0
      %v1669 = vsel %vm1613, %v1587, 0
      %v1672 = vsel %vm1613, %v1588, 0
      %v1675 = vsel %vm1613, %v1589, 0
      %v1678 = vsel %vm1613, %v1590, 0
      %v1681 = vsel %vm1613, %v1591, 0
      %v1684 = vsel %vm1613, %v1592, 0
      %v1687 = vsel %vm1613, %v1593, 0
      %v1690 = vsel %vm1613, %v1594, 0
      %v1693 = vsel %vm1613, %v1595, 0
      %v1696 = vsel %vm1613, %v1596, 0
      %v1699 = vsel %vm1613, %v1597, 0
      %v1702 = vsel %vm1613, %v1598, 0
      %v1705 = vsel %vm1613, %v1599, 0
      %v1708 = vsel %vm1613, %v1600, 0
      %vm1710 = vcmask 1043456
      %v1712 = vsel %vm1710, %v1605, 0
      %1714 = vmatprep.subr.mxu0 0.0
      %1715 = vmatpush1.msra.mxu0 0.0
      %1716 = vmatprep.subr.mxu0 0.0
      %1717 = vmatpush1.msra.mxu0 0.0
      %1718 = vmatprep.subr.mxu0 0.0
      %1719 = vmatpush1.msra.mxu0 0.0
      %1720 = vmatprep.subr.mxu0 0.0
      %1721 = vmatpush1.msra.mxu0 0.0
      %1722 = vmatprep.subr.mxu0 0.0
      %1723 = vmatpush1.msra.mxu0 0.0
      %1724 = vmatprep.subr.mxu0 0.0
      %1725 = vmatpush1.msra.mxu0 0.0
      %1726 = vmatprep.subr.mxu0 0.0
      %1727 = vmatpush1.msra.mxu0 0.0
      %1728 = vmatprep.subr.mxu0 0.0
      %1729 = vmatpush1.msra.mxu0 0.0
      %1730 = vmatprep.subr.mxu0 0.0
      %1731 = vmatpush1.msra.mxu0 0.0
      %1732 = vmatprep.subr.mxu0 0.0
      %1733 = vmatpush1.msra.mxu0 0.0
      %1734 = vmatprep.subr.mxu0 0.0
      %1735 = vmatpush1.msra.mxu0 0.0
      %1736 = vmatprep.subr.mxu0 0.0
      %1737 = vmatpush1.msra.mxu0 %v1712
      %1738 = vmatprep.subr.mxu0 0.0
      %1739 = vmatpush1.msra.mxu0 %v1604
      %1740 = vmatprep.subr.mxu0 0.0
      %1741 = vmatpush1.msra.mxu0 %v1603
      %1742 = vmatprep.subr.mxu0 0.0
      %1743 = vmatpush1.msra.mxu0 %v1602
      %1744 = vmatprep.subr.mxu0 0.0
      %1745 = vmatpush1.msra.mxu0 %v1601
      %1746 = vmatprep.subr.mxu0 0.0
      %1747 = vmatpush2.msra.mxu0 0.0
      %1748 = vmatprep.subr.mxu0 0.0
      %1749 = vmatpush2.msra.mxu0 0.0
      %1750 = vmatprep.subr.mxu0 0.0
      %1751 = vmatpush2.msra.mxu0 0.0
      %1752 = vmatprep.subr.mxu0 0.0
      %1753 = vmatpush2.msra.mxu0 0.0
      %1754 = vmatprep.subr.mxu0 0.0
      %1755 = vmatpush2.msra.mxu0 0.0
      %1756 = vmatprep.subr.mxu0 0.0
      %1757 = vmatpush2.msra.mxu0 0.0
      %1758 = vmatprep.subr.mxu0 0.0
      %1759 = vmatpush2.msra.mxu0 0.0
      %1760 = vmatprep.subr.mxu0 0.0
      %1761 = vmatpush2.msra.mxu0 0.0
      %1762 = vmatprep.subr.mxu0 0.0
      %1763 = vmatpush2.msra.mxu0 0.0
      %1764 = vmatprep.subr.mxu0 0.0
      %1765 = vmatpush2.msra.mxu0 0.0
      %1766 = vmatprep.subr.mxu0 0.0
      %1767 = vmatpush2.msra.mxu0 0.0
      %1768 = vmatprep.subr.mxu0 0.0
      %1769 = vmatpush2.msra.mxu0 0.0
      %1770 = vmatprep.subr.mxu0 0.0
      %1771 = vmatpush2.msra.mxu0 0.0
      %1772 = vmatprep.subr.mxu0 0.0
      %1773 = vmatpush2.msra.mxu0 0.0
      %1774 = vmatprep.subr.mxu0 0.0
      %1775 = vmatpush2.msra.mxu0 0.0
      %1776 = vmatprep.subr.mxu0 0.0
      %1777 = vmatpush2.msra.mxu0 0.0
      %1778 = vmatprep.mubr.f32.mxu0 0.0
      %1779 = vmatmul.mubr.f32.gmra.mxu0 %v1615
      %v1780 = vpop.f32.mrf.mxu0
      %v1781 = vadd.f32 %v1611, %v1780
      %v1782 = vpop.f32.mrf.mxu0
      %1783 = vmatprep.mubr.f32.mxu0 0.0
      %1784 = vmatmul.mubr.f32.gmra.mxu0 %v1618
      %v1785 = vpop.f32.mrf.mxu0
      %v1786 = vadd.f32 %v1611, %v1785
      %v1787 = vpop.f32.mrf.mxu0
      %1788 = vmatprep.mubr.f32.mxu0 0.0
      %1789 = vmatmul.mubr.f32.gmra.mxu0 %v1621
      %v1790 = vpop.f32.mrf.mxu0
      %v1791 = vadd.f32 %v1611, %v1790
      %v1792 = vpop.f32.mrf.mxu0
      %1793 = vmatprep.mubr.f32.mxu0 0.0
      %1794 = vmatmul.mubr.f32.gmra.mxu0 %v1624
      %v1795 = vpop.f32.mrf.mxu0
      %v1796 = vadd.f32 %v1611, %v1795
      %v1797 = vpop.f32.mrf.mxu0
      %1798 = vmatprep.mubr.f32.mxu0 0.0
      %1799 = vmatmul.mubr.f32.gmra.mxu0 %v1627
      %v1800 = vpop.f32.mrf.mxu0
      %v1801 = vadd.f32 %v1611, %v1800
      %v1802 = vpop.f32.mrf.mxu0
      %1803 = vmatprep.mubr.f32.mxu0 0.0
      %1804 = vmatmul.mubr.f32.gmra.mxu0 %v1630
      %v1805 = vpop.f32.mrf.mxu0
      %v1806 = vadd.f32 %v1611, %v1805
      %v1807 = vpop.f32.mrf.mxu0
      %1808 = vmatprep.mubr.f32.mxu0 0.0
      %1809 = vmatmul.mubr.f32.gmra.mxu0 %v1633
      %v1810 = vpop.f32.mrf.mxu0
      %v1811 = vadd.f32 %v1611, %v1810
      %v1812 = vpop.f32.mrf.mxu0
      %1813 = vmatprep.mubr.f32.mxu0 0.0
      %1814 = vmatmul.mubr.f32.gmra.mxu0 %v1636
      %v1815 = vpop.f32.mrf.mxu0
      %v1816 = vadd.f32 %v1611, %v1815
      %v1817 = vpop.f32.mrf.mxu0
      %1818 = vmatprep.mubr.f32.mxu0 0.0
      %1819 = vmatmul.mubr.f32.gmra.mxu0 %v1639
      %v1820 = vpop.f32.mrf.mxu0
      %v1821 = vadd.f32 %v1611, %v1820
      %v1822 = vpop.f32.mrf.mxu0
      %1823 = vmatprep.mubr.f32.mxu0 0.0
      %1824 = vmatmul.mubr.f32.gmra.mxu0 %v1642
      %v1825 = vpop.f32.mrf.mxu0
      %v1826 = vadd.f32 %v1611, %v1825
      %v1827 = vpop.f32.mrf.mxu0
      %1828 = vmatprep.mubr.f32.mxu0 0.0
      %1829 = vmatmul.mubr.f32.gmra.mxu0 %v1645
      %v1830 = vpop.f32.mrf.mxu0
      %v1831 = vadd.f32 %v1611, %v1830
      %v1832 = vpop.f32.mrf.mxu0
      %1833 = vmatprep.mubr.f32.mxu0 0.0
      %1834 = vmatmul.mubr.f32.gmra.mxu0 %v1648
      %v1835 = vpop.f32.mrf.mxu0
      %v1836 = vadd.f32 %v1611, %v1835
      %v1837 = vpop.f32.mrf.mxu0
      %1838 = vmatprep.mubr.f32.mxu0 0.0
      %1839 = vmatmul.mubr.f32.gmra.mxu0 %v1651
      %v1840 = vpop.f32.mrf.mxu0
      %v1841 = vadd.f32 %v1611, %v1840
      %v1842 = vpop.f32.mrf.mxu0
      %1843 = vmatprep.mubr.f32.mxu0 0.0
      %1844 = vmatmul.mubr.f32.gmra.mxu0 %v1654
      %v1845 = vpop.f32.mrf.mxu0
      %v1846 = vadd.f32 %v1611, %v1845
      %v1847 = vpop.f32.mrf.mxu0
      %1848 = vmatprep.mubr.f32.mxu0 0.0
      %1849 = vmatmul.mubr.f32.gmra.mxu0 %v1657
      %v1850 = vpop.f32.mrf.mxu0
      %v1851 = vadd.f32 %v1611, %v1850
      %v1852 = vpop.f32.mrf.mxu0
      %1853 = vmatprep.mubr.f32.mxu0 0.0
      %1854 = vmatmul.mubr.f32.gmra.mxu0 %v1660
      %v1855 = vpop.f32.mrf.mxu0
      %v1856 = vadd.f32 %v1611, %v1855
      %v1857 = vpop.f32.mrf.mxu0
      %1858 = vmatprep.mubr.f32.mxu0 0.0
      %1859 = vmatmul.mubr.f32.gmra.mxu0 %v1663
      %v1860 = vpop.f32.mrf.mxu0
      %v1861 = vadd.f32 %v1611, %v1860
      %v1862 = vpop.f32.mrf.mxu0
      %1863 = vmatprep.mubr.f32.mxu0 0.0
      %1864 = vmatmul.mubr.f32.gmra.mxu0 %v1666
      %v1865 = vpop.f32.mrf.mxu0
      %v1866 = vadd.f32 %v1611, %v1865
      %v1867 = vpop.f32.mrf.mxu0
      %1868 = vmatprep.mubr.f32.mxu0 0.0
      %1869 = vmatmul.mubr.f32.gmra.mxu0 %v1669
      %v1870 = vpop.f32.mrf.mxu0
      %v1871 = vadd.f32 %v1611, %v1870
      %v1872 = vpop.f32.mrf.mxu0
      %1873 = vmatprep.mubr.f32.mxu0 0.0
      %1874 = vmatmul.mubr.f32.gmra.mxu0 %v1672
      %v1875 = vpop.f32.mrf.mxu0
      %v1876 = vadd.f32 %v1611, %v1875
      %v1877 = vpop.f32.mrf.mxu0
      %1878 = vmatprep.mubr.f32.mxu0 0.0
      %1879 = vmatmul.mubr.f32.gmra.mxu0 %v1675
      %v1880 = vpop.f32.mrf.mxu0
      %v1881 = vadd.f32 %v1611, %v1880
      %v1882 = vpop.f32.mrf.mxu0
      %1883 = vmatprep.mubr.f32.mxu0 0.0
      %1884 = vmatmul.mubr.f32.gmra.mxu0 %v1678
      %v1885 = vpop.f32.mrf.mxu0
      %v1886 = vadd.f32 %v1611, %v1885
      %v1887 = vpop.f32.mrf.mxu0
      %1888 = vmatprep.mubr.f32.mxu0 0.0
      %1889 = vmatmul.mubr.f32.gmra.mxu0 %v1681
      %v1890 = vpop.f32.mrf.mxu0
      %v1891 = vadd.f32 %v1611, %v1890
      %v1892 = vpop.f32.mrf.mxu0
      %1893 = vmatprep.mubr.f32.mxu0 0.0
      %1894 = vmatmul.mubr.f32.gmra.mxu0 %v1684
      %v1895 = vpop.f32.mrf.mxu0
      %v1896 = vadd.f32 %v1611, %v1895
      %v1897 = vpop.f32.mrf.mxu0
      %1898 = vmatprep.mubr.f32.mxu0 0.0
      %1899 = vmatmul.mubr.f32.gmra.mxu0 %v1687
      %v1900 = vpop.f32.mrf.mxu0
      %v1901 = vadd.f32 %v1611, %v1900
      %v1902 = vpop.f32.mrf.mxu0
      %1903 = vmatprep.mubr.f32.mxu0 0.0
      %1904 = vmatmul.mubr.f32.gmra.mxu0 %v1690
      %v1905 = vpop.f32.mrf.mxu0
      %v1906 = vadd.f32 %v1611, %v1905
      %v1907 = vpop.f32.mrf.mxu0
      %1908 = vmatprep.mubr.f32.mxu0 0.0
      %1909 = vmatmul.mubr.f32.gmra.mxu0 %v1693
      %v1910 = vpop.f32.mrf.mxu0
      %v1911 = vadd.f32 %v1611, %v1910
      %v1912 = vpop.f32.mrf.mxu0
      %1913 = vmatprep.mubr.f32.mxu0 0.0
      %1914 = vmatmul.mubr.f32.gmra.mxu0 %v1696
      %v1915 = vpop.f32.mrf.mxu0
      %v1916 = vadd.f32 %v1611, %v1915
      %v1917 = vpop.f32.mrf.mxu0
      %1918 = vmatprep.mubr.f32.mxu0 0.0
      %1919 = vmatmul.mubr.f32.gmra.mxu0 %v1699
      %v1920 = vpop.f32.mrf.mxu0
      %v1921 = vadd.f32 %v1611, %v1920
      %v1922 = vpop.f32.mrf.mxu0
      %1923 = vmatprep.mubr.f32.mxu0 0.0
      %1924 = vmatmul.mubr.f32.gmra.mxu0 %v1702
      %v1925 = vpop.f32.mrf.mxu0
      %v1926 = vadd.f32 %v1611, %v1925
      %v1927 = vpop.f32.mrf.mxu0
      %1928 = vmatprep.mubr.f32.mxu0 0.0
      %1929 = vmatmul.mubr.f32.gmra.mxu0 %v1705
      %v1930 = vpop.f32.mrf.mxu0
      %v1931 = vadd.f32 %v1611, %v1930
      %v1932 = vpop.f32.mrf.mxu0
      %1933 = vmatprep.mubr.f32.mxu0 0.0
      %1934 = vmatmul.mubr.f32.gmra.mxu0 %v1708
      %v1935 = vpop.f32.mrf.mxu0
      %v1936 = vadd.f32 %v1611, %v1935
      %v1937 = vpop.f32.mrf.mxu0
      %1938 = vdwg.mxu0
      %1939 = vst.msk [vmem:[#allocation2] sm:$0xff] %vm1370, 0.0
      %1940 = vst.msk [vmem:[#allocation2 + $0x8] sm:$0xff] %vm1370, 0.0
      %vm1941 = vcmask 58368
      %1942 = vst.msk [vmem:[#allocation2 + $0x10] sm:$0x3] %vm1941, 0.0
      %s1943 = scalar_lea.vmem [#allocation2], 408
      %1944 = vst.msk [vmem:[%s1943] sm:$0xff] %vm1370, 0.0
      %1945 = vst.msk [vmem:[%s1943 + $0x8] sm:$0xff] %vm1370, 0.0
      %1946 = vst.msk [vmem:[%s1943 + $0x10] sm:$0x3] %vm1941, 0.0
      %vm1947 = vcmask 57344
      %1948 = vst.msk [vmem:[#allocation2] sm:$0x1] %vm1947, 0.0
      %1949 = vst.msk [vmem:[#allocation2 + $0x18] sm:$0x1] %vm1947, 0.0
      %1950 = vst.msk [vmem:[#allocation2 + $0x30] sm:$0x1] %vm1947, 0.0
      %1951 = vst.msk [vmem:[#allocation2 + $0x48] sm:$0x1] %vm1947, 0.0
      %1952 = vst.msk [vmem:[#allocation2 + $0x60] sm:$0x1] %vm1947, 0.0
      %1953 = vst.msk [vmem:[#allocation2 + $0x78] sm:$0x1] %vm1947, 0.0
      %1954 = vst.msk [vmem:[#allocation2 + $0x90] sm:$0x1] %vm1947, 0.0
      %1955 = vst.msk [vmem:[#allocation2 + $0xa8] sm:$0x1] %vm1947, 0.0
      %1956 = vst.msk [vmem:[#allocation2 + $0xc0] sm:$0x1] %vm1947, 0.0
      %1957 = vst.msk [vmem:[#allocation2 + $0xd8] sm:$0x1] %vm1947, 0.0
      %1958 = vst.msk [vmem:[#allocation2 + $0xf0] sm:$0x1] %vm1947, 0.0
      %1959 = vst.msk [vmem:[#allocation2 + $0x108] sm:$0x1] %vm1947, 0.0
      %1960 = vst.msk [vmem:[#allocation2 + $0x120] sm:$0x1] %vm1947, 0.0
      %1961 = vst.msk [vmem:[#allocation2 + $0x138] sm:$0x1] %vm1947, 0.0
      %1962 = vst.msk [vmem:[#allocation2 + $0x150] sm:$0x1] %vm1947, 0.0
      %1963 = vst.msk [vmem:[#allocation2 + $0x168] sm:$0x1] %vm1947, 0.0
      %1964 = vst.msk [vmem:[#allocation2 + $0x180] sm:$0x1] %vm1947, 0.0
      %1965 = vst.msk [vmem:[#allocation2 + $0x198] sm:$0x1] %vm1947, 0.0
      %1966 = vst.msk [vmem:[#allocation2 + $0x11] sm:$0x1] %vm1947, 0.0
      %1967 = vst.msk [vmem:[#allocation2 + $0x29] sm:$0x1] %vm1947, 0.0
      %1968 = vst.msk [vmem:[#allocation2 + $0x41] sm:$0x1] %vm1947, 0.0
      %1969 = vst.msk [vmem:[#allocation2 + $0x59] sm:$0x1] %vm1947, 0.0
      %1970 = vst.msk [vmem:[#allocation2 + $0x71] sm:$0x1] %vm1947, 0.0
      %1971 = vst.msk [vmem:[#allocation2 + $0x89] sm:$0x1] %vm1947, 0.0
      %1972 = vst.msk [vmem:[#allocation2 + $0xa1] sm:$0x1] %vm1947, 0.0
      %1973 = vst.msk [vmem:[#allocation2 + $0xb9] sm:$0x1] %vm1947, 0.0
      %1974 = vst.msk [vmem:[#allocation2 + $0xd1] sm:$0x1] %vm1947, 0.0
      %1975 = vst.msk [vmem:[#allocation2 + $0xe9] sm:$0x1] %vm1947, 0.0
      %1976 = vst.msk [vmem:[#allocation2 + $0x101] sm:$0x1] %vm1947, 0.0
      %1977 = vst.msk [vmem:[#allocation2 + $0x119] sm:$0x1] %vm1947, 0.0
      %1978 = vst.msk [vmem:[#allocation2 + $0x131] sm:$0x1] %vm1947, 0.0
      %1979 = vst.msk [vmem:[#allocation2 + $0x149] sm:$0x1] %vm1947, 0.0
      %1980 = vst.msk [vmem:[#allocation2 + $0x161] sm:$0x1] %vm1947, 0.0
      %1981 = vst.msk [vmem:[#allocation2 + $0x179] sm:$0x1] %vm1947, 0.0
      %1982 = vst.msk [vmem:[#allocation2 + $0x191] sm:$0x1] %vm1947, 0.0
      %1983 = vst.msk [vmem:[#allocation2 + $0x1a9] sm:$0x1] %vm1947, 0.0
      %s1984 = scalar_lea.vmem [#allocation2], 24
      %1985 = vst.msk [vmem:[%s1984 + $0x1] sm:$0xff] %vm1370, %v1781
      %1986 = vst.msk [vmem:[%s1984 + $0x9] sm:$0xff] %vm1370, %v1786
      %1987 = vst.msk [vmem:[%s1984 + $0x19] sm:$0xff] %vm1370, %v1791
      %1988 = vst.msk [vmem:[%s1984 + $0x21] sm:$0xff] %vm1370, %v1796
      %1989 = vst.msk [vmem:[%s1984 + $0x31] sm:$0xff] %vm1370, %v1801
      %1990 = vst.msk [vmem:[%s1984 + $0x39] sm:$0xff] %vm1370, %v1806
      %1991 = vst.msk [vmem:[%s1984 + $0x49] sm:$0xff] %vm1370, %v1811
      %1992 = vst.msk [vmem:[%s1984 + $0x51] sm:$0xff] %vm1370, %v1816
      %1993 = vst.msk [vmem:[%s1984 + $0x61] sm:$0xff] %vm1370, %v1821
      %1994 = vst.msk [vmem:[%s1984 + $0x69] sm:$0xff] %vm1370, %v1826
      %1995 = vst.msk [vmem:[%s1984 + $0x79] sm:$0xff] %vm1370, %v1831
      %1996 = vst.msk [vmem:[%s1984 + $0x81] sm:$0xff] %vm1370, %v1836
      %1997 = vst.msk [vmem:[%s1984 + $0x91] sm:$0xff] %vm1370, %v1841
      %1998 = vst.msk [vmem:[%s1984 + $0x99] sm:$0xff] %vm1370, %v1846
      %1999 = vst.msk [vmem:[%s1984 + $0xa9] sm:$0xff] %vm1370, %v1851
      %2000 = vst.msk [vmem:[%s1984 + $0xb1] sm:$0xff] %vm1370, %v1856
      %2001 = vst.msk [vmem:[%s1984 + $0xc1] sm:$0xff] %vm1370, %v1861
      %2002 = vst.msk [vmem:[%s1984 + $0xc9] sm:$0xff] %vm1370, %v1866
      %2003 = vst.msk [vmem:[%s1984 + $0xd9] sm:$0xff] %vm1370, %v1871
      %2004 = vst.msk [vmem:[%s1984 + $0xe1] sm:$0xff] %vm1370, %v1876
      %2005 = vst.msk [vmem:[%s1984 + $0xf1] sm:$0xff] %vm1370, %v1881
      %2006 = vst.msk [vmem:[%s1984 + $0xf9] sm:$0xff] %vm1370, %v1886
      %2007 = vst.msk [vmem:[%s1984 + $0x109] sm:$0xff] %vm1370, %v1891
      %2008 = vst.msk [vmem:[%s1984 + $0x111] sm:$0xff] %vm1370, %v1896
      %2009 = vst.msk [vmem:[%s1984 + $0x121] sm:$0xff] %vm1370, %v1901
      %2010 = vst.msk [vmem:[%s1984 + $0x129] sm:$0xff] %vm1370, %v1906
      %2011 = vst.msk [vmem:[%s1984 + $0x139] sm:$0xff] %vm1370, %v1911
      %2012 = vst.msk [vmem:[%s1984 + $0x141] sm:$0xff] %vm1370, %v1916
      %2013 = vst.msk [vmem:[%s1984 + $0x151] sm:$0xff] %vm1370, %v1921
      %2014 = vst.msk [vmem:[%s1984 + $0x159] sm:$0xff] %vm1370, %v1926
      %2015 = vst.msk [vmem:[%s1984 + $0x169] sm:$0xff] %vm1370, %v1931
      %2016 = vst.msk [vmem:[%s1984 + $0x171] sm:$0xff] %vm1370, %v1936
      %v2017 = vld [vmem:[#allocation2] sm:$0xff]
      %v2018 = vld [vmem:[#allocation2 + $0x8] sm:$0xff]
      %v2019 = vld [vmem:[#allocation2 + $0x18] sm:$0xff]
      %v2020 = vld [vmem:[#allocation2 + $0x20] sm:$0xff]
      %v2021 = vld [vmem:[#allocation2 + $0x30] sm:$0xff]
      %v2022 = vld [vmem:[#allocation2 + $0x38] sm:$0xff]
      %v2023 = vld [vmem:[#allocation2 + $0x48] sm:$0xff]
      %v2024 = vld [vmem:[#allocation2 + $0x50] sm:$0xff]
      %v2025 = vld [vmem:[#allocation2 + $0x60] sm:$0xff]
      %v2026 = vld [vmem:[#allocation2 + $0x68] sm:$0xff]
      %v2027 = vld [vmem:[#allocation2 + $0x78] sm:$0xff]
      %v2028 = vld [vmem:[#allocation2 + $0x80] sm:$0xff]
      %v2029 = vld [vmem:[#allocation2 + $0x90] sm:$0xff]
      %v2030 = vld [vmem:[#allocation2 + $0x98] sm:$0xff]
      %v2031 = vld [vmem:[#allocation2 + $0xa8] sm:$0xff]
      %v2032 = vld [vmem:[#allocation2 + $0xb0] sm:$0xff]
      %v2033 = vld [vmem:[#allocation2 + $0xc0] sm:$0xff]
      %v2034 = vld [vmem:[#allocation2 + $0xc8] sm:$0xff]
      %v2035 = vld [vmem:[#allocation2 + $0xd8] sm:$0xff]
      %v2036 = vld [vmem:[#allocation2 + $0xe0] sm:$0xff]
      %v2037 = vld [vmem:[#allocation2 + $0xf0] sm:$0xff]
      %v2038 = vld [vmem:[#allocation2 + $0xf8] sm:$0xff]
      %v2039 = vld [vmem:[#allocation2 + $0x108] sm:$0xff]
      %v2040 = vld [vmem:[#allocation2 + $0x110] sm:$0xff]
      %v2041 = vld [vmem:[#allocation2 + $0x120] sm:$0xff]
      %v2042 = vld [vmem:[#allocation2 + $0x128] sm:$0xff]
      %v2043 = vld [vmem:[#allocation2 + $0x138] sm:$0xff]
      %v2044 = vld [vmem:[#allocation2 + $0x140] sm:$0xff]
      %v2045 = vld [vmem:[#allocation2 + $0x150] sm:$0xff]
      %v2046 = vld [vmem:[#allocation2 + $0x158] sm:$0xff]
      %v2047 = vld [vmem:[#allocation2 + $0x168] sm:$0xff]
      %v2048 = vld [vmem:[#allocation2 + $0x170] sm:$0xff]
      %v2049 = vld [vmem:[#allocation2 + $0x1] sm:$0xff]
      %v2050 = vld [vmem:[#allocation2 + $0x9] sm:$0xff]
      %v2051 = vld [vmem:[#allocation2 + $0x19] sm:$0xff]
      %v2052 = vld [vmem:[#allocation2 + $0x21] sm:$0xff]
      %v2053 = vld [vmem:[#allocation2 + $0x31] sm:$0xff]
      %v2054 = vld [vmem:[#allocation2 + $0x39] sm:$0xff]
      %v2055 = vld [vmem:[#allocation2 + $0x49] sm:$0xff]
      %v2056 = vld [vmem:[#allocation2 + $0x51] sm:$0xff]
      %v2057 = vld [vmem:[#allocation2 + $0x61] sm:$0xff]
      %v2058 = vld [vmem:[#allocation2 + $0x69] sm:$0xff]
      %v2059 = vld [vmem:[#allocation2 + $0x79] sm:$0xff]
      %v2060 = vld [vmem:[#allocation2 + $0x81] sm:$0xff]
      %v2061 = vld [vmem:[#allocation2 + $0x91] sm:$0xff]
      %v2062 = vld [vmem:[#allocation2 + $0x99] sm:$0xff]
      %v2063 = vld [vmem:[#allocation2 + $0xa9] sm:$0xff]
      %v2064 = vld [vmem:[#allocation2 + $0xb1] sm:$0xff]
      %v2065 = vld [vmem:[#allocation2 + $0xc1] sm:$0xff]
      %v2066 = vld [vmem:[#allocation2 + $0xc9] sm:$0xff]
      %v2067 = vld [vmem:[#allocation2 + $0xd9] sm:$0xff]
      %v2068 = vld [vmem:[#allocation2 + $0xe1] sm:$0xff]
      %v2069 = vld [vmem:[#allocation2 + $0xf1] sm:$0xff]
      %v2070 = vld [vmem:[#allocation2 + $0xf9] sm:$0xff]
      %v2071 = vld [vmem:[#allocation2 + $0x109] sm:$0xff]
      %v2072 = vld [vmem:[#allocation2 + $0x111] sm:$0xff]
      %v2073 = vld [vmem:[#allocation2 + $0x121] sm:$0xff]
      %v2074 = vld [vmem:[#allocation2 + $0x129] sm:$0xff]
      %v2075 = vld [vmem:[#allocation2 + $0x139] sm:$0xff]
      %v2076 = vld [vmem:[#allocation2 + $0x141] sm:$0xff]
      %v2077 = vld [vmem:[#allocation2 + $0x151] sm:$0xff]
      %v2078 = vld [vmem:[#allocation2 + $0x159] sm:$0xff]
      %v2079 = vld [vmem:[#allocation2 + $0x169] sm:$0xff]
      %v2080 = vld [vmem:[#allocation2 + $0x171] sm:$0xff]
      %v2081 = vld [vmem:[#allocation2 + $0x2] sm:$0xff]
      %v2082 = vld [vmem:[#allocation2 + $0xa] sm:$0xff]
      %v2083 = vld [vmem:[#allocation2 + $0x1a] sm:$0xff]
      %v2084 = vld [vmem:[#allocation2 + $0x22] sm:$0xff]
      %v2085 = vld [vmem:[#allocation2 + $0x32] sm:$0xff]
      %v2086 = vld [vmem:[#allocation2 + $0x3a] sm:$0xff]
      %v2087 = vld [vmem:[#allocation2 + $0x4a] sm:$0xff]
      %v2088 = vld [vmem:[#allocation2 + $0x52] sm:$0xff]
      %v2089 = vld [vmem:[#allocation2 + $0x62] sm:$0xff]
      %v2090 = vld [vmem:[#allocation2 + $0x6a] sm:$0xff]
      %v2091 = vld [vmem:[#allocation2 + $0x7a] sm:$0xff]
      %v2092 = vld [vmem:[#allocation2 + $0x82] sm:$0xff]
      %v2093 = vld [vmem:[#allocation2 + $0x92] sm:$0xff]
      %v2094 = vld [vmem:[#allocation2 + $0x9a] sm:$0xff]
      %v2095 = vld [vmem:[#allocation2 + $0xaa] sm:$0xff]
      %v2096 = vld [vmem:[#allocation2 + $0xb2] sm:$0xff]
      %v2097 = vld [vmem:[#allocation2 + $0xc2] sm:$0xff]
      %v2098 = vld [vmem:[#allocation2 + $0xca] sm:$0xff]
      %v2099 = vld [vmem:[#allocation2 + $0xda] sm:$0xff]
      %v2100 = vld [vmem:[#allocation2 + $0xe2] sm:$0xff]
      %v2101 = vld [vmem:[#allocation2 + $0xf2] sm:$0xff]
      %v2102 = vld [vmem:[#allocation2 + $0xfa] sm:$0xff]
      %v2103 = vld [vmem:[#allocation2 + $0x10a] sm:$0xff]
      %v2104 = vld [vmem:[#allocation2 + $0x112] sm:$0xff]
      %v2105 = vld [vmem:[#allocation2 + $0x122] sm:$0xff]
      %v2106 = vld [vmem:[#allocation2 + $0x12a] sm:$0xff]
      %v2107 = vld [vmem:[#allocation2 + $0x13a] sm:$0xff]
      %v2108 = vld [vmem:[#allocation2 + $0x142] sm:$0xff]
      %v2109 = vld [vmem:[#allocation2 + $0x152] sm:$0xff]
      %v2110 = vld [vmem:[#allocation2 + $0x15a] sm:$0xff]
      %v2111 = vld [vmem:[#allocation2 + $0x16a] sm:$0xff]
      %v2112 = vld [vmem:[#allocation2 + $0x172] sm:$0xff]
      %v2113 = vld [vmem:[%s1984] sm:$0xff]
      %v2114 = vld [vmem:[%s1984 + $0x8] sm:$0xff]
      %v2115 = vld [vmem:[%s1984 + $0x18] sm:$0xff]
      %v2116 = vld [vmem:[%s1984 + $0x20] sm:$0xff]
      %v2117 = vld [vmem:[%s1984 + $0x30] sm:$0xff]
      %v2118 = vld [vmem:[%s1984 + $0x38] sm:$0xff]
      %v2119 = vld [vmem:[%s1984 + $0x48] sm:$0xff]
      %v2120 = vld [vmem:[%s1984 + $0x50] sm:$0xff]
      %v2121 = vld [vmem:[%s1984 + $0x60] sm:$0xff]
      %v2122 = vld [vmem:[%s1984 + $0x68] sm:$0xff]
      %v2123 = vld [vmem:[%s1984 + $0x78] sm:$0xff]
      %v2124 = vld [vmem:[%s1984 + $0x80] sm:$0xff]
      %v2125 = vld [vmem:[%s1984 + $0x90] sm:$0xff]
      %v2126 = vld [vmem:[%s1984 + $0x98] sm:$0xff]
      %v2127 = vld [vmem:[%s1984 + $0xa8] sm:$0xff]
      %v2128 = vld [vmem:[%s1984 + $0xb0] sm:$0xff]
      %v2129 = vld [vmem:[%s1984 + $0xc0] sm:$0xff]
      %v2130 = vld [vmem:[%s1984 + $0xc8] sm:$0xff]
      %v2131 = vld [vmem:[%s1984 + $0xd8] sm:$0xff]
      %v2132 = vld [vmem:[%s1984 + $0xe0] sm:$0xff]
      %v2133 = vld [vmem:[%s1984 + $0xf0] sm:$0xff]
      %v2134 = vld [vmem:[%s1984 + $0xf8] sm:$0xff]
      %v2135 = vld [vmem:[%s1984 + $0x108] sm:$0xff]
      %v2136 = vld [vmem:[%s1984 + $0x110] sm:$0xff]
      %v2137 = vld [vmem:[%s1984 + $0x120] sm:$0xff]
      %v2138 = vld [vmem:[%s1984 + $0x128] sm:$0xff]
      %v2139 = vld [vmem:[%s1984 + $0x138] sm:$0xff]
      %v2140 = vld [vmem:[%s1984 + $0x140] sm:$0xff]
      %v2141 = vld [vmem:[%s1984 + $0x150] sm:$0xff]
      %v2142 = vld [vmem:[%s1984 + $0x158] sm:$0xff]
      %v2143 = vld [vmem:[%s1984 + $0x168] sm:$0xff]
      %v2144 = vld [vmem:[%s1984 + $0x170] sm:$0xff]
      %v2145 = vld [vmem:[%s1984 + $0x1] sm:$0xff]
      %v2146 = vld [vmem:[%s1984 + $0x9] sm:$0xff]
      %v2147 = vld [vmem:[%s1984 + $0x19] sm:$0xff]
      %v2148 = vld [vmem:[%s1984 + $0x21] sm:$0xff]
      %v2149 = vld [vmem:[%s1984 + $0x31] sm:$0xff]
      %v2150 = vld [vmem:[%s1984 + $0x39] sm:$0xff]
      %v2151 = vld [vmem:[%s1984 + $0x49] sm:$0xff]
      %v2152 = vld [vmem:[%s1984 + $0x51] sm:$0xff]
      %v2153 = vld [vmem:[%s1984 + $0x61] sm:$0xff]
      %v2154 = vld [vmem:[%s1984 + $0x69] sm:$0xff]
      %v2155 = vld [vmem:[%s1984 + $0x79] sm:$0xff]
      %v2156 = vld [vmem:[%s1984 + $0x81] sm:$0xff]
      %v2157 = vld [vmem:[%s1984 + $0x91] sm:$0xff]
      %v2158 = vld [vmem:[%s1984 + $0x99] sm:$0xff]
      %v2159 = vld [vmem:[%s1984 + $0xa9] sm:$0xff]
      %v2160 = vld [vmem:[%s1984 + $0xb1] sm:$0xff]
      %v2161 = vld [vmem:[%s1984 + $0xc1] sm:$0xff]
      %v2162 = vld [vmem:[%s1984 + $0xc9] sm:$0xff]
      %v2163 = vld [vmem:[%s1984 + $0xd9] sm:$0xff]
      %v2164 = vld [vmem:[%s1984 + $0xe1] sm:$0xff]
      %v2165 = vld [vmem:[%s1984 + $0xf1] sm:$0xff]
      %v2166 = vld [vmem:[%s1984 + $0xf9] sm:$0xff]
      %v2167 = vld [vmem:[%s1984 + $0x109] sm:$0xff]
      %v2168 = vld [vmem:[%s1984 + $0x111] sm:$0xff]
      %v2169 = vld [vmem:[%s1984 + $0x121] sm:$0xff]
      %v2170 = vld [vmem:[%s1984 + $0x129] sm:$0xff]
      %v2171 = vld [vmem:[%s1984 + $0x139] sm:$0xff]
      %v2172 = vld [vmem:[%s1984 + $0x141] sm:$0xff]
      %v2173 = vld [vmem:[%s1984 + $0x151] sm:$0xff]
      %v2174 = vld [vmem:[%s1984 + $0x159] sm:$0xff]
      %v2175 = vld [vmem:[%s1984 + $0x169] sm:$0xff]
      %v2176 = vld [vmem:[%s1984 + $0x171] sm:$0xff]
      %v2177 = vld [vmem:[%s1984 + $0x2] sm:$0xff]
      %v2178 = vld [vmem:[%s1984 + $0xa] sm:$0xff]
      %v2179 = vld [vmem:[%s1984 + $0x1a] sm:$0xff]
      %v2180 = vld [vmem:[%s1984 + $0x22] sm:$0xff]
      %v2181 = vld [vmem:[%s1984 + $0x32] sm:$0xff]
      %v2182 = vld [vmem:[%s1984 + $0x3a] sm:$0xff]
      %v2183 = vld [vmem:[%s1984 + $0x4a] sm:$0xff]
      %v2184 = vld [vmem:[%s1984 + $0x52] sm:$0xff]
      %v2185 = vld [vmem:[%s1984 + $0x62] sm:$0xff]
      %v2186 = vld [vmem:[%s1984 + $0x6a] sm:$0xff]
      %v2187 = vld [vmem:[%s1984 + $0x7a] sm:$0xff]
      %v2188 = vld [vmem:[%s1984 + $0x82] sm:$0xff]
      %v2189 = vld [vmem:[%s1984 + $0x92] sm:$0xff]
      %v2190 = vld [vmem:[%s1984 + $0x9a] sm:$0xff]
      %v2191 = vld [vmem:[%s1984 + $0xaa] sm:$0xff]
      %v2192 = vld [vmem:[%s1984 + $0xb2] sm:$0xff]
      %v2193 = vld [vmem:[%s1984 + $0xc2] sm:$0xff]
      %v2194 = vld [vmem:[%s1984 + $0xca] sm:$0xff]
      %v2195 = vld [vmem:[%s1984 + $0xda] sm:$0xff]
      %v2196 = vld [vmem:[%s1984 + $0xe2] sm:$0xff]
      %v2197 = vld [vmem:[%s1984 + $0xf2] sm:$0xff]
      %v2198 = vld [vmem:[%s1984 + $0xfa] sm:$0xff]
      %v2199 = vld [vmem:[%s1984 + $0x10a] sm:$0xff]
      %v2200 = vld [vmem:[%s1984 + $0x112] sm:$0xff]
      %v2201 = vld [vmem:[%s1984 + $0x122] sm:$0xff]
      %v2202 = vld [vmem:[%s1984 + $0x12a] sm:$0xff]
      %v2203 = vld [vmem:[%s1984 + $0x13a] sm:$0xff]
      %v2204 = vld [vmem:[%s1984 + $0x142] sm:$0xff]
      %v2205 = vld [vmem:[%s1984 + $0x152] sm:$0xff]
      %v2206 = vld [vmem:[%s1984 + $0x15a] sm:$0xff]
      %v2207 = vld [vmem:[%s1984 + $0x16a] sm:$0xff]
      %v2208 = vld [vmem:[%s1984 + $0x172] sm:$0xff]
      %s2209 = scalar_lea.vmem [#allocation2], 48
      %v2210 = vld [vmem:[%s2209] sm:$0xff]
      %v2211 = vld [vmem:[%s2209 + $0x8] sm:$0xff]
      %v2212 = vld [vmem:[%s2209 + $0x18] sm:$0xff]
      %v2213 = vld [vmem:[%s2209 + $0x20] sm:$0xff]
      %v2214 = vld [vmem:[%s2209 + $0x30] sm:$0xff]
      %v2215 = vld [vmem:[%s2209 + $0x38] sm:$0xff]
      %v2216 = vld [vmem:[%s2209 + $0x48] sm:$0xff]
      %v2217 = vld [vmem:[%s2209 + $0x50] sm:$0xff]
      %v2218 = vld [vmem:[%s2209 + $0x60] sm:$0xff]
      %v2219 = vld [vmem:[%s2209 + $0x68] sm:$0xff]
      %v2220 = vld [vmem:[%s2209 + $0x78] sm:$0xff]
      %v2221 = vld [vmem:[%s2209 + $0x80] sm:$0xff]
      %v2222 = vld [vmem:[%s2209 + $0x90] sm:$0xff]
      %v2223 = vld [vmem:[%s2209 + $0x98] sm:$0xff]
      %v2224 = vld [vmem:[%s2209 + $0xa8] sm:$0xff]
      %v2225 = vld [vmem:[%s2209 + $0xb0] sm:$0xff]
      %v2226 = vld [vmem:[%s2209 + $0xc0] sm:$0xff]
      %v2227 = vld [vmem:[%s2209 + $0xc8] sm:$0xff]
      %v2228 = vld [vmem:[%s2209 + $0xd8] sm:$0xff]
      %v2229 = vld [vmem:[%s2209 + $0xe0] sm:$0xff]
      %v2230 = vld [vmem:[%s2209 + $0xf0] sm:$0xff]
      %v2231 = vld [vmem:[%s2209 + $0xf8] sm:$0xff]
      %v2232 = vld [vmem:[%s2209 + $0x108] sm:$0xff]
      %v2233 = vld [vmem:[%s2209 + $0x110] sm:$0xff]
      %v2234 = vld [vmem:[%s2209 + $0x120] sm:$0xff]
      %v2235 = vld [vmem:[%s2209 + $0x128] sm:$0xff]
      %v2236 = vld [vmem:[%s2209 + $0x138] sm:$0xff]
      %v2237 = vld [vmem:[%s2209 + $0x140] sm:$0xff]
      %v2238 = vld [vmem:[%s2209 + $0x150] sm:$0xff]
      %v2239 = vld [vmem:[%s2209 + $0x158] sm:$0xff]
      %v2240 = vld [vmem:[%s2209 + $0x168] sm:$0xff]
      %v2241 = vld [vmem:[%s2209 + $0x170] sm:$0xff]
      %v2242 = vld [vmem:[%s2209 + $0x1] sm:$0xff]
      %v2243 = vld [vmem:[%s2209 + $0x9] sm:$0xff]
      %v2244 = vld [vmem:[%s2209 + $0x19] sm:$0xff]
      %v2245 = vld [vmem:[%s2209 + $0x21] sm:$0xff]
      %v2246 = vld [vmem:[%s2209 + $0x31] sm:$0xff]
      %v2247 = vld [vmem:[%s2209 + $0x39] sm:$0xff]
      %v2248 = vld [vmem:[%s2209 + $0x49] sm:$0xff]
      %v2249 = vld [vmem:[%s2209 + $0x51] sm:$0xff]
      %v2250 = vld [vmem:[%s2209 + $0x61] sm:$0xff]
      %v2251 = vld [vmem:[%s2209 + $0x69] sm:$0xff]
      %v2252 = vld [vmem:[%s2209 + $0x79] sm:$0xff]
      %v2253 = vld [vmem:[%s2209 + $0x81] sm:$0xff]
      %v2254 = vld [vmem:[%s2209 + $0x91] sm:$0xff]
      %v2255 = vld [vmem:[%s2209 + $0x99] sm:$0xff]
      %v2256 = vld [vmem:[%s2209 + $0xa9] sm:$0xff]
      %v2257 = vld [vmem:[%s2209 + $0xb1] sm:$0xff]
      %v2258 = vld [vmem:[%s2209 + $0xc1] sm:$0xff]
      %v2259 = vld [vmem:[%s2209 + $0xc9] sm:$0xff]
      %v2260 = vld [vmem:[%s2209 + $0xd9] sm:$0xff]
      %v2261 = vld [vmem:[%s2209 + $0xe1] sm:$0xff]
      %v2262 = vld [vmem:[%s2209 + $0xf1] sm:$0xff]
      %v2263 = vld [vmem:[%s2209 + $0xf9] sm:$0xff]
      %v2264 = vld [vmem:[%s2209 + $0x109] sm:$0xff]
      %v2265 = vld [vmem:[%s2209 + $0x111] sm:$0xff]
      %v2266 = vld [vmem:[%s2209 + $0x121] sm:$0xff]
      %v2267 = vld [vmem:[%s2209 + $0x129] sm:$0xff]
      %v2268 = vld [vmem:[%s2209 + $0x139] sm:$0xff]
      %v2269 = vld [vmem:[%s2209 + $0x141] sm:$0xff]
      %v2270 = vld [vmem:[%s2209 + $0x151] sm:$0xff]
      %v2271 = vld [vmem:[%s2209 + $0x159] sm:$0xff]
      %v2272 = vld [vmem:[%s2209 + $0x169] sm:$0xff]
      %v2273 = vld [vmem:[%s2209 + $0x171] sm:$0xff]
      %v2274 = vld [vmem:[%s2209 + $0x2] sm:$0xff]
      %v2275 = vld [vmem:[%s2209 + $0xa] sm:$0xff]
      %v2276 = vld [vmem:[%s2209 + $0x1a] sm:$0xff]
      %v2277 = vld [vmem:[%s2209 + $0x22] sm:$0xff]
      %v2278 = vld [vmem:[%s2209 + $0x32] sm:$0xff]
      %v2279 = vld [vmem:[%s2209 + $0x3a] sm:$0xff]
      %v2280 = vld [vmem:[%s2209 + $0x4a] sm:$0xff]
      %v2281 = vld [vmem:[%s2209 + $0x52] sm:$0xff]
      %v2282 = vld [vmem:[%s2209 + $0x62] sm:$0xff]
      %v2283 = vld [vmem:[%s2209 + $0x6a] sm:$0xff]
      %v2284 = vld [vmem:[%s2209 + $0x7a] sm:$0xff]
      %v2285 = vld [vmem:[%s2209 + $0x82] sm:$0xff]
      %v2286 = vld [vmem:[%s2209 + $0x92] sm:$0xff]
      %v2287 = vld [vmem:[%s2209 + $0x9a] sm:$0xff]
      %v2288 = vld [vmem:[%s2209 + $0xaa] sm:$0xff]
      %v2289 = vld [vmem:[%s2209 + $0xb2] sm:$0xff]
      %v2290 = vld [vmem:[%s2209 + $0xc2] sm:$0xff]
      %v2291 = vld [vmem:[%s2209 + $0xca] sm:$0xff]
      %v2292 = vld [vmem:[%s2209 + $0xda] sm:$0xff]
      %v2293 = vld [vmem:[%s2209 + $0xe2] sm:$0xff]
      %v2294 = vld [vmem:[%s2209 + $0xf2] sm:$0xff]
      %v2295 = vld [vmem:[%s2209 + $0xfa] sm:$0xff]
      %v2296 = vld [vmem:[%s2209 + $0x10a] sm:$0xff]
      %v2297 = vld [vmem:[%s2209 + $0x112] sm:$0xff]
      %v2298 = vld [vmem:[%s2209 + $0x122] sm:$0xff]
      %v2299 = vld [vmem:[%s2209 + $0x12a] sm:$0xff]
      %v2300 = vld [vmem:[%s2209 + $0x13a] sm:$0xff]
      %v2301 = vld [vmem:[%s2209 + $0x142] sm:$0xff]
      %v2302 = vld [vmem:[%s2209 + $0x152] sm:$0xff]
      %v2303 = vld [vmem:[%s2209 + $0x15a] sm:$0xff]
      %v2304 = vld [vmem:[%s2209 + $0x16a] sm:$0xff]
      %v2305 = vld [vmem:[%s2209 + $0x172] sm:$0xff]
      %2338 = vrot.lane.b32.xlu0 %v2049, 8
      %v2339 = vpop.permute.xlu0 %2338
      %2340 = vrot.lane.b32.xlu0 %v2050, 8
      %v2341 = vpop.permute.xlu0 %2340
      %2342 = vrot.lane.b32.xlu0 %v2051, 8
      %v2343 = vpop.permute.xlu0 %2342
      %2344 = vrot.lane.b32.xlu0 %v2052, 8
      %v2345 = vpop.permute.xlu0 %2344
      %2346 = vrot.lane.b32.xlu0 %v2053, 8
      %v2347 = vpop.permute.xlu0 %2346
      %2348 = vrot.lane.b32.xlu0 %v2054, 8
      %v2349 = vpop.permute.xlu0 %2348
      %2350 = vrot.lane.b32.xlu0 %v2055, 8
      %v2351 = vpop.permute.xlu0 %2350
      %2352 = vrot.lane.b32.xlu0 %v2056, 8
      %v2353 = vpop.permute.xlu0 %2352
      %2354 = vrot.lane.b32.xlu0 %v2057, 8
      %v2355 = vpop.permute.xlu0 %2354
      %2356 = vrot.lane.b32.xlu0 %v2058, 8
      %v2357 = vpop.permute.xlu0 %2356
      %2358 = vrot.lane.b32.xlu0 %v2059, 8
      %v2359 = vpop.permute.xlu0 %2358
      %2360 = vrot.lane.b32.xlu0 %v2060, 8
      %v2361 = vpop.permute.xlu0 %2360
      %2362 = vrot.lane.b32.xlu0 %v2061, 8
      %v2363 = vpop.permute.xlu0 %2362
      %2364 = vrot.lane.b32.xlu0 %v2062, 8
      %v2365 = vpop.permute.xlu0 %2364
      %2366 = vrot.lane.b32.xlu0 %v2063, 8
      %v2367 = vpop.permute.xlu0 %2366
      %2368 = vrot.lane.b32.xlu0 %v2064, 8
      %v2369 = vpop.permute.xlu0 %2368
      %2370 = vrot.lane.b32.xlu0 %v2065, 8
      %v2371 = vpop.permute.xlu0 %2370
      %2372 = vrot.lane.b32.xlu0 %v2066, 8
      %v2373 = vpop.permute.xlu0 %2372
      %2374 = vrot.lane.b32.xlu0 %v2067, 8
      %v2375 = vpop.permute.xlu0 %2374
      %2376 = vrot.lane.b32.xlu0 %v2068, 8
      %v2377 = vpop.permute.xlu0 %2376
      %2378 = vrot.lane.b32.xlu0 %v2069, 8
      %v2379 = vpop.permute.xlu0 %2378
      %2380 = vrot.lane.b32.xlu0 %v2070, 8
      %v2381 = vpop.permute.xlu0 %2380
      %2382 = vrot.lane.b32.xlu0 %v2071, 8
      %v2383 = vpop.permute.xlu0 %2382
      %2384 = vrot.lane.b32.xlu0 %v2072, 8
      %v2385 = vpop.permute.xlu0 %2384
      %2386 = vrot.lane.b32.xlu0 %v2073, 8
      %v2387 = vpop.permute.xlu0 %2386
      %2388 = vrot.lane.b32.xlu0 %v2074, 8
      %v2389 = vpop.permute.xlu0 %2388
      %2390 = vrot.lane.b32.xlu0 %v2075, 8
      %v2391 = vpop.permute.xlu0 %2390
      %2392 = vrot.lane.b32.xlu0 %v2076, 8
      %v2393 = vpop.permute.xlu0 %2392
      %2394 = vrot.lane.b32.xlu0 %v2077, 8
      %v2395 = vpop.permute.xlu0 %2394
      %2396 = vrot.lane.b32.xlu0 %v2078, 8
      %v2397 = vpop.permute.xlu0 %2396
      %2398 = vrot.lane.b32.xlu0 %v2079, 8
      %v2399 = vpop.permute.xlu0 %2398
      %2400 = vrot.lane.b32.xlu0 %v2080, 8
      %v2401 = vpop.permute.xlu0 %2400
      %2466 = vrot.lane.b32.xlu0 %v2081, 16
      %v2467 = vpop.permute.xlu0 %2466
      %2468 = vrot.lane.b32.xlu0 %v2082, 16
      %v2469 = vpop.permute.xlu0 %2468
      %2470 = vrot.lane.b32.xlu0 %v2083, 16
      %v2471 = vpop.permute.xlu0 %2470
      %2472 = vrot.lane.b32.xlu0 %v2084, 16
      %v2473 = vpop.permute.xlu0 %2472
      %2474 = vrot.lane.b32.xlu0 %v2085, 16
      %v2475 = vpop.permute.xlu0 %2474
      %2476 = vrot.lane.b32.xlu0 %v2086, 16
      %v2477 = vpop.permute.xlu0 %2476
      %2478 = vrot.lane.b32.xlu0 %v2087, 16
      %v2479 = vpop.permute.xlu0 %2478
      %2480 = vrot.lane.b32.xlu0 %v2088, 16
      %v2481 = vpop.permute.xlu0 %2480
      %2482 = vrot.lane.b32.xlu0 %v2089, 16
      %v2483 = vpop.permute.xlu0 %2482
      %2484 = vrot.lane.b32.xlu0 %v2090, 16
      %v2485 = vpop.permute.xlu0 %2484
      %2486 = vrot.lane.b32.xlu0 %v2091, 16
      %v2487 = vpop.permute.xlu0 %2486
      %2488 = vrot.lane.b32.xlu0 %v2092, 16
      %v2489 = vpop.permute.xlu0 %2488
      %2490 = vrot.lane.b32.xlu0 %v2093, 16
      %v2491 = vpop.permute.xlu0 %2490
      %2492 = vrot.lane.b32.xlu0 %v2094, 16
      %v2493 = vpop.permute.xlu0 %2492
      %2494 = vrot.lane.b32.xlu0 %v2095, 16
      %v2495 = vpop.permute.xlu0 %2494
      %2496 = vrot.lane.b32.xlu0 %v2096, 16
      %v2497 = vpop.permute.xlu0 %2496
      %2498 = vrot.lane.b32.xlu0 %v2097, 16
      %v2499 = vpop.permute.xlu0 %2498
      %2500 = vrot.lane.b32.xlu0 %v2098, 16
      %v2501 = vpop.permute.xlu0 %2500
      %2502 = vrot.lane.b32.xlu0 %v2099, 16
      %v2503 = vpop.permute.xlu0 %2502
      %2504 = vrot.lane.b32.xlu0 %v2100, 16
      %v2505 = vpop.permute.xlu0 %2504
      %2506 = vrot.lane.b32.xlu0 %v2101, 16
      %v2507 = vpop.permute.xlu0 %2506
      %2508 = vrot.lane.b32.xlu0 %v2102, 16
      %v2509 = vpop.permute.xlu0 %2508
      %2510 = vrot.lane.b32.xlu0 %v2103, 16
      %v2511 = vpop.permute.xlu0 %2510
      %2512 = vrot.lane.b32.xlu0 %v2104, 16
      %v2513 = vpop.permute.xlu0 %2512
      %2514 = vrot.lane.b32.xlu0 %v2105, 16
      %v2515 = vpop.permute.xlu0 %2514
      %2516 = vrot.lane.b32.xlu0 %v2106, 16
      %v2517 = vpop.permute.xlu0 %2516
      %2518 = vrot.lane.b32.xlu0 %v2107, 16
      %v2519 = vpop.permute.xlu0 %2518
      %2520 = vrot.lane.b32.xlu0 %v2108, 16
      %v2521 = vpop.permute.xlu0 %2520
      %2522 = vrot.lane.b32.xlu0 %v2109, 16
      %v2523 = vpop.permute.xlu0 %2522
      %2524 = vrot.lane.b32.xlu0 %v2110, 16
      %v2525 = vpop.permute.xlu0 %2524
      %2526 = vrot.lane.b32.xlu0 %v2111, 16
      %v2527 = vpop.permute.xlu0 %2526
      %2528 = vrot.lane.b32.xlu0 %v2112, 16
      %v2529 = vpop.permute.xlu0 %2528
      %2594 = vrot.lane.b32.xlu0 %v2113, 24
      %v2595 = vpop.permute.xlu0 %2594
      %2596 = vrot.lane.b32.xlu0 %v2114, 24
      %v2597 = vpop.permute.xlu0 %2596
      %2598 = vrot.lane.b32.xlu0 %v2115, 24
      %v2599 = vpop.permute.xlu0 %2598
      %2600 = vrot.lane.b32.xlu0 %v2116, 24
      %v2601 = vpop.permute.xlu0 %2600
      %2602 = vrot.lane.b32.xlu0 %v2117, 24
      %v2603 = vpop.permute.xlu0 %2602
      %2604 = vrot.lane.b32.xlu0 %v2118, 24
      %v2605 = vpop.permute.xlu0 %2604
      %2606 = vrot.lane.b32.xlu0 %v2119, 24
      %v2607 = vpop.permute.xlu0 %2606
      %2608 = vrot.lane.b32.xlu0 %v2120, 24
      %v2609 = vpop.permute.xlu0 %2608
      %2610 = vrot.lane.b32.xlu0 %v2121, 24
      %v2611 = vpop.permute.xlu0 %2610
      %2612 = vrot.lane.b32.xlu0 %v2122, 24
      %v2613 = vpop.permute.xlu0 %2612
      %2614 = vrot.lane.b32.xlu0 %v2123, 24
      %v2615 = vpop.permute.xlu0 %2614
      %2616 = vrot.lane.b32.xlu0 %v2124, 24
      %v2617 = vpop.permute.xlu0 %2616
      %2618 = vrot.lane.b32.xlu0 %v2125, 24
      %v2619 = vpop.permute.xlu0 %2618
      %2620 = vrot.lane.b32.xlu0 %v2126, 24
      %v2621 = vpop.permute.xlu0 %2620
      %2622 = vrot.lane.b32.xlu0 %v2127, 24
      %v2623 = vpop.permute.xlu0 %2622
      %2624 = vrot.lane.b32.xlu0 %v2128, 24
      %v2625 = vpop.permute.xlu0 %2624
      %2626 = vrot.lane.b32.xlu0 %v2129, 24
      %v2627 = vpop.permute.xlu0 %2626
      %2628 = vrot.lane.b32.xlu0 %v2130, 24
      %v2629 = vpop.permute.xlu0 %2628
      %2630 = vrot.lane.b32.xlu0 %v2131, 24
      %v2631 = vpop.permute.xlu0 %2630
      %2632 = vrot.lane.b32.xlu0 %v2132, 24
      %v2633 = vpop.permute.xlu0 %2632
      %2634 = vrot.lane.b32.xlu0 %v2133, 24
      %v2635 = vpop.permute.xlu0 %2634
      %2636 = vrot.lane.b32.xlu0 %v2134, 24
      %v2637 = vpop.permute.xlu0 %2636
      %2638 = vrot.lane.b32.xlu0 %v2135, 24
      %v2639 = vpop.permute.xlu0 %2638
      %2640 = vrot.lane.b32.xlu0 %v2136, 24
      %v2641 = vpop.permute.xlu0 %2640
      %2642 = vrot.lane.b32.xlu0 %v2137, 24
      %v2643 = vpop.permute.xlu0 %2642
      %2644 = vrot.lane.b32.xlu0 %v2138, 24
      %v2645 = vpop.permute.xlu0 %2644
      %2646 = vrot.lane.b32.xlu0 %v2139, 24
      %v2647 = vpop.permute.xlu0 %2646
      %2648 = vrot.lane.b32.xlu0 %v2140, 24
      %v2649 = vpop.permute.xlu0 %2648
      %2650 = vrot.lane.b32.xlu0 %v2141, 24
      %v2651 = vpop.permute.xlu0 %2650
      %2652 = vrot.lane.b32.xlu0 %v2142, 24
      %v2653 = vpop.permute.xlu0 %2652
      %2654 = vrot.lane.b32.xlu0 %v2143, 24
      %v2655 = vpop.permute.xlu0 %2654
      %2656 = vrot.lane.b32.xlu0 %v2144, 24
      %v2657 = vpop.permute.xlu0 %2656
      %2722 = vrot.lane.b32.xlu0 %v2145, 32
      %v2723 = vpop.permute.xlu0 %2722
      %2724 = vrot.lane.b32.xlu0 %v2146, 32
      %v2725 = vpop.permute.xlu0 %2724
      %2726 = vrot.lane.b32.xlu0 %v2147, 32
      %v2727 = vpop.permute.xlu0 %2726
      %2728 = vrot.lane.b32.xlu0 %v2148, 32
      %v2729 = vpop.permute.xlu0 %2728
      %2730 = vrot.lane.b32.xlu0 %v2149, 32
      %v2731 = vpop.permute.xlu0 %2730
      %2732 = vrot.lane.b32.xlu0 %v2150, 32
      %v2733 = vpop.permute.xlu0 %2732
      %2734 = vrot.lane.b32.xlu0 %v2151, 32
      %v2735 = vpop.permute.xlu0 %2734
      %2736 = vrot.lane.b32.xlu0 %v2152, 32
      %v2737 = vpop.permute.xlu0 %2736
      %2738 = vrot.lane.b32.xlu0 %v2153, 32
      %v2739 = vpop.permute.xlu0 %2738
      %2740 = vrot.lane.b32.xlu0 %v2154, 32
      %v2741 = vpop.permute.xlu0 %2740
      %2742 = vrot.lane.b32.xlu0 %v2155, 32
      %v2743 = vpop.permute.xlu0 %2742
      %2744 = vrot.lane.b32.xlu0 %v2156, 32
      %v2745 = vpop.permute.xlu0 %2744
      %2746 = vrot.lane.b32.xlu0 %v2157, 32
      %v2747 = vpop.permute.xlu0 %2746
      %2748 = vrot.lane.b32.xlu0 %v2158, 32
      %v2749 = vpop.permute.xlu0 %2748
      %2750 = vrot.lane.b32.xlu0 %v2159, 32
      %v2751 = vpop.permute.xlu0 %2750
      %2752 = vrot.lane.b32.xlu0 %v2160, 32
      %v2753 = vpop.permute.xlu0 %2752
      %2754 = vrot.lane.b32.xlu0 %v2161, 32
      %v2755 = vpop.permute.xlu0 %2754
      %2756 = vrot.lane.b32.xlu0 %v2162, 32
      %v2757 = vpop.permute.xlu0 %2756
      %2758 = vrot.lane.b32.xlu0 %v2163, 32
      %v2759 = vpop.permute.xlu0 %2758
      %2760 = vrot.lane.b32.xlu0 %v2164, 32
      %v2761 = vpop.permute.xlu0 %2760
      %2762 = vrot.lane.b32.xlu0 %v2165, 32
      %v2763 = vpop.permute.xlu0 %2762
      %2764 = vrot.lane.b32.xlu0 %v2166, 32
      %v2765 = vpop.permute.xlu0 %2764
      %2766 = vrot.lane.b32.xlu0 %v2167, 32
      %v2767 = vpop.permute.xlu0 %2766
      %2768 = vrot.lane.b32.xlu0 %v2168, 32
      %v2769 = vpop.permute.xlu0 %2768
      %2770 = vrot.lane.b32.xlu0 %v2169, 32
      %v2771 = vpop.permute.xlu0 %2770
      %2772 = vrot.lane.b32.xlu0 %v2170, 32
      %v2773 = vpop.permute.xlu0 %2772
      %2774 = vrot.lane.b32.xlu0 %v2171, 32
      %v2775 = vpop.permute.xlu0 %2774
      %2776 = vrot.lane.b32.xlu0 %v2172, 32
      %v2777 = vpop.permute.xlu0 %2776
      %2778 = vrot.lane.b32.xlu0 %v2173, 32
      %v2779 = vpop.permute.xlu0 %2778
      %2780 = vrot.lane.b32.xlu0 %v2174, 32
      %v2781 = vpop.permute.xlu0 %2780
      %2782 = vrot.lane.b32.xlu0 %v2175, 32
      %v2783 = vpop.permute.xlu0 %2782
      %2784 = vrot.lane.b32.xlu0 %v2176, 32
      %v2785 = vpop.permute.xlu0 %2784
      %2850 = vrot.lane.b32.xlu0 %v2177, 40
      %v2851 = vpop.permute.xlu0 %2850
      %2852 = vrot.lane.b32.xlu0 %v2178, 40
      %v2853 = vpop.permute.xlu0 %2852
      %2854 = vrot.lane.b32.xlu0 %v2179, 40
      %v2855 = vpop.permute.xlu0 %2854
      %2856 = vrot.lane.b32.xlu0 %v2180, 40
      %v2857 = vpop.permute.xlu0 %2856
      %2858 = vrot.lane.b32.xlu0 %v2181, 40
      %v2859 = vpop.permute.xlu0 %2858
      %2860 = vrot.lane.b32.xlu0 %v2182, 40
      %v2861 = vpop.permute.xlu0 %2860
      %2862 = vrot.lane.b32.xlu0 %v2183, 40
      %v2863 = vpop.permute.xlu0 %2862
      %2864 = vrot.lane.b32.xlu0 %v2184, 40
      %v2865 = vpop.permute.xlu0 %2864
      %2866 = vrot.lane.b32.xlu0 %v2185, 40
      %v2867 = vpop.permute.xlu0 %2866
      %2868 = vrot.lane.b32.xlu0 %v2186, 40
      %v2869 = vpop.permute.xlu0 %2868
      %2870 = vrot.lane.b32.xlu0 %v2187, 40
      %v2871 = vpop.permute.xlu0 %2870
      %2872 = vrot.lane.b32.xlu0 %v2188, 40
      %v2873 = vpop.permute.xlu0 %2872
      %2874 = vrot.lane.b32.xlu0 %v2189, 40
      %v2875 = vpop.permute.xlu0 %2874
      %2876 = vrot.lane.b32.xlu0 %v2190, 40
      %v2877 = vpop.permute.xlu0 %2876
      %2878 = vrot.lane.b32.xlu0 %v2191, 40
      %v2879 = vpop.permute.xlu0 %2878
      %2880 = vrot.lane.b32.xlu0 %v2192, 40
      %v2881 = vpop.permute.xlu0 %2880
      %2882 = vrot.lane.b32.xlu0 %v2193, 40
      %v2883 = vpop.permute.xlu0 %2882
      %2884 = vrot.lane.b32.xlu0 %v2194, 40
      %v2885 = vpop.permute.xlu0 %2884
      %2886 = vrot.lane.b32.xlu0 %v2195, 40
      %v2887 = vpop.permute.xlu0 %2886
      %2888 = vrot.lane.b32.xlu0 %v2196, 40
      %v2889 = vpop.permute.xlu0 %2888
      %2890 = vrot.lane.b32.xlu0 %v2197, 40
      %v2891 = vpop.permute.xlu0 %2890
      %2892 = vrot.lane.b32.xlu0 %v2198, 40
      %v2893 = vpop.permute.xlu0 %2892
      %2894 = vrot.lane.b32.xlu0 %v2199, 40
      %v2895 = vpop.permute.xlu0 %2894
      %2896 = vrot.lane.b32.xlu0 %v2200, 40
      %v2897 = vpop.permute.xlu0 %2896
      %2898 = vrot.lane.b32.xlu0 %v2201, 40
      %v2899 = vpop.permute.xlu0 %2898
      %2900 = vrot.lane.b32.xlu0 %v2202, 40
      %v2901 = vpop.permute.xlu0 %2900
      %2902 = vrot.lane.b32.xlu0 %v2203, 40
      %v2903 = vpop.permute.xlu0 %2902
      %2904 = vrot.lane.b32.xlu0 %v2204, 40
      %v2905 = vpop.permute.xlu0 %2904
      %2906 = vrot.lane.b32.xlu0 %v2205, 40
      %v2907 = vpop.permute.xlu0 %2906
      %2908 = vrot.lane.b32.xlu0 %v2206, 40
      %v2909 = vpop.permute.xlu0 %2908
      %2910 = vrot.lane.b32.xlu0 %v2207, 40
      %v2911 = vpop.permute.xlu0 %2910
      %2912 = vrot.lane.b32.xlu0 %v2208, 40
      %v2913 = vpop.permute.xlu0 %2912
      %2978 = vrot.lane.b32.xlu0 %v2210, 48
      %v2979 = vpop.permute.xlu0 %2978
      %2980 = vrot.lane.b32.xlu0 %v2211, 48
      %v2981 = vpop.permute.xlu0 %2980
      %2982 = vrot.lane.b32.xlu0 %v2212, 48
      %v2983 = vpop.permute.xlu0 %2982
      %2984 = vrot.lane.b32.xlu0 %v2213, 48
      %v2985 = vpop.permute.xlu0 %2984
      %2986 = vrot.lane.b32.xlu0 %v2214, 48
      %v2987 = vpop.permute.xlu0 %2986
      %2988 = vrot.lane.b32.xlu0 %v2215, 48
      %v2989 = vpop.permute.xlu0 %2988
      %2990 = vrot.lane.b32.xlu0 %v2216, 48
      %v2991 = vpop.permute.xlu0 %2990
      %2992 = vrot.lane.b32.xlu0 %v2217, 48
      %v2993 = vpop.permute.xlu0 %2992
      %2994 = vrot.lane.b32.xlu0 %v2218, 48
      %v2995 = vpop.permute.xlu0 %2994
      %2996 = vrot.lane.b32.xlu0 %v2219, 48
      %v2997 = vpop.permute.xlu0 %2996
      %2998 = vrot.lane.b32.xlu0 %v2220, 48
      %v2999 = vpop.permute.xlu0 %2998
      %3000 = vrot.lane.b32.xlu0 %v2221, 48
      %v3001 = vpop.permute.xlu0 %3000
      %3002 = vrot.lane.b32.xlu0 %v2222, 48
      %v3003 = vpop.permute.xlu0 %3002
      %3004 = vrot.lane.b32.xlu0 %v2223, 48
      %v3005 = vpop.permute.xlu0 %3004
      %3006 = vrot.lane.b32.xlu0 %v2224, 48
      %v3007 = vpop.permute.xlu0 %3006
      %3008 = vrot.lane.b32.xlu0 %v2225, 48
      %v3009 = vpop.permute.xlu0 %3008
      %3010 = vrot.lane.b32.xlu0 %v2226, 48
      %v3011 = vpop.permute.xlu0 %3010
      %3012 = vrot.lane.b32.xlu0 %v2227, 48
      %v3013 = vpop.permute.xlu0 %3012
      %3014 = vrot.lane.b32.xlu0 %v2228, 48
      %v3015 = vpop.permute.xlu0 %3014
      %3016 = vrot.lane.b32.xlu0 %v2229, 48
      %v3017 = vpop.permute.xlu0 %3016
      %3018 = vrot.lane.b32.xlu0 %v2230, 48
      %v3019 = vpop.permute.xlu0 %3018
      %3020 = vrot.lane.b32.xlu0 %v2231, 48
      %v3021 = vpop.permute.xlu0 %3020
      %3022 = vrot.lane.b32.xlu0 %v2232, 48
      %v3023 = vpop.permute.xlu0 %3022
      %3024 = vrot.lane.b32.xlu0 %v2233, 48
      %v3025 = vpop.permute.xlu0 %3024
      %3026 = vrot.lane.b32.xlu0 %v2234, 48
      %v3027 = vpop.permute.xlu0 %3026
      %3028 = vrot.lane.b32.xlu0 %v2235, 48
      %v3029 = vpop.permute.xlu0 %3028
      %3030 = vrot.lane.b32.xlu0 %v2236, 48
      %v3031 = vpop.permute.xlu0 %3030
      %3032 = vrot.lane.b32.xlu0 %v2237, 48
      %v3033 = vpop.permute.xlu0 %3032
      %3034 = vrot.lane.b32.xlu0 %v2238, 48
      %v3035 = vpop.permute.xlu0 %3034
      %3036 = vrot.lane.b32.xlu0 %v2239, 48
      %v3037 = vpop.permute.xlu0 %3036
      %3038 = vrot.lane.b32.xlu0 %v2240, 48
      %v3039 = vpop.permute.xlu0 %3038
      %3040 = vrot.lane.b32.xlu0 %v2241, 48
      %v3041 = vpop.permute.xlu0 %3040
      %3106 = vrot.lane.b32.xlu0 %v2242, 56
      %v3107 = vpop.permute.xlu0 %3106
      %3108 = vrot.lane.b32.xlu0 %v2243, 56
      %v3109 = vpop.permute.xlu0 %3108
      %3110 = vrot.lane.b32.xlu0 %v2244, 56
      %v3111 = vpop.permute.xlu0 %3110
      %3112 = vrot.lane.b32.xlu0 %v2245, 56
      %v3113 = vpop.permute.xlu0 %3112
      %3114 = vrot.lane.b32.xlu0 %v2246, 56
      %v3115 = vpop.permute.xlu0 %3114
      %3116 = vrot.lane.b32.xlu0 %v2247, 56
      %v3117 = vpop.permute.xlu0 %3116
      %3118 = vrot.lane.b32.xlu0 %v2248, 56
      %v3119 = vpop.permute.xlu0 %3118
      %3120 = vrot.lane.b32.xlu0 %v2249, 56
      %v3121 = vpop.permute.xlu0 %3120
      %3122 = vrot.lane.b32.xlu0 %v2250, 56
      %v3123 = vpop.permute.xlu0 %3122
      %3124 = vrot.lane.b32.xlu0 %v2251, 56
      %v3125 = vpop.permute.xlu0 %3124
      %3126 = vrot.lane.b32.xlu0 %v2252, 56
      %v3127 = vpop.permute.xlu0 %3126
      %3128 = vrot.lane.b32.xlu0 %v2253, 56
      %v3129 = vpop.permute.xlu0 %3128
      %3130 = vrot.lane.b32.xlu0 %v2254, 56
      %v3131 = vpop.permute.xlu0 %3130
      %3132 = vrot.lane.b32.xlu0 %v2255, 56
      %v3133 = vpop.permute.xlu0 %3132
      %3134 = vrot.lane.b32.xlu0 %v2256, 56
      %v3135 = vpop.permute.xlu0 %3134
      %3136 = vrot.lane.b32.xlu0 %v2257, 56
      %v3137 = vpop.permute.xlu0 %3136
      %3138 = vrot.lane.b32.xlu0 %v2258, 56
      %v3139 = vpop.permute.xlu0 %3138
      %3140 = vrot.lane.b32.xlu0 %v2259, 56
      %v3141 = vpop.permute.xlu0 %3140
      %3142 = vrot.lane.b32.xlu0 %v2260, 56
      %v3143 = vpop.permute.xlu0 %3142
      %3144 = vrot.lane.b32.xlu0 %v2261, 56
      %v3145 = vpop.permute.xlu0 %3144
      %3146 = vrot.lane.b32.xlu0 %v2262, 56
      %v3147 = vpop.permute.xlu0 %3146
      %3148 = vrot.lane.b32.xlu0 %v2263, 56
      %v3149 = vpop.permute.xlu0 %3148
      %3150 = vrot.lane.b32.xlu0 %v2264, 56
      %v3151 = vpop.permute.xlu0 %3150
      %3152 = vrot.lane.b32.xlu0 %v2265, 56
      %v3153 = vpop.permute.xlu0 %3152
      %3154 = vrot.lane.b32.xlu0 %v2266, 56
      %v3155 = vpop.permute.xlu0 %3154
      %3156 = vrot.lane.b32.xlu0 %v2267, 56
      %v3157 = vpop.permute.xlu0 %3156
      %3158 = vrot.lane.b32.xlu0 %v2268, 56
      %v3159 = vpop.permute.xlu0 %3158
      %3160 = vrot.lane.b32.xlu0 %v2269, 56
      %v3161 = vpop.permute.xlu0 %3160
      %3162 = vrot.lane.b32.xlu0 %v2270, 56
      %v3163 = vpop.permute.xlu0 %3162
      %3164 = vrot.lane.b32.xlu0 %v2271, 56
      %v3165 = vpop.permute.xlu0 %3164
      %3166 = vrot.lane.b32.xlu0 %v2272, 56
      %v3167 = vpop.permute.xlu0 %3166
      %3168 = vrot.lane.b32.xlu0 %v2273, 56
      %v3169 = vpop.permute.xlu0 %3168
      %3234 = vrot.lane.b32.xlu0 %v2274, 64
      %v3235 = vpop.permute.xlu0 %3234
      %3236 = vrot.lane.b32.xlu0 %v2275, 64
      %v3237 = vpop.permute.xlu0 %3236
      %3238 = vrot.lane.b32.xlu0 %v2276, 64
      %v3239 = vpop.permute.xlu0 %3238
      %3240 = vrot.lane.b32.xlu0 %v2277, 64
      %v3241 = vpop.permute.xlu0 %3240
      %3242 = vrot.lane.b32.xlu0 %v2278, 64
      %v3243 = vpop.permute.xlu0 %3242
      %3244 = vrot.lane.b32.xlu0 %v2279, 64
      %v3245 = vpop.permute.xlu0 %3244
      %3246 = vrot.lane.b32.xlu0 %v2280, 64
      %v3247 = vpop.permute.xlu0 %3246
      %3248 = vrot.lane.b32.xlu0 %v2281, 64
      %v3249 = vpop.permute.xlu0 %3248
      %3250 = vrot.lane.b32.xlu0 %v2282, 64
      %v3251 = vpop.permute.xlu0 %3250
      %3252 = vrot.lane.b32.xlu0 %v2283, 64
      %v3253 = vpop.permute.xlu0 %3252
      %3254 = vrot.lane.b32.xlu0 %v2284, 64
      %v3255 = vpop.permute.xlu0 %3254
      %3256 = vrot.lane.b32.xlu0 %v2285, 64
      %v3257 = vpop.permute.xlu0 %3256
      %3258 = vrot.lane.b32.xlu0 %v2286, 64
      %v3259 = vpop.permute.xlu0 %3258
      %3260 = vrot.lane.b32.xlu0 %v2287, 64
      %v3261 = vpop.permute.xlu0 %3260
      %3262 = vrot.lane.b32.xlu0 %v2288, 64
      %v3263 = vpop.permute.xlu0 %3262
      %3264 = vrot.lane.b32.xlu0 %v2289, 64
      %v3265 = vpop.permute.xlu0 %3264
      %3266 = vrot.lane.b32.xlu0 %v2290, 64
      %v3267 = vpop.permute.xlu0 %3266
      %3268 = vrot.lane.b32.xlu0 %v2291, 64
      %v3269 = vpop.permute.xlu0 %3268
      %3270 = vrot.lane.b32.xlu0 %v2292, 64
      %v3271 = vpop.permute.xlu0 %3270
      %3272 = vrot.lane.b32.xlu0 %v2293, 64
      %v3273 = vpop.permute.xlu0 %3272
      %3274 = vrot.lane.b32.xlu0 %v2294, 64
      %v3275 = vpop.permute.xlu0 %3274
      %3276 = vrot.lane.b32.xlu0 %v2295, 64
      %v3277 = vpop.permute.xlu0 %3276
      %3278 = vrot.lane.b32.xlu0 %v2296, 64
      %v3279 = vpop.permute.xlu0 %3278
      %3280 = vrot.lane.b32.xlu0 %v2297, 64
      %v3281 = vpop.permute.xlu0 %3280
      %3282 = vrot.lane.b32.xlu0 %v2298, 64
      %v3283 = vpop.permute.xlu0 %3282
      %3284 = vrot.lane.b32.xlu0 %v2299, 64
      %v3285 = vpop.permute.xlu0 %3284
      %3286 = vrot.lane.b32.xlu0 %v2300, 64
      %v3287 = vpop.permute.xlu0 %3286
      %3288 = vrot.lane.b32.xlu0 %v2301, 64
      %v3289 = vpop.permute.xlu0 %3288
      %3290 = vrot.lane.b32.xlu0 %v2302, 64
      %v3291 = vpop.permute.xlu0 %3290
      %3292 = vrot.lane.b32.xlu0 %v2303, 64
      %v3293 = vpop.permute.xlu0 %3292
      %3294 = vrot.lane.b32.xlu0 %v2304, 64
      %v3295 = vpop.permute.xlu0 %3294
      %3296 = vrot.lane.b32.xlu0 %v2305, 64
      %v3297 = vpop.permute.xlu0 %3296
      %v3330 = vsel %vm1370, %v2017, %v2339
      %v3331 = vsel %vm1370, %v2018, %v2341
      %v3332 = vsel %vm1370, %v2019, %v2343
      %v3333 = vsel %vm1370, %v2020, %v2345
      %v3334 = vsel %vm1370, %v2021, %v2347
      %v3335 = vsel %vm1370, %v2022, %v2349
      %v3336 = vsel %vm1370, %v2023, %v2351
      %v3337 = vsel %vm1370, %v2024, %v2353
      %v3338 = vsel %vm1370, %v2025, %v2355
      %v3339 = vsel %vm1370, %v2026, %v2357
      %v3340 = vsel %vm1370, %v2027, %v2359
      %v3341 = vsel %vm1370, %v2028, %v2361
      %v3342 = vsel %vm1370, %v2029, %v2363
      %v3343 = vsel %vm1370, %v2030, %v2365
      %v3344 = vsel %vm1370, %v2031, %v2367
      %v3345 = vsel %vm1370, %v2032, %v2369
      %v3346 = vsel %vm1370, %v2033, %v2371
      %v3347 = vsel %vm1370, %v2034, %v2373
      %v3348 = vsel %vm1370, %v2035, %v2375
      %v3349 = vsel %vm1370, %v2036, %v2377
      %v3350 = vsel %vm1370, %v2037, %v2379
      %v3351 = vsel %vm1370, %v2038, %v2381
      %v3352 = vsel %vm1370, %v2039, %v2383
      %v3353 = vsel %vm1370, %v2040, %v2385
      %v3354 = vsel %vm1370, %v2041, %v2387
      %v3355 = vsel %vm1370, %v2042, %v2389
      %v3356 = vsel %vm1370, %v2043, %v2391
      %v3357 = vsel %vm1370, %v2044, %v2393
      %v3358 = vsel %vm1370, %v2045, %v2395
      %v3359 = vsel %vm1370, %v2046, %v2397
      %v3360 = vsel %vm1370, %v2047, %v2399
      %v3361 = vsel %vm1370, %v2048, %v2401
      %v3362 = vsel %vm1436, %v3330, %v2467
      %v3363 = vsel %vm1436, %v3331, %v2469
      %v3364 = vsel %vm1436, %v3332, %v2471
      %v3365 = vsel %vm1436, %v3333, %v2473
      %v3366 = vsel %vm1436, %v3334, %v2475
      %v3367 = vsel %vm1436, %v3335, %v2477
      %v3368 = vsel %vm1436, %v3336, %v2479
      %v3369 = vsel %vm1436, %v3337, %v2481
      %v3370 = vsel %vm1436, %v3338, %v2483
      %v3371 = vsel %vm1436, %v3339, %v2485
      %v3372 = vsel %vm1436, %v3340, %v2487
      %v3373 = vsel %vm1436, %v3341, %v2489
      %v3374 = vsel %vm1436, %v3342, %v2491
      %v3375 = vsel %vm1436, %v3343, %v2493
      %v3376 = vsel %vm1436, %v3344, %v2495
      %v3377 = vsel %vm1436, %v3345, %v2497
      %v3378 = vsel %vm1436, %v3346, %v2499
      %v3379 = vsel %vm1436, %v3347, %v2501
      %v3380 = vsel %vm1436, %v3348, %v2503
      %v3381 = vsel %vm1436, %v3349, %v2505
      %v3382 = vsel %vm1436, %v3350, %v2507
      %v3383 = vsel %vm1436, %v3351, %v2509
      %v3384 = vsel %vm1436, %v3352, %v2511
      %v3385 = vsel %vm1436, %v3353, %v2513
      %v3386 = vsel %vm1436, %v3354, %v2515
      %v3387 = vsel %vm1436, %v3355, %v2517
      %v3388 = vsel %vm1436, %v3356, %v2519
      %v3389 = vsel %vm1436, %v3357, %v2521
      %v3390 = vsel %vm1436, %v3358, %v2523
      %v3391 = vsel %vm1436, %v3359, %v2525
      %v3392 = vsel %vm1436, %v3360, %v2527
      %v3393 = vsel %vm1436, %v3361, %v2529
      %v3394 = vsel %vm1502, %v3362, %v2595
      %v3395 = vsel %vm1502, %v3363, %v2597
      %v3396 = vsel %vm1502, %v3364, %v2599
      %v3397 = vsel %vm1502, %v3365, %v2601
      %v3398 = vsel %vm1502, %v3366, %v2603
      %v3399 = vsel %vm1502, %v3367, %v2605
      %v3400 = vsel %vm1502, %v3368, %v2607
      %v3401 = vsel %vm1502, %v3369, %v2609
      %v3402 = vsel %vm1502, %v3370, %v2611
      %v3403 = vsel %vm1502, %v3371, %v2613
      %v3404 = vsel %vm1502, %v3372, %v2615
      %v3405 = vsel %vm1502, %v3373, %v2617
      %v3406 = vsel %vm1502, %v3374, %v2619
      %v3407 = vsel %vm1502, %v3375, %v2621
      %v3408 = vsel %vm1502, %v3376, %v2623
      %v3409 = vsel %vm1502, %v3377, %v2625
      %v3410 = vsel %vm1502, %v3378, %v2627
      %v3411 = vsel %vm1502, %v3379, %v2629
      %v3412 = vsel %vm1502, %v3380, %v2631
      %v3413 = vsel %vm1502, %v3381, %v2633
      %v3414 = vsel %vm1502, %v3382, %v2635
      %v3415 = vsel %vm1502, %v3383, %v2637
      %v3416 = vsel %vm1502, %v3384, %v2639
      %v3417 = vsel %vm1502, %v3385, %v2641
      %v3418 = vsel %vm1502, %v3386, %v2643
      %v3419 = vsel %vm1502, %v3387, %v2645
      %v3420 = vsel %vm1502, %v3388, %v2647
      %v3421 = vsel %vm1502, %v3389, %v2649
      %v3422 = vsel %vm1502, %v3390, %v2651
      %v3423 = vsel %vm1502, %v3391, %v2653
      %v3424 = vsel %vm1502, %v3392, %v2655
      %v3425 = vsel %vm1502, %v3393, %v2657
      %v3426 = vsel %vm1568, %v3394, %v2723
      %v3427 = vsel %vm1568, %v3395, %v2725
      %v3428 = vsel %vm1568, %v3396, %v2727
      %v3429 = vsel %vm1568, %v3397, %v2729
      %v3430 = vsel %vm1568, %v3398, %v2731
      %v3431 = vsel %vm1568, %v3399, %v2733
      %v3432 = vsel %vm1568, %v3400, %v2735
      %v3433 = vsel %vm1568, %v3401, %v2737
      %v3434 = vsel %vm1568, %v3402, %v2739
      %v3435 = vsel %vm1568, %v3403, %v2741
      %v3436 = vsel %vm1568, %v3404, %v2743
      %v3437 = vsel %vm1568, %v3405, %v2745
      %v3438 = vsel %vm1568, %v3406, %v2747
      %v3439 = vsel %vm1568, %v3407, %v2749
      %v3440 = vsel %vm1568, %v3408, %v2751
      %v3441 = vsel %vm1568, %v3409, %v2753
      %v3442 = vsel %vm1568, %v3410, %v2755
      %v3443 = vsel %vm1568, %v3411, %v2757
      %v3444 = vsel %vm1568, %v3412, %v2759
      %v3445 = vsel %vm1568, %v3413, %v2761
      %v3446 = vsel %vm1568, %v3414, %v2763
      %v3447 = vsel %vm1568, %v3415, %v2765
      %v3448 = vsel %vm1568, %v3416, %v2767
      %v3449 = vsel %vm1568, %v3417, %v2769
      %v3450 = vsel %vm1568, %v3418, %v2771
      %v3451 = vsel %vm1568, %v3419, %v2773
      %v3452 = vsel %vm1568, %v3420, %v2775
      %v3453 = vsel %vm1568, %v3421, %v2777
      %v3454 = vsel %vm1568, %v3422, %v2779
      %v3455 = vsel %vm1568, %v3423, %v2781
      %v3456 = vsel %vm1568, %v3424, %v2783
      %v3457 = vsel %vm1568, %v3425, %v2785
      %vm3458 = vcmask 326656
      %v3459 = vsel %vm3458, %v3426, %v2851
      %v3460 = vsel %vm3458, %v3427, %v2853
      %v3461 = vsel %vm3458, %v3428, %v2855
      %v3462 = vsel %vm3458, %v3429, %v2857
      %v3463 = vsel %vm3458, %v3430, %v2859
      %v3464 = vsel %vm3458, %v3431, %v2861
      %v3465 = vsel %vm3458, %v3432, %v2863
      %v3466 = vsel %vm3458, %v3433, %v2865
      %v3467 = vsel %vm3458, %v3434, %v2867
      %v3468 = vsel %vm3458, %v3435, %v2869
      %v3469 = vsel %vm3458, %v3436, %v2871
      %v3470 = vsel %vm3458, %v3437, %v2873
      %v3471 = vsel %vm3458, %v3438, %v2875
      %v3472 = vsel %vm3458, %v3439, %v2877
      %v3473 = vsel %vm3458, %v3440, %v2879
      %v3474 = vsel %vm3458, %v3441, %v2881
      %v3475 = vsel %vm3458, %v3442, %v2883
      %v3476 = vsel %vm3458, %v3443, %v2885
      %v3477 = vsel %vm3458, %v3444, %v2887
      %v3478 = vsel %vm3458, %v3445, %v2889
      %v3479 = vsel %vm3458, %v3446, %v2891
      %v3480 = vsel %vm3458, %v3447, %v2893
      %v3481 = vsel %vm3458, %v3448, %v2895
      %v3482 = vsel %vm3458, %v3449, %v2897
      %v3483 = vsel %vm3458, %v3450, %v2899
      %v3484 = vsel %vm3458, %v3451, %v2901
      %v3485 = vsel %vm3458, %v3452, %v2903
      %v3486 = vsel %vm3458, %v3453, %v2905
      %v3487 = vsel %vm3458, %v3454, %v2907
      %v3488 = vsel %vm3458, %v3455, %v2909
      %v3489 = vsel %vm3458, %v3456, %v2911
      %v3490 = vsel %vm3458, %v3457, %v2913
      %vm3491 = vcmask 392192
      %v3492 = vsel %vm3491, %v3459, %v2979
      %v3493 = vsel %vm3491, %v3460, %v2981
      %v3494 = vsel %vm3491, %v3461, %v2983
      %v3495 = vsel %vm3491, %v3462, %v2985
      %v3496 = vsel %vm3491, %v3463, %v2987
      %v3497 = vsel %vm3491, %v3464, %v2989
      %v3498 = vsel %vm3491, %v3465, %v2991
      %v3499 = vsel %vm3491, %v3466, %v2993
      %v3500 = vsel %vm3491, %v3467, %v2995
      %v3501 = vsel %vm3491, %v3468, %v2997
      %v3502 = vsel %vm3491, %v3469, %v2999
      %v3503 = vsel %vm3491, %v3470, %v3001
      %v3504 = vsel %vm3491, %v3471, %v3003
      %v3505 = vsel %vm3491, %v3472, %v3005
      %v3506 = vsel %vm3491, %v3473, %v3007
      %v3507 = vsel %vm3491, %v3474, %v3009
      %v3508 = vsel %vm3491, %v3475, %v3011
      %v3509 = vsel %vm3491, %v3476, %v3013
      %v3510 = vsel %vm3491, %v3477, %v3015
      %v3511 = vsel %vm3491, %v3478, %v3017
      %v3512 = vsel %vm3491, %v3479, %v3019
      %v3513 = vsel %vm3491, %v3480, %v3021
      %v3514 = vsel %vm3491, %v3481, %v3023
      %v3515 = vsel %vm3491, %v3482, %v3025
      %v3516 = vsel %vm3491, %v3483, %v3027
      %v3517 = vsel %vm3491, %v3484, %v3029
      %v3518 = vsel %vm3491, %v3485, %v3031
      %v3519 = vsel %vm3491, %v3486, %v3033
      %v3520 = vsel %vm3491, %v3487, %v3035
      %v3521 = vsel %vm3491, %v3488, %v3037
      %v3522 = vsel %vm3491, %v3489, %v3039
      %v3523 = vsel %vm3491, %v3490, %v3041
      %vm3524 = vcmask 457728
      %v3525 = vsel %vm3524, %v3492, %v3107
      %v3526 = vsel %vm3524, %v3493, %v3109
      %v3527 = vsel %vm3524, %v3494, %v3111
      %v3528 = vsel %vm3524, %v3495, %v3113
      %v3529 = vsel %vm3524, %v3496, %v3115
      %v3530 = vsel %vm3524, %v3497, %v3117
      %v3531 = vsel %vm3524, %v3498, %v3119
      %v3532 = vsel %vm3524, %v3499, %v3121
      %v3533 = vsel %vm3524, %v3500, %v3123
      %v3534 = vsel %vm3524, %v3501, %v3125
      %v3535 = vsel %vm3524, %v3502, %v3127
      %v3536 = vsel %vm3524, %v3503, %v3129
      %v3537 = vsel %vm3524, %v3504, %v3131
      %v3538 = vsel %vm3524, %v3505, %v3133
      %v3539 = vsel %vm3524, %v3506, %v3135
      %v3540 = vsel %vm3524, %v3507, %v3137
      %v3541 = vsel %vm3524, %v3508, %v3139
      %v3542 = vsel %vm3524, %v3509, %v3141
      %v3543 = vsel %vm3524, %v3510, %v3143
      %v3544 = vsel %vm3524, %v3511, %v3145
      %v3545 = vsel %vm3524, %v3512, %v3147
      %v3546 = vsel %vm3524, %v3513, %v3149
      %v3547 = vsel %vm3524, %v3514, %v3151
      %v3548 = vsel %vm3524, %v3515, %v3153
      %v3549 = vsel %vm3524, %v3516, %v3155
      %v3550 = vsel %vm3524, %v3517, %v3157
      %v3551 = vsel %vm3524, %v3518, %v3159
      %v3552 = vsel %vm3524, %v3519, %v3161
      %v3553 = vsel %vm3524, %v3520, %v3163
      %v3554 = vsel %vm3524, %v3521, %v3165
      %v3555 = vsel %vm3524, %v3522, %v3167
      %v3556 = vsel %vm3524, %v3523, %v3169
      %vm3557 = vcmask 523264
      %v3558 = vsel %vm3557, %v3525, %v3235
      %v3559 = vsel %vm3557, %v3526, %v3237
      %v3560 = vsel %vm3557, %v3527, %v3239
      %v3561 = vsel %vm3557, %v3528, %v3241
      %v3562 = vsel %vm3557, %v3529, %v3243
      %v3563 = vsel %vm3557, %v3530, %v3245
      %v3564 = vsel %vm3557, %v3531, %v3247
      %v3565 = vsel %vm3557, %v3532, %v3249
      %v3566 = vsel %vm3557, %v3533, %v3251
      %v3567 = vsel %vm3557, %v3534, %v3253
      %v3568 = vsel %vm3557, %v3535, %v3255
      %v3569 = vsel %vm3557, %v3536, %v3257
      %v3570 = vsel %vm3557, %v3537, %v3259
      %v3571 = vsel %vm3557, %v3538, %v3261
      %v3572 = vsel %vm3557, %v3539, %v3263
      %v3573 = vsel %vm3557, %v3540, %v3265
      %v3574 = vsel %vm3557, %v3541, %v3267
      %v3575 = vsel %vm3557, %v3542, %v3269
      %v3576 = vsel %vm3557, %v3543, %v3271
      %v3577 = vsel %vm3557, %v3544, %v3273
      %v3578 = vsel %vm3557, %v3545, %v3275
      %v3579 = vsel %vm3557, %v3546, %v3277
      %v3580 = vsel %vm3557, %v3547, %v3279
      %v3581 = vsel %vm3557, %v3548, %v3281
      %v3582 = vsel %vm3557, %v3549, %v3283
      %v3583 = vsel %vm3557, %v3550, %v3285
      %v3584 = vsel %vm3557, %v3551, %v3287
      %v3585 = vsel %vm3557, %v3552, %v3289
      %v3586 = vsel %vm3557, %v3553, %v3291
      %v3587 = vsel %vm3557, %v3554, %v3293
      %v3588 = vsel %vm3557, %v3555, %v3295
      %v3589 = vsel %vm3557, %v3556, %v3297
      %v3590 = vld [vmem:[%s3] sm:$0xff]
      %v3591 = vld [vmem:[%s3 + $0x8] sm:$0xff]
      %v3592 = vld [vmem:[%s3 + $0x10] sm:$0xff]
      %v3593 = vld [vmem:[%s3 + $0x18] sm:$0xff]
      %v3594 = vld [vmem:[%s3 + $0x20] sm:$0xff]
      %v3595 = vld [vmem:[%s3 + $0x28] sm:$0xff]
      %v3596 = vld [vmem:[%s3 + $0x30] sm:$0xff]
      %v3597 = vld [vmem:[%s3 + $0x38] sm:$0xff]
      %v3598 = vld [vmem:[%s3 + $0x40] sm:$0xff]
      %v3599 = vld [vmem:[%s4] sm:$0x1]
      %v3601 = vlaneseq
      %v3602 = vshrl.u32 %v3601, 7
      %v3603 = vsub.s32 0, %v3602
      %v3604 = vrot.slane %v3599, %v3603
      %vm3606 = vcmask 588800
      %v3608 = vsel %vm3606, %v3558, 0
      %v3611 = vsel %vm3606, %v3559, 0
      %v3614 = vsel %vm3606, %v3560, 0
      %v3617 = vsel %vm3606, %v3561, 0
      %v3620 = vsel %vm3606, %v3562, 0
      %v3623 = vsel %vm3606, %v3563, 0
      %v3626 = vsel %vm3606, %v3564, 0
      %v3629 = vsel %vm3606, %v3565, 0
      %v3632 = vsel %vm3606, %v3566, 0
      %v3635 = vsel %vm3606, %v3567, 0
      %v3638 = vsel %vm3606, %v3568, 0
      %v3641 = vsel %vm3606, %v3569, 0
      %v3644 = vsel %vm3606, %v3570, 0
      %v3647 = vsel %vm3606, %v3571, 0
      %v3650 = vsel %vm3606, %v3572, 0
      %v3653 = vsel %vm3606, %v3573, 0
      %v3656 = vsel %vm3606, %v3574, 0
      %v3659 = vsel %vm3606, %v3575, 0
      %v3662 = vsel %vm3606, %v3576, 0
      %v3665 = vsel %vm3606, %v3577, 0
      %v3668 = vsel %vm3606, %v3578, 0
      %v3671 = vsel %vm3606, %v3579, 0
      %v3674 = vsel %vm3606, %v3580, 0
      %v3677 = vsel %vm3606, %v3581, 0
      %v3680 = vsel %vm3606, %v3582, 0
      %v3683 = vsel %vm3606, %v3583, 0
      %v3686 = vsel %vm3606, %v3584, 0
      %v3689 = vsel %vm3606, %v3585, 0
      %v3692 = vsel %vm3606, %v3586, 0
      %v3695 = vsel %vm3606, %v3587, 0
      %v3698 = vsel %vm3606, %v3588, 0
      %v3701 = vsel %vm3606, %v3589, 0
      %3703 = vmatprep.subr.mxu0 0.0
      %3704 = vmatpush1.msra.mxu0 0.0
      %3705 = vmatprep.subr.mxu0 0.0
      %3706 = vmatpush1.msra.mxu0 0.0
      %3707 = vmatprep.subr.mxu0 0.0
      %3708 = vmatpush1.msra.mxu0 0.0
      %3709 = vmatprep.subr.mxu0 0.0
      %3710 = vmatpush1.msra.mxu0 0.0
      %3711 = vmatprep.subr.mxu0 0.0
      %3712 = vmatpush1.msra.mxu0 0.0
      %3713 = vmatprep.subr.mxu0 0.0
      %3714 = vmatpush1.msra.mxu0 0.0
      %3715 = vmatprep.subr.mxu0 0.0
      %3716 = vmatpush1.msra.mxu0 0.0
      %3717 = vmatprep.subr.mxu0 0.0
      %3718 = vmatpush1.msra.mxu0 %v3598
      %3719 = vmatprep.subr.mxu0 0.0
      %3720 = vmatpush1.msra.mxu0 %v3597
      %3721 = vmatprep.subr.mxu0 0.0
      %3722 = vmatpush1.msra.mxu0 %v3596
      %3723 = vmatprep.subr.mxu0 0.0
      %3724 = vmatpush1.msra.mxu0 %v3595
      %3725 = vmatprep.subr.mxu0 0.0
      %3726 = vmatpush1.msra.mxu0 %v3594
      %3727 = vmatprep.subr.mxu0 0.0
      %3728 = vmatpush1.msra.mxu0 %v3593
      %3729 = vmatprep.subr.mxu0 0.0
      %3730 = vmatpush1.msra.mxu0 %v3592
      %3731 = vmatprep.subr.mxu0 0.0
      %3732 = vmatpush1.msra.mxu0 %v3591
      %3733 = vmatprep.subr.mxu0 0.0
      %3734 = vmatpush1.msra.mxu0 %v3590
      %3735 = vmatprep.subr.mxu0 0.0
      %3736 = vmatpush2.msra.mxu0 0.0
      %3737 = vmatprep.subr.mxu0 0.0
      %3738 = vmatpush2.msra.mxu0 0.0
      %3739 = vmatprep.subr.mxu0 0.0
      %3740 = vmatpush2.msra.mxu0 0.0
      %3741 = vmatprep.subr.mxu0 0.0
      %3742 = vmatpush2.msra.mxu0 0.0
      %3743 = vmatprep.subr.mxu0 0.0
      %3744 = vmatpush2.msra.mxu0 0.0
      %3745 = vmatprep.subr.mxu0 0.0
      %3746 = vmatpush2.msra.mxu0 0.0
      %3747 = vmatprep.subr.mxu0 0.0
      %3748 = vmatpush2.msra.mxu0 0.0
      %3749 = vmatprep.subr.mxu0 0.0
      %3750 = vmatpush2.msra.mxu0 0.0
      %3751 = vmatprep.subr.mxu0 0.0
      %3752 = vmatpush2.msra.mxu0 0.0
      %3753 = vmatprep.subr.mxu0 0.0
      %3754 = vmatpush2.msra.mxu0 0.0
      %3755 = vmatprep.subr.mxu0 0.0
      %3756 = vmatpush2.msra.mxu0 0.0
      %3757 = vmatprep.subr.mxu0 0.0
      %3758 = vmatpush2.msra.mxu0 0.0
      %3759 = vmatprep.subr.mxu0 0.0
      %3760 = vmatpush2.msra.mxu0 0.0
      %3761 = vmatprep.subr.mxu0 0.0
      %3762 = vmatpush2.msra.mxu0 0.0
      %3763 = vmatprep.subr.mxu0 0.0
      %3764 = vmatpush2.msra.mxu0 0.0
      %3765 = vmatprep.subr.mxu0 0.0
      %3766 = vmatpush2.msra.mxu0 0.0
      %3767 = vmatprep.mubr.f32.mxu0 0.0
      %3768 = vmatmul.mubr.f32.gmra.mxu0 %v3608
      %v3769 = vpop.f32.mrf.mxu0
      %v3770 = vadd.f32 %v3604, %v3769
      %v3771 = vpop.f32.mrf.mxu0
      %3772 = vmatprep.mubr.f32.mxu0 0.0
      %3773 = vmatmul.mubr.f32.gmra.mxu0 %v3611
      %v3774 = vpop.f32.mrf.mxu0
      %v3775 = vadd.f32 %v3604, %v3774
      %v3776 = vpop.f32.mrf.mxu0
      %3777 = vmatprep.mubr.f32.mxu0 0.0
      %3778 = vmatmul.mubr.f32.gmra.mxu0 %v3614
      %v3779 = vpop.f32.mrf.mxu0
      %v3780 = vadd.f32 %v3604, %v3779
      %v3781 = vpop.f32.mrf.mxu0
      %3782 = vmatprep.mubr.f32.mxu0 0.0
      %3783 = vmatmul.mubr.f32.gmra.mxu0 %v3617
      %v3784 = vpop.f32.mrf.mxu0
      %v3785 = vadd.f32 %v3604, %v3784
      %v3786 = vpop.f32.mrf.mxu0
      %3787 = vmatprep.mubr.f32.mxu0 0.0
      %3788 = vmatmul.mubr.f32.gmra.mxu0 %v3620
      %v3789 = vpop.f32.mrf.mxu0
      %v3790 = vadd.f32 %v3604, %v3789
      %v3791 = vpop.f32.mrf.mxu0
      %3792 = vmatprep.mubr.f32.mxu0 0.0
      %3793 = vmatmul.mubr.f32.gmra.mxu0 %v3623
      %v3794 = vpop.f32.mrf.mxu0
      %v3795 = vadd.f32 %v3604, %v3794
      %v3796 = vpop.f32.mrf.mxu0
      %3797 = vmatprep.mubr.f32.mxu0 0.0
      %3798 = vmatmul.mubr.f32.gmra.mxu0 %v3626
      %v3799 = vpop.f32.mrf.mxu0
      %v3800 = vadd.f32 %v3604, %v3799
      %v3801 = vpop.f32.mrf.mxu0
      %3802 = vmatprep.mubr.f32.mxu0 0.0
      %3803 = vmatmul.mubr.f32.gmra.mxu0 %v3629
      %v3804 = vpop.f32.mrf.mxu0
      %v3805 = vadd.f32 %v3604, %v3804
      %v3806 = vpop.f32.mrf.mxu0
      %3807 = vmatprep.mubr.f32.mxu0 0.0
      %3808 = vmatmul.mubr.f32.gmra.mxu0 %v3632
      %v3809 = vpop.f32.mrf.mxu0
      %v3810 = vadd.f32 %v3604, %v3809
      %v3811 = vpop.f32.mrf.mxu0
      %3812 = vmatprep.mubr.f32.mxu0 0.0
      %3813 = vmatmul.mubr.f32.gmra.mxu0 %v3635
      %v3814 = vpop.f32.mrf.mxu0
      %v3815 = vadd.f32 %v3604, %v3814
      %v3816 = vpop.f32.mrf.mxu0
      %3817 = vmatprep.mubr.f32.mxu0 0.0
      %3818 = vmatmul.mubr.f32.gmra.mxu0 %v3638
      %v3819 = vpop.f32.mrf.mxu0
      %v3820 = vadd.f32 %v3604, %v3819
      %v3821 = vpop.f32.mrf.mxu0
      %3822 = vmatprep.mubr.f32.mxu0 0.0
      %3823 = vmatmul.mubr.f32.gmra.mxu0 %v3641
      %v3824 = vpop.f32.mrf.mxu0
      %v3825 = vadd.f32 %v3604, %v3824
      %v3826 = vpop.f32.mrf.mxu0
      %3827 = vmatprep.mubr.f32.mxu0 0.0
      %3828 = vmatmul.mubr.f32.gmra.mxu0 %v3644
      %v3829 = vpop.f32.mrf.mxu0
      %v3830 = vadd.f32 %v3604, %v3829
      %v3831 = vpop.f32.mrf.mxu0
      %3832 = vmatprep.mubr.f32.mxu0 0.0
      %3833 = vmatmul.mubr.f32.gmra.mxu0 %v3647
      %v3834 = vpop.f32.mrf.mxu0
      %v3835 = vadd.f32 %v3604, %v3834
      %v3836 = vpop.f32.mrf.mxu0
      %3837 = vmatprep.mubr.f32.mxu0 0.0
      %3838 = vmatmul.mubr.f32.gmra.mxu0 %v3650
      %v3839 = vpop.f32.mrf.mxu0
      %v3840 = vadd.f32 %v3604, %v3839
      %v3841 = vpop.f32.mrf.mxu0
      %3842 = vmatprep.mubr.f32.mxu0 0.0
      %3843 = vmatmul.mubr.f32.gmra.mxu0 %v3653
      %v3844 = vpop.f32.mrf.mxu0
      %v3845 = vadd.f32 %v3604, %v3844
      %v3846 = vpop.f32.mrf.mxu0
      %3847 = vmatprep.mubr.f32.mxu0 0.0
      %3848 = vmatmul.mubr.f32.gmra.mxu0 %v3656
      %v3849 = vpop.f32.mrf.mxu0
      %v3850 = vadd.f32 %v3604, %v3849
      %v3851 = vpop.f32.mrf.mxu0
      %3852 = vmatprep.mubr.f32.mxu0 0.0
      %3853 = vmatmul.mubr.f32.gmra.mxu0 %v3659
      %v3854 = vpop.f32.mrf.mxu0
      %v3855 = vadd.f32 %v3604, %v3854
      %v3856 = vpop.f32.mrf.mxu0
      %3857 = vmatprep.mubr.f32.mxu0 0.0
      %3858 = vmatmul.mubr.f32.gmra.mxu0 %v3662
      %v3859 = vpop.f32.mrf.mxu0
      %v3860 = vadd.f32 %v3604, %v3859
      %v3861 = vpop.f32.mrf.mxu0
      %3862 = vmatprep.mubr.f32.mxu0 0.0
      %3863 = vmatmul.mubr.f32.gmra.mxu0 %v3665
      %v3864 = vpop.f32.mrf.mxu0
      %v3865 = vadd.f32 %v3604, %v3864
      %v3866 = vpop.f32.mrf.mxu0
      %3867 = vmatprep.mubr.f32.mxu0 0.0
      %3868 = vmatmul.mubr.f32.gmra.mxu0 %v3668
      %v3869 = vpop.f32.mrf.mxu0
      %v3870 = vadd.f32 %v3604, %v3869
      %v3871 = vpop.f32.mrf.mxu0
      %3872 = vmatprep.mubr.f32.mxu0 0.0
      %3873 = vmatmul.mubr.f32.gmra.mxu0 %v3671
      %v3874 = vpop.f32.mrf.mxu0
      %v3875 = vadd.f32 %v3604, %v3874
      %v3876 = vpop.f32.mrf.mxu0
      %3877 = vmatprep.mubr.f32.mxu0 0.0
      %3878 = vmatmul.mubr.f32.gmra.mxu0 %v3674
      %v3879 = vpop.f32.mrf.mxu0
      %v3880 = vadd.f32 %v3604, %v3879
      %v3881 = vpop.f32.mrf.mxu0
      %3882 = vmatprep.mubr.f32.mxu0 0.0
      %3883 = vmatmul.mubr.f32.gmra.mxu0 %v3677
      %v3884 = vpop.f32.mrf.mxu0
      %v3885 = vadd.f32 %v3604, %v3884
      %v3886 = vpop.f32.mrf.mxu0
      %3887 = vmatprep.mubr.f32.mxu0 0.0
      %3888 = vmatmul.mubr.f32.gmra.mxu0 %v3680
      %v3889 = vpop.f32.mrf.mxu0
      %v3890 = vadd.f32 %v3604, %v3889
      %v3891 = vpop.f32.mrf.mxu0
      %3892 = vmatprep.mubr.f32.mxu0 0.0
      %3893 = vmatmul.mubr.f32.gmra.mxu0 %v3683
      %v3894 = vpop.f32.mrf.mxu0
      %v3895 = vadd.f32 %v3604, %v3894
      %v3896 = vpop.f32.mrf.mxu0
      %3897 = vmatprep.mubr.f32.mxu0 0.0
      %3898 = vmatmul.mubr.f32.gmra.mxu0 %v3686
      %v3899 = vpop.f32.mrf.mxu0
      %v3900 = vadd.f32 %v3604, %v3899
      %v3901 = vpop.f32.mrf.mxu0
      %3902 = vmatprep.mubr.f32.mxu0 0.0
      %3903 = vmatmul.mubr.f32.gmra.mxu0 %v3689
      %v3904 = vpop.f32.mrf.mxu0
      %v3905 = vadd.f32 %v3604, %v3904
      %v3906 = vpop.f32.mrf.mxu0
      %3907 = vmatprep.mubr.f32.mxu0 0.0
      %3908 = vmatmul.mubr.f32.gmra.mxu0 %v3692
      %v3909 = vpop.f32.mrf.mxu0
      %v3910 = vadd.f32 %v3604, %v3909
      %v3911 = vpop.f32.mrf.mxu0
      %3912 = vmatprep.mubr.f32.mxu0 0.0
      %3913 = vmatmul.mubr.f32.gmra.mxu0 %v3695
      %v3914 = vpop.f32.mrf.mxu0
      %v3915 = vadd.f32 %v3604, %v3914
      %v3916 = vpop.f32.mrf.mxu0
      %3917 = vmatprep.mubr.f32.mxu0 0.0
      %3918 = vmatmul.mubr.f32.gmra.mxu0 %v3698
      %v3919 = vpop.f32.mrf.mxu0
      %v3920 = vadd.f32 %v3604, %v3919
      %v3921 = vpop.f32.mrf.mxu0
      %3922 = vmatprep.mubr.f32.mxu0 0.0
      %3923 = vmatmul.mubr.f32.gmra.mxu0 %v3701
      %v3924 = vpop.f32.mrf.mxu0
      %v3925 = vadd.f32 %v3604, %v3924
      %v3926 = vpop.f32.mrf.mxu0
      %3927 = vdwg.mxu0
      %v3928 = vld [vmem:[%s5] sm:$0x1]
      %v3930 = vlaneseq
      %v3931 = vshrl.u32 %v3930, 7
      %v3932 = vsub.s32 0, %v3931
      %v3933 = vrot.slane %v3928, %v3932
      %v3935 = vmul.f32 %v3770, %v3933
      %v3936 = vmul.f32 %v3775, %v3933
      %v3937 = vmul.f32 %v3780, %v3933
      %v3938 = vmul.f32 %v3785, %v3933
      %v3939 = vmul.f32 %v3790, %v3933
      %v3940 = vmul.f32 %v3795, %v3933
      %v3941 = vmul.f32 %v3800, %v3933
      %v3942 = vmul.f32 %v3805, %v3933
      %v3943 = vmul.f32 %v3810, %v3933
      %v3944 = vmul.f32 %v3815, %v3933
      %v3945 = vmul.f32 %v3820, %v3933
      %v3946 = vmul.f32 %v3825, %v3933
      %v3947 = vmul.f32 %v3830, %v3933
      %v3948 = vmul.f32 %v3835, %v3933
      %v3949 = vmul.f32 %v3840, %v3933
      %v3950 = vmul.f32 %v3845, %v3933
      %v3951 = vmul.f32 %v3850, %v3933
      %v3952 = vmul.f32 %v3855, %v3933
      %v3953 = vmul.f32 %v3860, %v3933
      %v3954 = vmul.f32 %v3865, %v3933
      %v3955 = vmul.f32 %v3870, %v3933
      %v3956 = vmul.f32 %v3875, %v3933
      %v3957 = vmul.f32 %v3880, %v3933
      %v3958 = vmul.f32 %v3885, %v3933
      %v3959 = vmul.f32 %v3890, %v3933
      %v3960 = vmul.f32 %v3895, %v3933
      %v3961 = vmul.f32 %v3900, %v3933
      %v3962 = vmul.f32 %v3905, %v3933
      %v3963 = vmul.f32 %v3910, %v3933
      %v3964 = vmul.f32 %v3915, %v3933
      %v3965 = vmul.f32 %v3920, %v3933
      %v3966 = vmul.f32 %v3925, %v3933
      %v3967 = vld [vmem:[%s6] sm:$0x1]
      %v3969 = vlaneseq
      %v3970 = vshrl.u32 %v3969, 7
      %v3971 = vsub.s32 0, %v3970
      %v3972 = vrot.slane %v3967, %v3971
      %v3974 = vadd.f32 %v3935, %v3972
      %v3975 = vadd.f32 %v3936, %v3972
      %v3976 = vadd.f32 %v3937, %v3972
      %v3977 = vadd.f32 %v3938, %v3972
      %v3978 = vadd.f32 %v3939, %v3972
      %v3979 = vadd.f32 %v3940, %v3972
      %v3980 = vadd.f32 %v3941, %v3972
      %v3981 = vadd.f32 %v3942, %v3972
      %v3982 = vadd.f32 %v3943, %v3972
      %v3983 = vadd.f32 %v3944, %v3972
      %v3984 = vadd.f32 %v3945, %v3972
      %v3985 = vadd.f32 %v3946, %v3972
      %v3986 = vadd.f32 %v3947, %v3972
      %v3987 = vadd.f32 %v3948, %v3972
      %v3988 = vadd.f32 %v3949, %v3972
      %v3989 = vadd.f32 %v3950, %v3972
      %v3990 = vadd.f32 %v3951, %v3972
      %v3991 = vadd.f32 %v3952, %v3972
      %v3992 = vadd.f32 %v3953, %v3972
      %v3993 = vadd.f32 %v3954, %v3972
      %v3994 = vadd.f32 %v3955, %v3972
      %v3995 = vadd.f32 %v3956, %v3972
      %v3996 = vadd.f32 %v3957, %v3972
      %v3997 = vadd.f32 %v3958, %v3972
      %v3998 = vadd.f32 %v3959, %v3972
      %v3999 = vadd.f32 %v3960, %v3972
      %v4000 = vadd.f32 %v3961, %v3972
      %v4001 = vadd.f32 %v3962, %v3972
      %v4002 = vadd.f32 %v3963, %v3972
      %v4003 = vadd.f32 %v3964, %v3972
      %v4004 = vadd.f32 %v3965, %v3972
      %v4005 = vadd.f32 %v3966, %v3972
      %v4006 = vmax.f32 %v3974, 0.0
      %v4007 = vmax.f32 %v3975, 0.0
      %v4008 = vmax.f32 %v3976, 0.0
      %v4009 = vmax.f32 %v3977, 0.0
      %v4010 = vmax.f32 %v3978, 0.0
      %v4011 = vmax.f32 %v3979, 0.0
      %v4012 = vmax.f32 %v3980, 0.0
      %v4013 = vmax.f32 %v3981, 0.0
      %v4014 = vmax.f32 %v3982, 0.0
      %v4015 = vmax.f32 %v3983, 0.0
      %v4016 = vmax.f32 %v3984, 0.0
      %v4017 = vmax.f32 %v3985, 0.0
      %v4018 = vmax.f32 %v3986, 0.0
      %v4019 = vmax.f32 %v3987, 0.0
      %v4020 = vmax.f32 %v3988, 0.0
      %v4021 = vmax.f32 %v3989, 0.0
      %v4022 = vmax.f32 %v3990, 0.0
      %v4023 = vmax.f32 %v3991, 0.0
      %v4024 = vmax.f32 %v3992, 0.0
      %v4025 = vmax.f32 %v3993, 0.0
      %v4026 = vmax.f32 %v3994, 0.0
      %v4027 = vmax.f32 %v3995, 0.0
      %v4028 = vmax.f32 %v3996, 0.0
      %v4029 = vmax.f32 %v3997, 0.0
      %v4030 = vmax.f32 %v3998, 0.0
      %v4031 = vmax.f32 %v3999, 0.0
      %v4032 = vmax.f32 %v4000, 0.0
      %v4033 = vmax.f32 %v4001, 0.0
      %v4034 = vmax.f32 %v4002, 0.0
      %v4035 = vmax.f32 %v4003, 0.0
      %v4036 = vmax.f32 %v4004, 0.0
      %v4037 = vmax.f32 %v4005, 0.0
      %v4070 = vadd.f32 %v4006, %v389
      %v4071 = vadd.f32 %v4007, %v391
      %v4072 = vadd.f32 %v4008, %v394
      %v4073 = vadd.f32 %v4009, %v396
      %v4074 = vadd.f32 %v4010, %v399
      %v4075 = vadd.f32 %v4011, %v401
      %v4076 = vadd.f32 %v4012, %v404
      %v4077 = vadd.f32 %v4013, %v406
      %v4078 = vadd.f32 %v4014, %v409
      %v4079 = vadd.f32 %v4015, %v411
      %v4080 = vadd.f32 %v4016, %v414
      %v4081 = vadd.f32 %v4017, %v416
      %v4082 = vadd.f32 %v4018, %v419
      %v4083 = vadd.f32 %v4019, %v421
      %v4084 = vadd.f32 %v4020, %v424
      %v4085 = vadd.f32 %v4021, %v426
      %v4086 = vadd.f32 %v4022, %v429
      %v4087 = vadd.f32 %v4023, %v431
      %v4088 = vadd.f32 %v4024, %v434
      %v4089 = vadd.f32 %v4025, %v436
      %v4090 = vadd.f32 %v4026, %v439
      %v4091 = vadd.f32 %v4027, %v441
      %v4092 = vadd.f32 %v4028, %v444
      %v4093 = vadd.f32 %v4029, %v446
      %v4094 = vadd.f32 %v4030, %v449
      %v4095 = vadd.f32 %v4031, %v451
      %v4096 = vadd.f32 %v4032, %v454
      %v4097 = vadd.f32 %v4033, %v456
      %v4098 = vadd.f32 %v4034, %v459
      %v4099 = vadd.f32 %v4035, %v461
      %v4100 = vadd.f32 %v4036, %v836
      %v4101 = vadd.f32 %v4037, %v838
      %4102 = vst.msk [vmem:[%s278] sm:$0xff] %vm1337, %v4070
      %4103 = vst.msk [vmem:[%s278 + $0x8] sm:$0xff] %vm1337, %v4071
      %4104 = vst.msk [vmem:[%s278 + $0x10] sm:$0xff] %vm1337, %v4072
      %4105 = vst.msk [vmem:[%s278 + $0x18] sm:$0xff] %vm1337, %v4073
      %4106 = vst.msk [vmem:[%s278 + $0x20] sm:$0xff] %vm1337, %v4074
      %4107 = vst.msk [vmem:[%s278 + $0x28] sm:$0xff] %vm1337, %v4075
      %4108 = vst.msk [vmem:[%s278 + $0x30] sm:$0xff] %vm1337, %v4076
      %4109 = vst.msk [vmem:[%s278 + $0x38] sm:$0xff] %vm1337, %v4077
      %4110 = vst.msk [vmem:[%s278 + $0x40] sm:$0xff] %vm1337, %v4078
      %4111 = vst.msk [vmem:[%s278 + $0x48] sm:$0xff] %vm1337, %v4079
      %4112 = vst.msk [vmem:[%s278 + $0x50] sm:$0xff] %vm1337, %v4080
      %4113 = vst.msk [vmem:[%s278 + $0x58] sm:$0xff] %vm1337, %v4081
      %4114 = vst.msk [vmem:[%s278 + $0x60] sm:$0xff] %vm1337, %v4082
      %4115 = vst.msk [vmem:[%s278 + $0x68] sm:$0xff] %vm1337, %v4083
      %4116 = vst.msk [vmem:[%s278 + $0x70] sm:$0xff] %vm1337, %v4084
      %4117 = vst.msk [vmem:[%s278 + $0x78] sm:$0xff] %vm1337, %v4085
      %4118 = vst.msk [vmem:[%s278 + $0x80] sm:$0xff] %vm1337, %v4086
      %4119 = vst.msk [vmem:[%s278 + $0x88] sm:$0xff] %vm1337, %v4087
      %4120 = vst.msk [vmem:[%s278 + $0x90] sm:$0xff] %vm1337, %v4088
      %4121 = vst.msk [vmem:[%s278 + $0x98] sm:$0xff] %vm1337, %v4089
      %4122 = vst.msk [vmem:[%s278 + $0xa0] sm:$0xff] %vm1337, %v4090
      %4123 = vst.msk [vmem:[%s278 + $0xa8] sm:$0xff] %vm1337, %v4091
      %4124 = vst.msk [vmem:[%s278 + $0xb0] sm:$0xff] %vm1337, %v4092
      %4125 = vst.msk [vmem:[%s278 + $0xb8] sm:$0xff] %vm1337, %v4093
      %4126 = vst.msk [vmem:[%s278 + $0xc0] sm:$0xff] %vm1337, %v4094
      %4127 = vst.msk [vmem:[%s278 + $0xc8] sm:$0xff] %vm1337, %v4095
      %4128 = vst.msk [vmem:[%s278 + $0xd0] sm:$0xff] %vm1337, %v4096
      %4129 = vst.msk [vmem:[%s278 + $0xd8] sm:$0xff] %vm1337, %v4097
      %4130 = vst.msk [vmem:[%s278 + $0xe0] sm:$0xff] %vm1337, %v4098
      %4131 = vst.msk [vmem:[%s278 + $0xe8] sm:$0xff] %vm1337, %v4099
      %4132 = vst.msk [vmem:[%s278 + $0xf0] sm:$0xff] %vm1337, %v4100
      %4133 = vst.msk [vmem:[%s278 + $0xf8] sm:$0xff] %vm1337, %v4101
      %p4134 = scmp.lt.s32.totalorder %s18, 1
      %s4135 = scalar_select %p4134, %s18, 1
      %s4136 = smul.addr %s4135, 32
      %s4137 = smul.addr %s4136, 8
      %s4138 = scalar_lea.vmem %s7, %s4137
      // Predicated region
      $region49: #{tpu_custom_call.1} parent=47 // pred_check
        %p4139 = pneg %p188
      $region50: #{tpu_custom_call.1} parent=47 // pred_check_branch
        %4141 = sbr.rel (%p4139) target = $region52
      $region51: #{tpu_custom_call.1} parent=47 // pred_region
        _
      $region52: #{tpu_custom_call.1} parent=47 // pred_fallthru
        _
    $region48: #{tpu_custom_call.1} parent=5 // pred_fallthru
      _
    %p4142 = scmp.le.s32.totalorder 2, %s13
    // Predicated region
    $region53: #{tpu_custom_call.1} parent=5 // pred_check
      %p4143 = pneg %p4142
    $region54: #{tpu_custom_call.1} parent=5 // pred_check_branch
      %4145 = sbr.rel (%p4143) target = $region56
    $region55: #{tpu_custom_call.1} parent=5 // pred_region
      %s4146 = ssub.s32 %s13, 2
      // Predicated region
      $region57: #{tpu_custom_call.1} parent=55 // pred_check
        %p4147 = pneg %p194
      $region58: #{tpu_custom_call.1} parent=55 // pred_check_branch
        %4149 = sbr.rel (%p4147) target = $region60
      $region59: #{tpu_custom_call.1} parent=55 // pred_region
        %p4150 = scmp.lt.s32.totalorder %s19, 1
        %s4151 = scalar_select %p4150, %s19, 1
        %s4152 = smul.addr %s4151, 32
        %s4153 = smul.addr %s4152, 8
        %s4154 = scalar_lea.vmem %s7, %s4153
      $region60: #{tpu_custom_call.1} parent=55 // pred_fallthru
        _
    $region56: #{tpu_custom_call.1} parent=5 // pred_fallthru
      _
  $region6: #{tpu_custom_call.1} parent=0 // loop_footer
    %s17 = sadd.s32 1, %s13
  $region7: #{tpu_custom_call.1} parent=0 // loop_footer_branch
    %12 = sbr.rel target = $region3
  $region8: #{tpu_custom_call.1} parent=0 // loop_exit
    _

</llo_original>
